<compile_context>
chip_gen: v6e
topology: v6e:2x2x1
jax: 0.10.0
libtpu: 0.0.40
codegen_flags: <defaults>
</compile_context>

<pallas_src>
import numpy as np

import jax
import jax.numpy as jnp
from jax.experimental import pallas as pl
from jax.experimental.pallas import tpu as pltpu


# ----------------------------------------------------------------------------
# Model hyper-parameters (synthetic, deterministic)
# ----------------------------------------------------------------------------
D_MODEL = 64          # F' conformer dim
N_HEADS = 4
HEAD_DIM = D_MODEL // N_HEADS
FF_DIM = 4 * D_MODEL
DW_KERNEL = 7         # depthwise conv kernel size
NUM_LAYERS = 2
LN_EPS = 1e-5
BN_EPS = 1e-5
NEG_INF = -1e9

# Packed D-wide per-layer vector rows (vecD: (L, NV_D, D) f32)
(R_LN1_G, R_LN1_B, R_FF1_B2, R_MLN_G, R_MLN_B, R_BO, R_CLN_G, R_CLN_B, R_DW_B,
 R_BN_G, R_BN_B, R_BN_M, R_BN_V, R_PW2_B, R_LN2_G, R_LN2_B, R_FF2_B2,
 R_LNF_G, R_LNF_B) = range(19)
R_DW_W = 24                      # rows 24 .. 24+K-1 hold the depthwise kernel taps
NV_D = 32                        # padded to a multiple of 8

# Packed FF-wide per-layer vector rows (vecF: (L, NV_F, FF) f32)
RF_FF1_B1, RF_FF2_B1, RF_BQKV, RF_PW1_B = range(4)
NV_F = 8                         # padded to a multiple of 8


def _round_up(v, m):
    return ((v + m - 1) // m) * m


def _pad_time(n):
    """Pad the internal time axis: >=16 for bf16 MXU tiling, 128 for large T."""
    t = _round_up(n, 16)
    if t > 128:
        t = _round_up(n, 128)
    return t


def _vmem_limit_bytes(T, D, FF):
    f32, bf16 = 4, 2
    per_step = (
        T * D * f32                                    # activation block
        + 2 * T * f32 + 3 * T * 4                      # masks + chunk-index vectors
        + NV_D * D * f32 + NV_F * FF * f32             # packed small params
        + (2 * D * FF + 2 * FF * D + D * 3 * D + 2 * D * D + D * 2 * D) * bf16
        + T * D * f32                                  # output block
    )
    need = 2 * per_step + T * T * f32 + (4 << 20)      # double-buffer + bias scratch
    return int(min(max(need, 32 << 20), 48 << 20))


# ----------------------------------------------------------------------------
# Frontend (plain XLA: one tiny lane-partial matmul, per perf review)
# ----------------------------------------------------------------------------
def frontend_apply(x, mask, fp):
    """x: [B, T', F] f32, mask: [B, T'] bool -> ([B, T'/2, D], [B, T'/2])."""
    xs = x[:, ::2, :]
    ms = mask[:, ::2]
    y = jnp.dot(xs.astype(jnp.bfloat16), fp["w"],
                preferred_element_type=jnp.float32) + fp["b"]
    return y, ms


# ----------------------------------------------------------------------------
# Conformer block stack: single pallas_call over grid (B, L)
# ----------------------------------------------------------------------------
def block_stack_apply(x, mask_bool, struct_len, off_flags, ext, chunk_size,
                      carry_over, bp):
    """Run all conformer layers for all batch rows in one pallas_call.

    x:          [B, T, D] f32 (T padded, multiple of 16, >= struct_len + (K-1)//2)
    mask_bool:  [B, T] bool   (True = valid frame)
    struct_len: [B] int32     (structural tensor extent per row)
    off_flags:  [B] int32     (1 = offline / full-context attention, 0 = chunked)
    """
    B, T, D = x.shape
    FF = bp["ff1_w1"].shape[-1]
    L = bp["ff1_w1"].shape[0]
    H = N_HEADS
    dh = D // H
    K = DW_KERNEL
    dw_pad = (K - 1) // 2
    CO = int(carry_over)

    m = mask_bool.astype(jnp.float32)
    mrow = m.reshape(B, 1, T)                          # lane-dense key-padding mask
    mcol = m.reshape(B, T, 1)                          # per-frame column mask

    pos = np.arange(T)
    cid = (pos // int(ext)).astype(np.int32)           # chunk index per position
    wcs = ((pos % int(ext)) < int(chunk_size)).astype(np.int32)
    cid_col = jnp.asarray(cid.reshape(1, T, 1))
    cid_row = jnp.asarray(cid.reshape(1, 1, T))
    wcs_row = jnp.asarray(wcs.reshape(1, 1, T))

    def kernel(off_ref, slen_ref, x_ref, mrow_ref, mcol_ref,
               cc_ref, cr_ref, wc_ref, vd_ref, vf_ref,
               ff1_w1, ff1_w2, wqkv_w, wo_w, pw1_w, pw2_w, ff2_w1, ff2_w2,
               out_ref, bias_ref):
        b = pl.program_id(0)
        layer = pl.program_id(1)

        # ---- layer-invariant setup (runs once per batch row) ------------------
        @pl.when(layer == 0)
        def _():
            out_ref[0] = x_ref[0]                      # activation resides in out buffer
            qc = cc_ref[0]                             # (T, 1) int32 query chunk ids
            kc = cr_ref[0]                             # (1, T) int32 key chunk ids
            within = wc_ref[0]                         # (1, T) int32 (k in first C frames)
            same = qc == kc                            # own chunk (incl. lookahead)
            carry = (kc < qc) & ((kc + CO) >= qc) & (within > 0)
            allowed = jnp.logical_or(same | carry, off_ref[b] > 0)
            keyok = mrow_ref[0] > 0.5                  # (1, T) key padding
            bias_ref[...] = jnp.where(allowed & keyok, 0.0, NEG_INF)

        vd = vd_ref[0]                                 # (NV_D, D) f32 packed vectors
        vf = vf_ref[0]                                 # (NV_F, FF) f32 packed vectors

        def row(i):
            return vd[i:i + 1, :]                      # (1, D)

        mcol_v = mcol_ref[0]                           # (T, 1)
        x_act = out_ref[0]                             # (T, D) previous-layer activation

        def ln(v, gi, bi, eps=LN_EPS):
            mu = jnp.mean(v, axis=-1, keepdims=True)
            var = jnp.mean((v - mu) ** 2, axis=-1, keepdims=True)
            return (v - mu) * jax.lax.rsqrt(var + eps) * row(gi) + row(bi)

        def silu(v):
            return v * jax.nn.sigmoid(v)

        def mm(v, w_ref, bias_row):
            # bf16 MXU operands, f32 accumulation, f32 bias add.
            return jnp.dot(v.astype(jnp.bfloat16), w_ref[0],
                           preferred_element_type=jnp.float32) + bias_row

        # --- FF1 (half-step) ---------------------------------------------------
        y = ln(x_act, R_LN1_G, R_LN1_B)
        y = silu(mm(y, ff1_w1, vf[RF_FF1_B1:RF_FF1_B1 + 1, :]))
        y = mm(y, ff1_w2, row(R_FF1_B2))
        x_act = 0.5 * y + x_act

        # --- MHSA (fused QKV; per-head context folded into output projection) ---
        y = ln(x_act, R_MLN_G, R_MLN_B)
        qkv = mm(y, wqkv_w, vf[RF_BQKV:RF_BQKV + 1, :3 * D])   # (T, 3D) f32
        bias = bias_ref[...]                                   # layer-invariant
        wo_full = wo_w[0]                                      # (D, D) bf16
        att = jnp.zeros(x_act.shape, jnp.float32)
        for h in range(H):
            qh = qkv[:, h * dh:(h + 1) * dh].astype(jnp.bfloat16)
            kh = qkv[:, D + h * dh:D + (h + 1) * dh].astype(jnp.bfloat16)
            vh = qkv[:, 2 * D + h * dh:2 * D + (h + 1) * dh].astype(jnp.bfloat16)
            # 1/sqrt(dh) is folded into the Q columns of wqkv at init time.
            s = jnp.einsum("td,sd->ts", qh, kh,
                           preferred_element_type=jnp.float32) + bias
            s = s - jnp.max(s, axis=-1, keepdims=True)
            e = jnp.exp(s)
            p = e * pl.reciprocal(jnp.sum(e, axis=-1, keepdims=True), approx=True)
            ctx = jnp.dot(p.astype(jnp.bfloat16), vh,
                          preferred_element_type=jnp.float32)
            att = att + jnp.dot(ctx.astype(jnp.bfloat16),
                                wo_full[h * dh:(h + 1) * dh, :],
                                preferred_element_type=jnp.float32)
        x_act = att + row(R_BO) + x_act
        # masked_fill of padded frames before the conv module (as in the reference)
        x_act = x_act * mcol_v

        # --- Conv module ---------------------------------------------------------
        z = ln(x_act, R_CLN_G, R_CLN_B)
        pg = mm(z, pw1_w, vf[RF_PW1_B:RF_PW1_B + 1, :2 * D])   # (T, 2D)
        z = pg[:, :D] * jax.nn.sigmoid(pg[:, D:])              # GLU
        # zero frames beyond the structural extent -> the last dw_pad rows of the
        # buffer are exactly zero, so pltpu.roll wrap-around needs no edge masks.
        t_col = jax.lax.broadcasted_iota(jnp.int32, (T, 1), 0)
        z = z * (t_col < slen_ref[b]).astype(jnp.float32)
        dw = vd[R_DW_W:R_DW_W + K, :]                          # (K, D) f32 taps
        acc = z * dw[dw_pad:dw_pad + 1, :]                     # center tap, no roll
        for kk in range(K):
            if kk == dw_pad:
                continue
            acc = acc + pltpu.roll(z, (dw_pad - kk) % T, 0) * dw[kk:kk + 1, :]
        acc = acc + row(R_DW_B)
        # batch-norm (eval mode, running stats)
        acc = (acc - row(R_BN_M)) * jax.lax.rsqrt(row(R_BN_V) + BN_EPS) \
            * row(R_BN_G) + row(R_BN_B)
        acc = silu(acc)
        x_act = mm(acc, pw2_w, row(R_PW2_B)) + x_act

        # --- FF2 (half-step) -------------------------------------------------------
        y = ln(x_act, R_LN2_G, R_LN2_B)
        y = silu(mm(y, ff2_w1, vf[RF_FF2_B1:RF_FF2_B1 + 1, :]))
        y = mm(y, ff2_w2, row(R_FF2_B2))
        x_act = 0.5 * y + x_act

        # --- final layer norm, write back into the resident output block -----------
        out_ref[0] = ln(x_act, R_LNF_G, R_LNF_B)

    bmap = lambda b, l, off, sl: (b, 0, 0)    # noqa: E731
    smap = lambda b, l, off, sl: (0, 0, 0)    # noqa: E731
    pmap = lambda b, l, off, sl: (l, 0, 0)    # noqa: E731

    in_specs = [
        pl.BlockSpec((1, T, D), bmap),        # activations
        pl.BlockSpec((1, 1, T), bmap),        # key-padding mask (lane dense)
        pl.BlockSpec((1, T, 1), bmap),        # frame mask (column)
        pl.BlockSpec((1, T, 1), smap),        # chunk id (column), shared
        pl.BlockSpec((1, 1, T), smap),        # chunk id (row), shared
        pl.BlockSpec((1, 1, T), smap),        # within-chunk-size indicator, shared
        pl.BlockSpec((1, NV_D, D), pmap),     # packed D-wide per-layer vectors
        pl.BlockSpec((1, NV_F, FF), pmap),    # packed FF-wide per-layer vectors
        pl.BlockSpec((1, D, FF), pmap),       # ff1_w1
        pl.BlockSpec((1, FF, D), pmap),       # ff1_w2
        pl.BlockSpec((1, D, 3 * D), pmap),    # wqkv
        pl.BlockSpec((1, D, D), pmap),        # wo
        pl.BlockSpec((1, D, 2 * D), pmap),    # pw1_w
        pl.BlockSpec((1, D, D), pmap),        # pw2_w
        pl.BlockSpec((1, D, FF), pmap),       # ff2_w1
        pl.BlockSpec((1, FF, D), pmap),       # ff2_w2
    ]

    grid_spec = pltpu.PrefetchScalarGridSpec(
        num_scalar_prefetch=2,
        grid=(B, L),
        in_specs=in_specs,
        out_specs=pl.BlockSpec((1, T, D), bmap),
        scratch_shapes=[pltpu.VMEM((T, T), jnp.float32)],   # layer-invariant attn bias
    )
    return pl.pallas_call(
        kernel,
        grid_spec=grid_spec,
        out_shape=jax.ShapeDtypeStruct((B, T, D), jnp.float32),
        compiler_params=pltpu.CompilerParams(
            dimension_semantics=("parallel", "arbitrary"),
            vmem_limit_bytes=_vmem_limit_bytes(T, D, FF)),
    )(jnp.asarray(off_flags, jnp.int32), jnp.asarray(struct_len, jnp.int32),
      x, mrow, mcol, cid_col, cid_row, wcs_row,
      bp["vecD"], bp["vecF"],
      bp["ff1_w1"], bp["ff1_w2"], bp["wqkv"], bp["wo"],
      bp["pw1_w"], bp["pw2_w"], bp["ff2_w1"], bp["ff2_w2"])


# ----------------------------------------------------------------------------
# Host-side glue mirroring the PyTorch module
# ----------------------------------------------------------------------------
def add_lookahead(x, mask, lookahead_size):
    """x: [B, N, C, D], mask: [B, N, C] bool."""
    if lookahead_size <= 0:
        return x, mask
    B, N, C, D = x.shape
    R = lookahead_size
    fut = jnp.concatenate(
        [x[:, 1:, :R, :], jnp.zeros((B, 1, R, D), x.dtype)], axis=1)
    fmask = jnp.concatenate(
        [mask[:, 1:, :R], jnp.zeros((B, 1, R), mask.dtype)], axis=1)
    return jnp.concatenate([x, fut], axis=2), jnp.concatenate([mask, fmask], axis=2)


def conformer_encoder_forward(data, seq_mask, params, key,
                              lookahead_size=2, carry_over_size=1, online_scale=0.5):
    """data: [B, N, C, F] float32, seq_mask: [B, N, C] bool."""
    B, N, C, F = data.shape
    assert C % 2 == 0
    dw_pad = (DW_KERNEL - 1) // 2

    # Frontend is position-wise (stride-2 subsample + linear), so applying it once to
    # the flat sequence equals the reference's separate per-chunk / flat applications.
    x_flat = data.reshape(B, N * C, F).astype(jnp.float32)
    m_flat = seq_mask.reshape(B, N * C)
    x_sub, m_sub = frontend_apply(x_flat, m_flat, params["frontend"])
    T0, D = x_sub.shape[1], x_sub.shape[2]
    subs_chunk = T0 // N
    R = lookahead_size

    if B <= 1:
        T_pad = _pad_time(T0 + dw_pad)
        x_p = jnp.pad(x_sub, ((0, 0), (0, T_pad - T0), (0, 0)))
        m_p = jnp.pad(m_sub, ((0, 0), (0, T_pad - T0)))
        out = block_stack_apply(
            x_p, m_p,
            struct_len=np.full((B,), T0, np.int32),
            off_flags=np.ones((B,), np.int32),
            ext=subs_chunk + R, chunk_size=subs_chunk, carry_over=carry_over_size,
            bp=params["blocks"])
        return out[:, :T0], m_sub

    # --- online/offline sampling (host-side, mirrors torch) -------------------
    k1, k2 = jax.random.split(key)
    sample = np.asarray(jax.random.uniform(k1, (B,)))
    offline_indc = sample >= online_scale
    min_entry = int(jax.random.randint(k2, (), 0, B))
    if offline_indc.all():
        offline_indc[min_entry] = False
    elif (~offline_indc).all():
        offline_indc[min_entry] = True
    on_idx = np.where(~offline_indc)[0]
    off_idx = np.where(offline_indc)[0]
    on_bsz, off_bsz = len(on_idx), len(off_idx)
    assert on_bsz > 0 and off_bsz > 0

    # online stream: chunked view + lookahead frames from the next chunk
    x_on = x_sub[on_idx].reshape(on_bsz, N, subs_chunk, D)
    m_on = m_sub[on_idx].reshape(on_bsz, N, subs_chunk)
    x_on, m_on = add_lookahead(x_on, m_on, R)
    ext = x_on.shape[2]
    T_on = N * ext
    x_on = x_on.reshape(on_bsz, T_on, D)
    m_on = m_on.reshape(on_bsz, T_on)

    # offline stream: flat full-context view
    x_off = x_sub[off_idx]
    m_off = m_sub[off_idx]
    T_off = T0

    # Extra dw_pad frames guarantee the depthwise-conv roll wrap-around hits zeros.
    T_pad = _pad_time(max(T_on, T_off) + dw_pad)

    def pad_t(a, t):
        cfg = [(0, 0)] * a.ndim
        cfg[1] = (0, t - a.shape[1])
        return jnp.pad(a, cfg)

    x_all = jnp.zeros((B, T_pad, D), jnp.float32)
    x_all = x_all.at[on_idx].set(pad_t(x_on, T_pad)).at[off_idx].set(pad_t(x_off, T_pad))
    m_all = jnp.zeros((B, T_pad), bool)
    m_all = m_all.at[on_idx].set(pad_t(m_on, T_pad)).at[off_idx].set(pad_t(m_off, T_pad))

    struct_len = np.zeros((B,), np.int32)
    struct_len[on_idx] = T_on
    struct_len[off_idx] = T_off
    off_flags = offline_indc.astype(np.int32)

    out_all = block_stack_apply(
        x_all, m_all, struct_len, off_flags,
        ext=ext, chunk_size=subs_chunk, carry_over=carry_over_size,
        bp=params["blocks"])

    # strip lookahead frames from online entries and re-flatten
    on_out = out_all[on_idx, :T_on].reshape(on_bsz, N, ext, D)[:, :, :subs_chunk]
    on_out = on_out.reshape(on_bsz, N * subs_chunk, D)
    on_msk = m_all[on_idx, :T_on].reshape(on_bsz, N, ext)[:, :, :subs_chunk]
    on_msk = on_msk.reshape(on_bsz, N * subs_chunk)

    off_out = out_all[off_idx, :T_off]
    off_msk = m_all[off_idx, :T_off]

    T_final = T_off
    assert on_out.shape[1] <= T_final
    if on_out.shape[1] < T_final:
        padn = T_final - on_out.shape[1]
        on_out = jnp.pad(on_out, ((0, 0), (0, padn), (0, 0)))
        on_msk = jnp.pad(on_msk, ((0, 0), (0, padn)))

    full = jnp.zeros((B, T_final, D), jnp.float32)
    full = full.at[on_idx].set(on_out).at[off_idx].set(off_out)
    full_mask = jnp.zeros((B, T_final), bool)
    full_mask = full_mask.at[on_idx].set(on_msk).at[off_idx].set(off_msk)
    return full, full_mask


# ----------------------------------------------------------------------------
# Deterministic parameter init (per-layer params stacked along a leading L axis,
# small vectors packed into vecD / vecF, softmax scale folded into wqkv Q columns)
# ----------------------------------------------------------------------------
def init_params(key, F, D, H, FF, K, L):
    kf, k1, k2, k3, k4, k5, k6, k7, k8, k9 = jax.random.split(key, 10)

    def w(k, shape):
        return (jax.random.normal(k, shape) * 0.02).astype(jnp.bfloat16)

    frontend = {
        "w": (jax.random.normal(kf, (F, D)) * 0.02).astype(jnp.bfloat16),
        "b": jnp.zeros((D,), jnp.float32),
    }

    vecD = np.zeros((L, NV_D, D), np.float32)
    for r in (R_LN1_G, R_MLN_G, R_CLN_G, R_BN_G, R_BN_V, R_LN2_G, R_LNF_G):
        vecD[:, r, :] = 1.0
    vecD[:, R_DW_W:R_DW_W + K, :] = np.asarray(jax.random.normal(k5, (L, K, D))) * 0.02
    vecF = np.zeros((L, NV_F, FF), np.float32)       # all biases zero

    wqkv = np.asarray(jax.random.normal(k3, (L, D, 3 * D))) * 0.02
    wqkv[:, :, :D] *= 1.0 / np.sqrt(D // H)          # fold softmax scale into Q columns

    blocks = {
        "vecD": jnp.asarray(vecD),
        "vecF": jnp.asarray(vecF),
        "ff1_w1": w(k1, (L, D, FF)), "ff1_w2": w(k2, (L, FF, D)),
        "wqkv": jnp.asarray(wqkv, jnp.bfloat16),
        "wo": w(k4, (L, D, D)),
        "pw1_w": w(k6, (L, D, 2 * D)), "pw2_w": w(k7, (L, D, D)),
        "ff2_w1": w(k8, (L, D, FF)), "ff2_w2": w(k9, (L, FF, D)),
    }
    return {"frontend": frontend, "blocks": blocks}


# ----------------------------------------------------------------------------
# Main
# ----------------------------------------------------------------------------
if __name__ == "__main__":
    key = jax.random.PRNGKey(0)
    B, N, C, F = 2, 2, 16, 32
    R, CARRY = 2, 1

    kd, kp, ks = jax.random.split(key, 3)
    data = jax.random.normal(kd, (B, N, C, F), dtype=jnp.float32)

    mask_np = np.ones((B, N, C), dtype=bool)
    mask_np[1, -1, -6:] = False          # second entry has some padded frames
    seq_mask = jnp.asarray(mask_np)

    params = init_params(kp, F, D_MODEL, N_HEADS, FF_DIM, DW_KERNEL, NUM_LAYERS)

    out, out_mask = conformer_encoder_forward(
        data, seq_mask, params, ks,
        lookahead_size=R, carry_over_size=CARRY, online_scale=0.5)

    jax.block_until_ready((out, out_mask))
    assert out.shape == (B, N * C // 2, D_MODEL)
    assert out_mask.shape == (B, N * C // 2)
    assert bool(jnp.isfinite(out).all())
    print("KERNEL_OK")
</pallas_src>

<mosaic_0001>
module attributes {stable_mosaic.version = 11 : i64} {
  func.func @kernel(%arg0: i32, %arg1: i32, %arg2: memref<2xi32, #tpu.memory_space<smem>>, %arg3: memref<2xi32, #tpu.memory_space<smem>>, %arg4: memref<1x32x64xf32, #tpu.memory_space<vmem>>, %arg5: memref<1x1x32xf32, #tpu.memory_space<vmem>>, %arg6: memref<1x32x1xf32, #tpu.memory_space<vmem>>, %arg7: memref<1x32x1xi32, #tpu.memory_space<vmem>>, %arg8: memref<1x1x32xi32, #tpu.memory_space<vmem>>, %arg9: memref<1x1x32xi32, #tpu.memory_space<vmem>>, %arg10: memref<1x32x64xf32, #tpu.memory_space<vmem>>, %arg11: memref<1x8x256xf32, #tpu.memory_space<vmem>>, %arg12: memref<1x64x256xbf16, #tpu.memory_space<vmem>>, %arg13: memref<1x256x64xbf16, #tpu.memory_space<vmem>>, %arg14: memref<1x64x192xbf16, #tpu.memory_space<vmem>>, %arg15: memref<1x64x64xbf16, #tpu.memory_space<vmem>>, %arg16: memref<1x64x128xbf16, #tpu.memory_space<vmem>>, %arg17: memref<1x64x64xbf16, #tpu.memory_space<vmem>>, %arg18: memref<1x64x256xbf16, #tpu.memory_space<vmem>>, %arg19: memref<1x256x64xbf16, #tpu.memory_space<vmem>>, %arg20: memref<1x32x64xf32, #tpu.memory_space<vmem>>, %arg21: memref<32x32xf32, #tpu.memory_space<vmem>>) attributes {dimension_semantics = [#tpu.dimension_semantics<parallel>, #tpu.dimension_semantics<arbitrary>], iteration_bounds = array<i64: 2, 2>, scalar_prefetch = 2 : i64, scratch_operands = 1 : i64, tpu.core_type = #tpu.core_type<tc>, window_params = [{transform_indices = @transform_0, window_bounds = array<i64: 1, 32, 64>}, {transform_indices = @transform_1, window_bounds = array<i64: 1, 1, 32>}, {transform_indices = @transform_2, window_bounds = array<i64: 1, 32, 1>}, {pipeline_mode = #tpu.pipeline_mode<synchronous>, transform_indices = @transform_3, window_bounds = array<i64: 1, 32, 1>}, {pipeline_mode = #tpu.pipeline_mode<synchronous>, transform_indices = @transform_4, window_bounds = array<i64: 1, 1, 32>}, {pipeline_mode = #tpu.pipeline_mode<synchronous>, transform_indices = @transform_5, window_bounds = array<i64: 1, 1, 32>}, {transform_indices = @transform_6, window_bounds = array<i64: 1, 32, 64>}, {transform_indices = @transform_7, window_bounds = array<i64: 1, 8, 256>}, {transform_indices = @transform_8, window_bounds = array<i64: 1, 64, 256>}, {transform_indices = @transform_9, window_bounds = array<i64: 1, 256, 64>}, {transform_indices = @transform_10, window_bounds = array<i64: 1, 64, 192>}, {transform_indices = @transform_11, window_bounds = array<i64: 1, 64, 64>}, {transform_indices = @transform_12, window_bounds = array<i64: 1, 64, 128>}, {transform_indices = @transform_13, window_bounds = array<i64: 1, 64, 64>}, {transform_indices = @transform_14, window_bounds = array<i64: 1, 64, 256>}, {transform_indices = @transform_15, window_bounds = array<i64: 1, 256, 64>}, {transform_indices = @transform_16, window_bounds = array<i64: 1, 32, 64>}]} {
    %c0_i32 = arith.constant 0 : i32
    %0 = arith.cmpi eq, %arg1, %c0_i32 : i32
    %1 = arith.extui %0 : i1 to i32
    %c0_i32_0 = arith.constant 0 : i32
    %2 = arith.cmpi ne, %1, %c0_i32_0 : i32
    scf.if %2 {
      %c0_100 = arith.constant 0 : index
      %c0_101 = arith.constant 0 : index
      %c0_102 = arith.constant 0 : index
      %383 = vector.load %arg4[%c0_100, %c0_101, %c0_102] : memref<1x32x64xf32, #tpu.memory_space<vmem>>, vector<1x32x64xf32>
      %384 = vector.shape_cast %383 : vector<1x32x64xf32> to vector<32x64xf32>
      %c0_103 = arith.constant 0 : index
      %c0_104 = arith.constant 0 : index
      %c0_105 = arith.constant 0 : index
      %385 = vector.load %arg20[%c0_103, %c0_104, %c0_105] : memref<1x32x64xf32, #tpu.memory_space<vmem>>, vector<1x32x64xf32>
      %386 = vector.shape_cast %385 : vector<1x32x64xf32> to vector<32x64xf32>
      %387 = vector.shape_cast %384 : vector<32x64xf32> to vector<1x32x64xf32>
      tpu.vector_store %arg20[%c0_103, %c0_104, %c0_105], %387 {strides = array<i32>} : memref<1x32x64xf32, #tpu.memory_space<vmem>>, vector<1x32x64xf32>,
      %c0_106 = arith.constant 0 : index
      %c0_107 = arith.constant 0 : index
      %c0_108 = arith.constant 0 : index
      %388 = vector.load %arg7[%c0_106, %c0_107, %c0_108] : memref<1x32x1xi32, #tpu.memory_space<vmem>>, vector<1x32x1xi32>
      %389 = vector.shape_cast %388 : vector<1x32x1xi32> to vector<32x1xi32>
      %c0_109 = arith.constant 0 : index
      %c0_110 = arith.constant 0 : index
      %c0_111 = arith.constant 0 : index
      %390 = vector.load %arg8[%c0_109, %c0_110, %c0_111] : memref<1x1x32xi32, #tpu.memory_space<vmem>>, vector<1x1x32xi32>
      %391 = vector.shape_cast %390 : vector<1x1x32xi32> to vector<1x32xi32>
      %c0_112 = arith.constant 0 : index
      %c0_113 = arith.constant 0 : index
      %c0_114 = arith.constant 0 : index
      %392 = vector.load %arg9[%c0_112, %c0_113, %c0_114] : memref<1x1x32xi32, #tpu.memory_space<vmem>>, vector<1x1x32xi32>
      %393 = vector.shape_cast %392 : vector<1x1x32xi32> to vector<1x32xi32>
      %394 = vector.broadcast %389 : vector<32x1xi32> to vector<32x32xi32>
      %395 = vector.broadcast %391 : vector<1x32xi32> to vector<32x32xi32>
      %396 = arith.cmpi eq, %394, %395 : vector<32x32xi32>
      %397 = vector.broadcast %391 : vector<1x32xi32> to vector<32x32xi32>
      %398 = vector.broadcast %389 : vector<32x1xi32> to vector<32x32xi32>
      %399 = arith.cmpi slt, %397, %398 : vector<32x32xi32>
      %c1_i32_115 = arith.constant 1 : i32
      %400 = vector.broadcast %c1_i32_115 : i32 to vector<1x32xi32>
      %401 = arith.addi %391, %400 : vector<1x32xi32>
      %402 = vector.broadcast %401 : vector<1x32xi32> to vector<32x32xi32>
      %403 = vector.broadcast %389 : vector<32x1xi32> to vector<32x32xi32>
      %404 = arith.cmpi sge, %402, %403 : vector<32x32xi32>
      %405 = arith.andi %399, %404 : vector<32x32xi1>
      %c0_i32_116 = arith.constant 0 : i32
      %406 = vector.broadcast %c0_i32_116 : i32 to vector<1x32xi32>
      %407 = arith.cmpi sgt, %393, %406 : vector<1x32xi32>
      %408 = vector.broadcast %407 : vector<1x32xi1> to vector<32x32xi1>
      %409 = arith.andi %405, %408 : vector<32x32xi1>
      %410 = arith.ori %396, %409 : vector<32x32xi1>
      %411 = arith.index_cast %arg0 : i32 to index
      %412 = memref.load %arg2[%411] : memref<2xi32, #tpu.memory_space<smem>>
      %c0_i32_117 = arith.constant 0 : i32
      %413 = arith.cmpi sgt, %412, %c0_i32_117 : i32
      %414 = vector.broadcast %413 : i1 to vector<32x32xi1>
      %415 = arith.ori %410, %414 : vector<32x32xi1>
      %c0_118 = arith.constant 0 : index
      %c0_119 = arith.constant 0 : index
      %c0_120 = arith.constant 0 : index
      %416 = vector.load %arg5[%c0_118, %c0_119, %c0_120] : memref<1x1x32xf32, #tpu.memory_space<vmem>>, vector<1x1x32xf32>
      %417 = vector.shape_cast %416 : vector<1x1x32xf32> to vector<1x32xf32>
      %cst_121 = arith.constant 5.000000e-01 : f32
      %418 = vector.broadcast %cst_121 : f32 to vector<1x32xf32>
      %419 = arith.cmpf ogt, %417, %418 : vector<1x32xf32>
      %420 = vector.broadcast %419 : vector<1x32xi1> to vector<32x32xi1>
      %421 = arith.andi %415, %420 : vector<32x32xi1>
      %cst_122 = arith.constant 0.000000e+00 : f32
      %cst_123 = arith.constant -1.000000e+09 : f32
      %422 = vector.broadcast %cst_122 : f32 to vector<32x32xf32>
      %423 = vector.broadcast %cst_123 : f32 to vector<32x32xf32>
      %424 = arith.select %421, %422, %423 : vector<32x32xi1>, vector<32x32xf32>
      %c0_124 = arith.constant 0 : index
      %c0_125 = arith.constant 0 : index
      %425 = vector.load %arg21[%c0_124, %c0_125] : memref<32x32xf32, #tpu.memory_space<vmem>>, vector<32x32xf32>
      tpu.vector_store %arg21[%c0_124, %c0_125], %424 {strides = array<i32>} : memref<32x32xf32, #tpu.memory_space<vmem>>, vector<32x32xf32>,
    } else {
    }
    %c0 = arith.constant 0 : index
    %c0_1 = arith.constant 0 : index
    %c0_2 = arith.constant 0 : index
    %3 = vector.load %arg10[%c0, %c0_1, %c0_2] : memref<1x32x64xf32, #tpu.memory_space<vmem>>, vector<1x32x64xf32>
    %4 = vector.shape_cast %3 : vector<1x32x64xf32> to vector<32x64xf32>
    %c0_3 = arith.constant 0 : index
    %c0_4 = arith.constant 0 : index
    %c0_5 = arith.constant 0 : index
    %5 = vector.load %arg11[%c0_3, %c0_4, %c0_5] : memref<1x8x256xf32, #tpu.memory_space<vmem>>, vector<1x8x256xf32>
    %6 = vector.shape_cast %5 : vector<1x8x256xf32> to vector<8x256xf32>
    %c0_6 = arith.constant 0 : index
    %c0_7 = arith.constant 0 : index
    %c0_8 = arith.constant 0 : index
    %7 = vector.load %arg6[%c0_6, %c0_7, %c0_8] : memref<1x32x1xf32, #tpu.memory_space<vmem>>, vector<1x32x1xf32>
    %8 = vector.shape_cast %7 : vector<1x32x1xf32> to vector<32x1xf32>
    %c0_9 = arith.constant 0 : index
    %c0_10 = arith.constant 0 : index
    %c0_11 = arith.constant 0 : index
    %9 = vector.load %arg20[%c0_9, %c0_10, %c0_11] : memref<1x32x64xf32, #tpu.memory_space<vmem>>, vector<1x32x64xf32>
    %10 = vector.shape_cast %9 : vector<1x32x64xf32> to vector<32x64xf32>
    %cst = arith.constant dense<0.000000e+00> : vector<32xf32>
    %11 = vector.multi_reduction <add>, %10, %cst [1] : vector<32x64xf32> to vector<32xf32>
    %12 = vector.shape_cast %11 : vector<32xf32> to vector<32x1xf32>
    %cst_12 = arith.constant 6.400000e+01 : f32
    %13 = vector.broadcast %cst_12 : f32 to vector<32x1xf32>
    %14 = arith.divf %12, %13 : vector<32x1xf32>
    %15 = vector.broadcast %14 : vector<32x1xf32> to vector<32x64xf32>
    %16 = arith.subf %10, %15 : vector<32x64xf32>
    %17 = arith.mulf %16, %16 : vector<32x64xf32>
    %cst_13 = arith.constant dense<0.000000e+00> : vector<32xf32>
    %18 = vector.multi_reduction <add>, %17, %cst_13 [1] : vector<32x64xf32> to vector<32xf32>
    %19 = vector.shape_cast %18 : vector<32xf32> to vector<32x1xf32>
    %cst_14 = arith.constant 6.400000e+01 : f32
    %20 = vector.broadcast %cst_14 : f32 to vector<32x1xf32>
    %21 = arith.divf %19, %20 : vector<32x1xf32>
    %22 = vector.broadcast %14 : vector<32x1xf32> to vector<32x64xf32>
    %23 = arith.subf %10, %22 : vector<32x64xf32>
    %cst_15 = arith.constant 9.99999974E-6 : f32
    %24 = vector.broadcast %cst_15 : f32 to vector<32x1xf32>
    %25 = arith.addf %21, %24 : vector<32x1xf32>
    %26 = math.rsqrt %25 : vector<32x1xf32>
    %27 = vector.broadcast %26 : vector<32x1xf32> to vector<32x64xf32>
    %28 = arith.mulf %23, %27 : vector<32x64xf32>
    %29 = vector.extract_strided_slice %4 {offsets = [0, 0], sizes = [1, 64], strides = [1, 1]} : vector<32x64xf32> to vector<1x64xf32>
    %30 = vector.broadcast %29 : vector<1x64xf32> to vector<32x64xf32>
    %31 = arith.mulf %28, %30 : vector<32x64xf32>
    %32 = vector.extract_strided_slice %4 {offsets = [1, 0], sizes = [1, 64], strides = [1, 1]} : vector<32x64xf32> to vector<1x64xf32>
    %33 = vector.broadcast %32 : vector<1x64xf32> to vector<32x64xf32>
    %34 = arith.addf %31, %33 : vector<32x64xf32>
    %35 = vector.extract_strided_slice %6 {offsets = [0, 0], sizes = [1, 256], strides = [1, 1]} : vector<8x256xf32> to vector<1x256xf32>
    %36 = arith.truncf %34 : vector<32x64xf32> to vector<32x64xbf16>
    %c0_16 = arith.constant 0 : index
    %c0_17 = arith.constant 0 : index
    %c0_18 = arith.constant 0 : index
    %37 = vector.load %arg12[%c0_16, %c0_17, %c0_18] : memref<1x64x256xbf16, #tpu.memory_space<vmem>>, vector<1x64x256xbf16>
    %38 = vector.shape_cast %37 : vector<1x64x256xbf16> to vector<64x256xbf16>
    %cst_19 = arith.constant dense<0.000000e+00> : vector<32x256xf32>
    %39 = tpu.matmul %36, %38, %cst_19 {dimension_numbers = #tpu.dot_dimension_numbers<[1], [0], [0], [1], [0, 0, 1, 1], [], []>} : vector<32x64xbf16>, vector<64x256xbf16>, vector<32x256xf32> -> vector<32x256xf32>
    %40 = vector.broadcast %35 : vector<1x256xf32> to vector<32x256xf32>
    %41 = arith.addf %39, %40 : vector<32x256xf32>
    %42 = arith.negf %41 : vector<32x256xf32>
    %43 = math.exp %42 : vector<32x256xf32>
    %cst_20 = arith.constant 1.000000e+00 : f32
    %44 = vector.broadcast %cst_20 : f32 to vector<32x256xf32>
    %45 = arith.addf %44, %43 : vector<32x256xf32>
    %46 = arith.divf %44, %45 : vector<32x256xf32>
    %47 = arith.mulf %41, %46 : vector<32x256xf32>
    %48 = vector.extract_strided_slice %4 {offsets = [2, 0], sizes = [1, 64], strides = [1, 1]} : vector<32x64xf32> to vector<1x64xf32>
    %49 = arith.truncf %47 : vector<32x256xf32> to vector<32x256xbf16>
    %c0_21 = arith.constant 0 : index
    %c0_22 = arith.constant 0 : index
    %c0_23 = arith.constant 0 : index
    %50 = vector.load %arg13[%c0_21, %c0_22, %c0_23] : memref<1x256x64xbf16, #tpu.memory_space<vmem>>, vector<1x256x64xbf16>
    %51 = vector.shape_cast %50 : vector<1x256x64xbf16> to vector<256x64xbf16>
    %cst_24 = arith.constant dense<0.000000e+00> : vector<32x64xf32>
    %52 = tpu.matmul %49, %51, %cst_24 {dimension_numbers = #tpu.dot_dimension_numbers<[1], [0], [0], [1], [0, 0, 1, 1], [], []>} : vector<32x256xbf16>, vector<256x64xbf16>, vector<32x64xf32> -> vector<32x64xf32>
    %53 = vector.broadcast %48 : vector<1x64xf32> to vector<32x64xf32>
    %54 = arith.addf %52, %53 : vector<32x64xf32>
    %cst_25 = arith.constant 5.000000e-01 : f32
    %55 = vector.broadcast %cst_25 : f32 to vector<32x64xf32>
    %56 = arith.mulf %55, %54 : vector<32x64xf32>
    %57 = arith.addf %56, %10 : vector<32x64xf32>
    %cst_26 = arith.constant dense<0.000000e+00> : vector<32xf32>
    %58 = vector.multi_reduction <add>, %57, %cst_26 [1] : vector<32x64xf32> to vector<32xf32>
    %59 = vector.shape_cast %58 : vector<32xf32> to vector<32x1xf32>
    %cst_27 = arith.constant 6.400000e+01 : f32
    %60 = vector.broadcast %cst_27 : f32 to vector<32x1xf32>
    %61 = arith.divf %59, %60 : vector<32x1xf32>
    %62 = vector.broadcast %61 : vector<32x1xf32> to vector<32x64xf32>
    %63 = arith.subf %57, %62 : vector<32x64xf32>
    %64 = arith.mulf %63, %63 : vector<32x64xf32>
    %cst_28 = arith.constant dense<0.000000e+00> : vector<32xf32>
    %65 = vector.multi_reduction <add>, %64, %cst_28 [1] : vector<32x64xf32> to vector<32xf32>
    %66 = vector.shape_cast %65 : vector<32xf32> to vector<32x1xf32>
    %cst_29 = arith.constant 6.400000e+01 : f32
    %67 = vector.broadcast %cst_29 : f32 to vector<32x1xf32>
    %68 = arith.divf %66, %67 : vector<32x1xf32>
    %69 = vector.broadcast %61 : vector<32x1xf32> to vector<32x64xf32>
    %70 = arith.subf %57, %69 : vector<32x64xf32>
    %cst_30 = arith.constant 9.99999974E-6 : f32
    %71 = vector.broadcast %cst_30 : f32 to vector<32x1xf32>
    %72 = arith.addf %68, %71 : vector<32x1xf32>
    %73 = math.rsqrt %72 : vector<32x1xf32>
    %74 = vector.broadcast %73 : vector<32x1xf32> to vector<32x64xf32>
    %75 = arith.mulf %70, %74 : vector<32x64xf32>
    %76 = vector.extract_strided_slice %4 {offsets = [3, 0], sizes = [1, 64], strides = [1, 1]} : vector<32x64xf32> to vector<1x64xf32>
    %77 = vector.broadcast %76 : vector<1x64xf32> to vector<32x64xf32>
    %78 = arith.mulf %75, %77 : vector<32x64xf32>
    %79 = vector.extract_strided_slice %4 {offsets = [4, 0], sizes = [1, 64], strides = [1, 1]} : vector<32x64xf32> to vector<1x64xf32>
    %80 = vector.broadcast %79 : vector<1x64xf32> to vector<32x64xf32>
    %81 = arith.addf %78, %80 : vector<32x64xf32>
    %82 = vector.extract_strided_slice %6 {offsets = [2, 0], sizes = [1, 192], strides = [1, 1]} : vector<8x256xf32> to vector<1x192xf32>
    %83 = arith.truncf %81 : vector<32x64xf32> to vector<32x64xbf16>
    %c0_31 = arith.constant 0 : index
    %c0_32 = arith.constant 0 : index
    %c0_33 = arith.constant 0 : index
    %84 = vector.load %arg14[%c0_31, %c0_32, %c0_33] : memref<1x64x192xbf16, #tpu.memory_space<vmem>>, vector<1x64x192xbf16>
    %85 = vector.shape_cast %84 : vector<1x64x192xbf16> to vector<64x192xbf16>
    %cst_34 = arith.constant dense<0.000000e+00> : vector<32x192xf32>
    %86 = tpu.matmul %83, %85, %cst_34 {dimension_numbers = #tpu.dot_dimension_numbers<[1], [0], [0], [1], [0, 0, 1, 1], [], []>} : vector<32x64xbf16>, vector<64x192xbf16>, vector<32x192xf32> -> vector<32x192xf32>
    %87 = vector.broadcast %82 : vector<1x192xf32> to vector<32x192xf32>
    %88 = arith.addf %86, %87 : vector<32x192xf32>
    %c0_35 = arith.constant 0 : index
    %c0_36 = arith.constant 0 : index
    %89 = vector.load %arg21[%c0_35, %c0_36] : memref<32x32xf32, #tpu.memory_space<vmem>>, vector<32x32xf32>
    %c0_37 = arith.constant 0 : index
    %c0_38 = arith.constant 0 : index
    %c0_39 = arith.constant 0 : index
    %90 = vector.load %arg15[%c0_37, %c0_38, %c0_39] : memref<1x64x64xbf16, #tpu.memory_space<vmem>>, vector<1x64x64xbf16>
    %91 = vector.shape_cast %90 : vector<1x64x64xbf16> to vector<64x64xbf16>
    %cst_40 = arith.constant 0.000000e+00 : f32
    %92 = vector.broadcast %cst_40 : f32 to vector<32x64xf32>
    %93 = vector.extract_strided_slice %88 {offsets = [0, 0], sizes = [32, 16], strides = [1, 1]} : vector<32x192xf32> to vector<32x16xf32>
    %94 = arith.truncf %93 : vector<32x16xf32> to vector<32x16xbf16>
    %95 = vector.extract_strided_slice %88 {offsets = [0, 64], sizes = [32, 16], strides = [1, 1]} : vector<32x192xf32> to vector<32x16xf32>
    %96 = arith.truncf %95 : vector<32x16xf32> to vector<32x16xbf16>
    %97 = vector.extract_strided_slice %88 {offsets = [0, 128], sizes = [32, 16], strides = [1, 1]} : vector<32x192xf32> to vector<32x16xf32>
    %98 = arith.truncf %97 : vector<32x16xf32> to vector<32x16xbf16>
    "tpu.trace_start"() <{level = 10 : i32, message = "td,sd->ts"}> : () -> ()
    %cst_41 = arith.constant dense<0.000000e+00> : vector<32x32xf32>
    %99 = tpu.matmul %94, %96, %cst_41 {dimension_numbers = #tpu.dot_dimension_numbers<[1], [1], [0], [0], [0, 0, 1, 0], [], []>} : vector<32x16xbf16>, vector<32x16xbf16>, vector<32x32xf32> -> vector<32x32xf32>
    "tpu.trace_stop"() : () -> ()
    %100 = arith.addf %99, %89 : vector<32x32xf32>
    %cst_42 = arith.constant dense<0xFF800000> : vector<32xf32>
    %101 = vector.multi_reduction <maximumf>, %100, %cst_42 [1] : vector<32x32xf32> to vector<32xf32>
    %102 = vector.shape_cast %101 : vector<32xf32> to vector<32x1xf32>
    %103 = vector.broadcast %102 : vector<32x1xf32> to vector<32x32xf32>
    %104 = arith.subf %100, %103 : vector<32x32xf32>
    %105 = math.exp %104 : vector<32x32xf32>
    %cst_43 = arith.constant dense<0.000000e+00> : vector<32xf32>
    %106 = vector.multi_reduction <add>, %105, %cst_43 [1] : vector<32x32xf32> to vector<32xf32>
    %107 = vector.shape_cast %106 : vector<32xf32> to vector<32x1xf32>
    %108 = tpu.reciprocal %107 {approx = true} : vector<32x1xf32> -> vector<32x1xf32>
    %109 = vector.broadcast %108 : vector<32x1xf32> to vector<32x32xf32>
    %110 = arith.mulf %105, %109 : vector<32x32xf32>
    %111 = arith.truncf %110 : vector<32x32xf32> to vector<32x32xbf16>
    %cst_44 = arith.constant dense<0.000000e+00> : vector<32x16xf32>
    %112 = tpu.matmul %111, %98, %cst_44 {dimension_numbers = #tpu.dot_dimension_numbers<[1], [0], [0], [1], [0, 0, 1, 1], [], []>} : vector<32x32xbf16>, vector<32x16xbf16>, vector<32x16xf32> -> vector<32x16xf32>
    %113 = arith.truncf %112 : vector<32x16xf32> to vector<32x16xbf16>
    %114 = vector.extract_strided_slice %91 {offsets = [0, 0], sizes = [16, 64], strides = [1, 1]} : vector<64x64xbf16> to vector<16x64xbf16>
    %cst_45 = arith.constant dense<0.000000e+00> : vector<32x64xf32>
    %115 = tpu.matmul %113, %114, %cst_45 {dimension_numbers = #tpu.dot_dimension_numbers<[1], [0], [0], [1], [0, 0, 1, 1], [], []>} : vector<32x16xbf16>, vector<16x64xbf16>, vector<32x64xf32> -> vector<32x64xf32>
    %116 = arith.addf %92, %115 : vector<32x64xf32>
    %117 = vector.extract_strided_slice %88 {offsets = [0, 16], sizes = [32, 16], strides = [1, 1]} : vector<32x192xf32> to vector<32x16xf32>
    %118 = arith.truncf %117 : vector<32x16xf32> to vector<32x16xbf16>
    %119 = vector.extract_strided_slice %88 {offsets = [0, 80], sizes = [32, 16], strides = [1, 1]} : vector<32x192xf32> to vector<32x16xf32>
    %120 = arith.truncf %119 : vector<32x16xf32> to vector<32x16xbf16>
    %121 = vector.extract_strided_slice %88 {offsets = [0, 144], sizes = [32, 16], strides = [1, 1]} : vector<32x192xf32> to vector<32x16xf32>
    %122 = arith.truncf %121 : vector<32x16xf32> to vector<32x16xbf16>
    "tpu.trace_start"() <{level = 10 : i32, message = "td,sd->ts"}> : () -> ()
    %cst_46 = arith.constant dense<0.000000e+00> : vector<32x32xf32>
    %123 = tpu.matmul %118, %120, %cst_46 {dimension_numbers = #tpu.dot_dimension_numbers<[1], [1], [0], [0], [0, 0, 1, 0], [], []>} : vector<32x16xbf16>, vector<32x16xbf16>, vector<32x32xf32> -> vector<32x32xf32>
    "tpu.trace_stop"() : () -> ()
    %124 = arith.addf %123, %89 : vector<32x32xf32>
    %cst_47 = arith.constant dense<0xFF800000> : vector<32xf32>
    %125 = vector.multi_reduction <maximumf>, %124, %cst_47 [1] : vector<32x32xf32> to vector<32xf32>
    %126 = vector.shape_cast %125 : vector<32xf32> to vector<32x1xf32>
    %127 = vector.broadcast %126 : vector<32x1xf32> to vector<32x32xf32>
    %128 = arith.subf %124, %127 : vector<32x32xf32>
    %129 = math.exp %128 : vector<32x32xf32>
    %cst_48 = arith.constant dense<0.000000e+00> : vector<32xf32>
    %130 = vector.multi_reduction <add>, %129, %cst_48 [1] : vector<32x32xf32> to vector<32xf32>
    %131 = vector.shape_cast %130 : vector<32xf32> to vector<32x1xf32>
    %132 = tpu.reciprocal %131 {approx = true} : vector<32x1xf32> -> vector<32x1xf32>
    %133 = vector.broadcast %132 : vector<32x1xf32> to vector<32x32xf32>
    %134 = arith.mulf %129, %133 : vector<32x32xf32>
    %135 = arith.truncf %134 : vector<32x32xf32> to vector<32x32xbf16>
    %cst_49 = arith.constant dense<0.000000e+00> : vector<32x16xf32>
    %136 = tpu.matmul %135, %122, %cst_49 {dimension_numbers = #tpu.dot_dimension_numbers<[1], [0], [0], [1], [0, 0, 1, 1], [], []>} : vector<32x32xbf16>, vector<32x16xbf16>, vector<32x16xf32> -> vector<32x16xf32>
    %137 = arith.truncf %136 : vector<32x16xf32> to vector<32x16xbf16>
    %138 = vector.extract_strided_slice %91 {offsets = [16, 0], sizes = [16, 64], strides = [1, 1]} : vector<64x64xbf16> to vector<16x64xbf16>
    %cst_50 = arith.constant dense<0.000000e+00> : vector<32x64xf32>
    %139 = tpu.matmul %137, %138, %cst_50 {dimension_numbers = #tpu.dot_dimension_numbers<[1], [0], [0], [1], [0, 0, 1, 1], [], []>} : vector<32x16xbf16>, vector<16x64xbf16>, vector<32x64xf32> -> vector<32x64xf32>
    %140 = arith.addf %116, %139 : vector<32x64xf32>
    %141 = vector.extract_strided_slice %88 {offsets = [0, 32], sizes = [32, 16], strides = [1, 1]} : vector<32x192xf32> to vector<32x16xf32>
    %142 = arith.truncf %141 : vector<32x16xf32> to vector<32x16xbf16>
    %143 = vector.extract_strided_slice %88 {offsets = [0, 96], sizes = [32, 16], strides = [1, 1]} : vector<32x192xf32> to vector<32x16xf32>
    %144 = arith.truncf %143 : vector<32x16xf32> to vector<32x16xbf16>
    %145 = vector.extract_strided_slice %88 {offsets = [0, 160], sizes = [32, 16], strides = [1, 1]} : vector<32x192xf32> to vector<32x16xf32>
    %146 = arith.truncf %145 : vector<32x16xf32> to vector<32x16xbf16>
    "tpu.trace_start"() <{level = 10 : i32, message = "td,sd->ts"}> : () -> ()
    %cst_51 = arith.constant dense<0.000000e+00> : vector<32x32xf32>
    %147 = tpu.matmul %142, %144, %cst_51 {dimension_numbers = #tpu.dot_dimension_numbers<[1], [1], [0], [0], [0, 0, 1, 0], [], []>} : vector<32x16xbf16>, vector<32x16xbf16>, vector<32x32xf32> -> vector<32x32xf32>
    "tpu.trace_stop"() : () -> ()
    %148 = arith.addf %147, %89 : vector<32x32xf32>
    %cst_52 = arith.constant dense<0xFF800000> : vector<32xf32>
    %149 = vector.multi_reduction <maximumf>, %148, %cst_52 [1] : vector<32x32xf32> to vector<32xf32>
    %150 = vector.shape_cast %149 : vector<32xf32> to vector<32x1xf32>
    %151 = vector.broadcast %150 : vector<32x1xf32> to vector<32x32xf32>
    %152 = arith.subf %148, %151 : vector<32x32xf32>
    %153 = math.exp %152 : vector<32x32xf32>
    %cst_53 = arith.constant dense<0.000000e+00> : vector<32xf32>
    %154 = vector.multi_reduction <add>, %153, %cst_53 [1] : vector<32x32xf32> to vector<32xf32>
    %155 = vector.shape_cast %154 : vector<32xf32> to vector<32x1xf32>
    %156 = tpu.reciprocal %155 {approx = true} : vector<32x1xf32> -> vector<32x1xf32>
    %157 = vector.broadcast %156 : vector<32x1xf32> to vector<32x32xf32>
    %158 = arith.mulf %153, %157 : vector<32x32xf32>
    %159 = arith.truncf %158 : vector<32x32xf32> to vector<32x32xbf16>
    %cst_54 = arith.constant dense<0.000000e+00> : vector<32x16xf32>
    %160 = tpu.matmul %159, %146, %cst_54 {dimension_numbers = #tpu.dot_dimension_numbers<[1], [0], [0], [1], [0, 0, 1, 1], [], []>} : vector<32x32xbf16>, vector<32x16xbf16>, vector<32x16xf32> -> vector<32x16xf32>
    %161 = arith.truncf %160 : vector<32x16xf32> to vector<32x16xbf16>
    %162 = vector.extract_strided_slice %91 {offsets = [32, 0], sizes = [16, 64], strides = [1, 1]} : vector<64x64xbf16> to vector<16x64xbf16>
    %cst_55 = arith.constant dense<0.000000e+00> : vector<32x64xf32>
    %163 = tpu.matmul %161, %162, %cst_55 {dimension_numbers = #tpu.dot_dimension_numbers<[1], [0], [0], [1], [0, 0, 1, 1], [], []>} : vector<32x16xbf16>, vector<16x64xbf16>, vector<32x64xf32> -> vector<32x64xf32>
    %164 = arith.addf %140, %163 : vector<32x64xf32>
    %165 = vector.extract_strided_slice %88 {offsets = [0, 48], sizes = [32, 16], strides = [1, 1]} : vector<32x192xf32> to vector<32x16xf32>
    %166 = arith.truncf %165 : vector<32x16xf32> to vector<32x16xbf16>
    %167 = vector.extract_strided_slice %88 {offsets = [0, 112], sizes = [32, 16], strides = [1, 1]} : vector<32x192xf32> to vector<32x16xf32>
    %168 = arith.truncf %167 : vector<32x16xf32> to vector<32x16xbf16>
    %169 = vector.extract_strided_slice %88 {offsets = [0, 176], sizes = [32, 16], strides = [1, 1]} : vector<32x192xf32> to vector<32x16xf32>
    %170 = arith.truncf %169 : vector<32x16xf32> to vector<32x16xbf16>
    "tpu.trace_start"() <{level = 10 : i32, message = "td,sd->ts"}> : () -> ()
    %cst_56 = arith.constant dense<0.000000e+00> : vector<32x32xf32>
    %171 = tpu.matmul %166, %168, %cst_56 {dimension_numbers = #tpu.dot_dimension_numbers<[1], [1], [0], [0], [0, 0, 1, 0], [], []>} : vector<32x16xbf16>, vector<32x16xbf16>, vector<32x32xf32> -> vector<32x32xf32>
    "tpu.trace_stop"() : () -> ()
    %172 = arith.addf %171, %89 : vector<32x32xf32>
    %cst_57 = arith.constant dense<0xFF800000> : vector<32xf32>
    %173 = vector.multi_reduction <maximumf>, %172, %cst_57 [1] : vector<32x32xf32> to vector<32xf32>
    %174 = vector.shape_cast %173 : vector<32xf32> to vector<32x1xf32>
    %175 = vector.broadcast %174 : vector<32x1xf32> to vector<32x32xf32>
    %176 = arith.subf %172, %175 : vector<32x32xf32>
    %177 = math.exp %176 : vector<32x32xf32>
    %cst_58 = arith.constant dense<0.000000e+00> : vector<32xf32>
    %178 = vector.multi_reduction <add>, %177, %cst_58 [1] : vector<32x32xf32> to vector<32xf32>
    %179 = vector.shape_cast %178 : vector<32xf32> to vector<32x1xf32>
    %180 = tpu.reciprocal %179 {approx = true} : vector<32x1xf32> -> vector<32x1xf32>
    %181 = vector.broadcast %180 : vector<32x1xf32> to vector<32x32xf32>
    %182 = arith.mulf %177, %181 : vector<32x32xf32>
    %183 = arith.truncf %182 : vector<32x32xf32> to vector<32x32xbf16>
    %cst_59 = arith.constant dense<0.000000e+00> : vector<32x16xf32>
    %184 = tpu.matmul %183, %170, %cst_59 {dimension_numbers = #tpu.dot_dimension_numbers<[1], [0], [0], [1], [0, 0, 1, 1], [], []>} : vector<32x32xbf16>, vector<32x16xbf16>, vector<32x16xf32> -> vector<32x16xf32>
    %185 = arith.truncf %184 : vector<32x16xf32> to vector<32x16xbf16>
    %186 = vector.extract_strided_slice %91 {offsets = [48, 0], sizes = [16, 64], strides = [1, 1]} : vector<64x64xbf16> to vector<16x64xbf16>
    %cst_60 = arith.constant dense<0.000000e+00> : vector<32x64xf32>
    %187 = tpu.matmul %185, %186, %cst_60 {dimension_numbers = #tpu.dot_dimension_numbers<[1], [0], [0], [1], [0, 0, 1, 1], [], []>} : vector<32x16xbf16>, vector<16x64xbf16>, vector<32x64xf32> -> vector<32x64xf32>
    %188 = arith.addf %164, %187 : vector<32x64xf32>
    %189 = vector.extract_strided_slice %4 {offsets = [5, 0], sizes = [1, 64], strides = [1, 1]} : vector<32x64xf32> to vector<1x64xf32>
    %190 = vector.broadcast %189 : vector<1x64xf32> to vector<32x64xf32>
    %191 = arith.addf %188, %190 : vector<32x64xf32>
    %192 = arith.addf %191, %57 : vector<32x64xf32>
    %193 = vector.broadcast %8 : vector<32x1xf32> to vector<32x64xf32>
    %194 = arith.mulf %192, %193 : vector<32x64xf32>
    %cst_61 = arith.constant dense<0.000000e+00> : vector<32xf32>
    %195 = vector.multi_reduction <add>, %194, %cst_61 [1] : vector<32x64xf32> to vector<32xf32>
    %196 = vector.shape_cast %195 : vector<32xf32> to vector<32x1xf32>
    %cst_62 = arith.constant 6.400000e+01 : f32
    %197 = vector.broadcast %cst_62 : f32 to vector<32x1xf32>
    %198 = arith.divf %196, %197 : vector<32x1xf32>
    %199 = vector.broadcast %198 : vector<32x1xf32> to vector<32x64xf32>
    %200 = arith.subf %194, %199 : vector<32x64xf32>
    %201 = arith.mulf %200, %200 : vector<32x64xf32>
    %cst_63 = arith.constant dense<0.000000e+00> : vector<32xf32>
    %202 = vector.multi_reduction <add>, %201, %cst_63 [1] : vector<32x64xf32> to vector<32xf32>
    %203 = vector.shape_cast %202 : vector<32xf32> to vector<32x1xf32>
    %cst_64 = arith.constant 6.400000e+01 : f32
    %204 = vector.broadcast %cst_64 : f32 to vector<32x1xf32>
    %205 = arith.divf %203, %204 : vector<32x1xf32>
    %206 = vector.broadcast %198 : vector<32x1xf32> to vector<32x64xf32>
    %207 = arith.subf %194, %206 : vector<32x64xf32>
    %cst_65 = arith.constant 9.99999974E-6 : f32
    %208 = vector.broadcast %cst_65 : f32 to vector<32x1xf32>
    %209 = arith.addf %205, %208 : vector<32x1xf32>
    %210 = math.rsqrt %209 : vector<32x1xf32>
    %211 = vector.broadcast %210 : vector<32x1xf32> to vector<32x64xf32>
    %212 = arith.mulf %207, %211 : vector<32x64xf32>
    %213 = vector.extract_strided_slice %4 {offsets = [6, 0], sizes = [1, 64], strides = [1, 1]} : vector<32x64xf32> to vector<1x64xf32>
    %214 = vector.broadcast %213 : vector<1x64xf32> to vector<32x64xf32>
    %215 = arith.mulf %212, %214 : vector<32x64xf32>
    %216 = vector.extract_strided_slice %4 {offsets = [7, 0], sizes = [1, 64], strides = [1, 1]} : vector<32x64xf32> to vector<1x64xf32>
    %217 = vector.broadcast %216 : vector<1x64xf32> to vector<32x64xf32>
    %218 = arith.addf %215, %217 : vector<32x64xf32>
    %219 = vector.extract_strided_slice %6 {offsets = [3, 0], sizes = [1, 128], strides = [1, 1]} : vector<8x256xf32> to vector<1x128xf32>
    %220 = arith.truncf %218 : vector<32x64xf32> to vector<32x64xbf16>
    %c0_66 = arith.constant 0 : index
    %c0_67 = arith.constant 0 : index
    %c0_68 = arith.constant 0 : index
    %221 = vector.load %arg16[%c0_66, %c0_67, %c0_68] : memref<1x64x128xbf16, #tpu.memory_space<vmem>>, vector<1x64x128xbf16>
    %222 = vector.shape_cast %221 : vector<1x64x128xbf16> to vector<64x128xbf16>
    %cst_69 = arith.constant dense<0.000000e+00> : vector<32x128xf32>
    %223 = tpu.matmul %220, %222, %cst_69 {dimension_numbers = #tpu.dot_dimension_numbers<[1], [0], [0], [1], [0, 0, 1, 1], [], []>} : vector<32x64xbf16>, vector<64x128xbf16>, vector<32x128xf32> -> vector<32x128xf32>
    %224 = vector.broadcast %219 : vector<1x128xf32> to vector<32x128xf32>
    %225 = arith.addf %223, %224 : vector<32x128xf32>
    %226 = vector.extract_strided_slice %225 {offsets = [0, 0], sizes = [32, 64], strides = [1, 1]} : vector<32x128xf32> to vector<32x64xf32>
    %227 = vector.extract_strided_slice %225 {offsets = [0, 64], sizes = [32, 64], strides = [1, 1]} : vector<32x128xf32> to vector<32x64xf32>
    %228 = arith.negf %227 : vector<32x64xf32>
    %229 = math.exp %228 : vector<32x64xf32>
    %cst_70 = arith.constant 1.000000e+00 : f32
    %230 = vector.broadcast %cst_70 : f32 to vector<32x64xf32>
    %231 = arith.addf %230, %229 : vector<32x64xf32>
    %232 = arith.divf %230, %231 : vector<32x64xf32>
    %233 = arith.mulf %226, %232 : vector<32x64xf32>
    %234 = tpu.iota {dimensions = array<i32: 0>} : vector<32x1xi32>
    %235 = arith.index_cast %arg0 : i32 to index
    %236 = memref.load %arg3[%235] : memref<2xi32, #tpu.memory_space<smem>>
    %237 = vector.broadcast %236 : i32 to vector<32x1xi32>
    %238 = arith.cmpi slt, %234, %237 : vector<32x1xi32>
    %239 = arith.extui %238 : vector<32x1xi1> to vector<32x1xi32>
    %240 = arith.sitofp %239 : vector<32x1xi32> to vector<32x1xf32>
    %241 = vector.broadcast %240 : vector<32x1xf32> to vector<32x64xf32>
    %242 = arith.mulf %233, %241 : vector<32x64xf32>
    %243 = vector.extract_strided_slice %4 {offsets = [24, 0], sizes = [7, 64], strides = [1, 1]} : vector<32x64xf32> to vector<7x64xf32>
    %244 = vector.extract_strided_slice %243 {offsets = [3, 0], sizes = [1, 64], strides = [1, 1]} : vector<7x64xf32> to vector<1x64xf32>
    %245 = vector.broadcast %244 : vector<1x64xf32> to vector<32x64xf32>
    %246 = arith.mulf %242, %245 : vector<32x64xf32>
    %c3_i32 = arith.constant 3 : i32
    %247 = tpu.dynamic_rotate %242 by %c3_i32 dim 0 : vector<32x64xf32>, i32 -> vector<32x64xf32>
    %248 = vector.extract_strided_slice %243 {offsets = [0, 0], sizes = [1, 64], strides = [1, 1]} : vector<7x64xf32> to vector<1x64xf32>
    %249 = vector.broadcast %248 : vector<1x64xf32> to vector<32x64xf32>
    %250 = arith.mulf %247, %249 : vector<32x64xf32>
    %251 = arith.addf %246, %250 : vector<32x64xf32>
    %c2_i32 = arith.constant 2 : i32
    %252 = tpu.dynamic_rotate %242 by %c2_i32 dim 0 : vector<32x64xf32>, i32 -> vector<32x64xf32>
    %253 = vector.extract_strided_slice %243 {offsets = [1, 0], sizes = [1, 64], strides = [1, 1]} : vector<7x64xf32> to vector<1x64xf32>
    %254 = vector.broadcast %253 : vector<1x64xf32> to vector<32x64xf32>
    %255 = arith.mulf %252, %254 : vector<32x64xf32>
    %256 = arith.addf %251, %255 : vector<32x64xf32>
    %c1_i32 = arith.constant 1 : i32
    %257 = tpu.dynamic_rotate %242 by %c1_i32 dim 0 : vector<32x64xf32>, i32 -> vector<32x64xf32>
    %258 = vector.extract_strided_slice %243 {offsets = [2, 0], sizes = [1, 64], strides = [1, 1]} : vector<7x64xf32> to vector<1x64xf32>
    %259 = vector.broadcast %258 : vector<1x64xf32> to vector<32x64xf32>
    %260 = arith.mulf %257, %259 : vector<32x64xf32>
    %261 = arith.addf %256, %260 : vector<32x64xf32>
    %c31_i32 = arith.constant 31 : i32
    %262 = tpu.dynamic_rotate %242 by %c31_i32 dim 0 : vector<32x64xf32>, i32 -> vector<32x64xf32>
    %263 = vector.extract_strided_slice %243 {offsets = [4, 0], sizes = [1, 64], strides = [1, 1]} : vector<7x64xf32> to vector<1x64xf32>
    %264 = vector.broadcast %263 : vector<1x64xf32> to vector<32x64xf32>
    %265 = arith.mulf %262, %264 : vector<32x64xf32>
    %266 = arith.addf %261, %265 : vector<32x64xf32>
    %c30_i32 = arith.constant 30 : i32
    %267 = tpu.dynamic_rotate %242 by %c30_i32 dim 0 : vector<32x64xf32>, i32 -> vector<32x64xf32>
    %268 = vector.extract_strided_slice %243 {offsets = [5, 0], sizes = [1, 64], strides = [1, 1]} : vector<7x64xf32> to vector<1x64xf32>
    %269 = vector.broadcast %268 : vector<1x64xf32> to vector<32x64xf32>
    %270 = arith.mulf %267, %269 : vector<32x64xf32>
    %271 = arith.addf %266, %270 : vector<32x64xf32>
    %c29_i32 = arith.constant 29 : i32
    %272 = tpu.dynamic_rotate %242 by %c29_i32 dim 0 : vector<32x64xf32>, i32 -> vector<32x64xf32>
    %273 = vector.extract_strided_slice %243 {offsets = [6, 0], sizes = [1, 64], strides = [1, 1]} : vector<7x64xf32> to vector<1x64xf32>
    %274 = vector.broadcast %273 : vector<1x64xf32> to vector<32x64xf32>
    %275 = arith.mulf %272, %274 : vector<32x64xf32>
    %276 = arith.addf %271, %275 : vector<32x64xf32>
    %277 = vector.extract_strided_slice %4 {offsets = [8, 0], sizes = [1, 64], strides = [1, 1]} : vector<32x64xf32> to vector<1x64xf32>
    %278 = vector.broadcast %277 : vector<1x64xf32> to vector<32x64xf32>
    %279 = arith.addf %276, %278 : vector<32x64xf32>
    %280 = vector.extract_strided_slice %4 {offsets = [11, 0], sizes = [1, 64], strides = [1, 1]} : vector<32x64xf32> to vector<1x64xf32>
    %281 = vector.broadcast %280 : vector<1x64xf32> to vector<32x64xf32>
    %282 = arith.subf %279, %281 : vector<32x64xf32>
    %283 = vector.extract_strided_slice %4 {offsets = [12, 0], sizes = [1, 64], strides = [1, 1]} : vector<32x64xf32> to vector<1x64xf32>
    %cst_71 = arith.constant 9.99999974E-6 : f32
    %284 = vector.broadcast %cst_71 : f32 to vector<1x64xf32>
    %285 = arith.addf %283, %284 : vector<1x64xf32>
    %286 = math.rsqrt %285 : vector<1x64xf32>
    %287 = vector.broadcast %286 : vector<1x64xf32> to vector<32x64xf32>
    %288 = arith.mulf %282, %287 : vector<32x64xf32>
    %289 = vector.extract_strided_slice %4 {offsets = [9, 0], sizes = [1, 64], strides = [1, 1]} : vector<32x64xf32> to vector<1x64xf32>
    %290 = vector.broadcast %289 : vector<1x64xf32> to vector<32x64xf32>
    %291 = arith.mulf %288, %290 : vector<32x64xf32>
    %292 = vector.extract_strided_slice %4 {offsets = [10, 0], sizes = [1, 64], strides = [1, 1]} : vector<32x64xf32> to vector<1x64xf32>
    %293 = vector.broadcast %292 : vector<1x64xf32> to vector<32x64xf32>
    %294 = arith.addf %291, %293 : vector<32x64xf32>
    %295 = arith.negf %294 : vector<32x64xf32>
    %296 = math.exp %295 : vector<32x64xf32>
    %cst_72 = arith.constant 1.000000e+00 : f32
    %297 = vector.broadcast %cst_72 : f32 to vector<32x64xf32>
    %298 = arith.addf %297, %296 : vector<32x64xf32>
    %299 = arith.divf %297, %298 : vector<32x64xf32>
    %300 = arith.mulf %294, %299 : vector<32x64xf32>
    %301 = vector.extract_strided_slice %4 {offsets = [13, 0], sizes = [1, 64], strides = [1, 1]} : vector<32x64xf32> to vector<1x64xf32>
    %302 = arith.truncf %300 : vector<32x64xf32> to vector<32x64xbf16>
    %c0_73 = arith.constant 0 : index
    %c0_74 = arith.constant 0 : index
    %c0_75 = arith.constant 0 : index
    %303 = vector.load %arg17[%c0_73, %c0_74, %c0_75] : memref<1x64x64xbf16, #tpu.memory_space<vmem>>, vector<1x64x64xbf16>
    %304 = vector.shape_cast %303 : vector<1x64x64xbf16> to vector<64x64xbf16>
    %cst_76 = arith.constant dense<0.000000e+00> : vector<32x64xf32>
    %305 = tpu.matmul %302, %304, %cst_76 {dimension_numbers = #tpu.dot_dimension_numbers<[1], [0], [0], [1], [0, 0, 1, 1], [], []>} : vector<32x64xbf16>, vector<64x64xbf16>, vector<32x64xf32> -> vector<32x64xf32>
    %306 = vector.broadcast %301 : vector<1x64xf32> to vector<32x64xf32>
    %307 = arith.addf %305, %306 : vector<32x64xf32>
    %308 = arith.addf %307, %194 : vector<32x64xf32>
    %cst_77 = arith.constant dense<0.000000e+00> : vector<32xf32>
    %309 = vector.multi_reduction <add>, %308, %cst_77 [1] : vector<32x64xf32> to vector<32xf32>
    %310 = vector.shape_cast %309 : vector<32xf32> to vector<32x1xf32>
    %cst_78 = arith.constant 6.400000e+01 : f32
    %311 = vector.broadcast %cst_78 : f32 to vector<32x1xf32>
    %312 = arith.divf %310, %311 : vector<32x1xf32>
    %313 = vector.broadcast %312 : vector<32x1xf32> to vector<32x64xf32>
    %314 = arith.subf %308, %313 : vector<32x64xf32>
    %315 = arith.mulf %314, %314 : vector<32x64xf32>
    %cst_79 = arith.constant dense<0.000000e+00> : vector<32xf32>
    %316 = vector.multi_reduction <add>, %315, %cst_79 [1] : vector<32x64xf32> to vector<32xf32>
    %317 = vector.shape_cast %316 : vector<32xf32> to vector<32x1xf32>
    %cst_80 = arith.constant 6.400000e+01 : f32
    %318 = vector.broadcast %cst_80 : f32 to vector<32x1xf32>
    %319 = arith.divf %317, %318 : vector<32x1xf32>
    %320 = vector.broadcast %312 : vector<32x1xf32> to vector<32x64xf32>
    %321 = arith.subf %308, %320 : vector<32x64xf32>
    %cst_81 = arith.constant 9.99999974E-6 : f32
    %322 = vector.broadcast %cst_81 : f32 to vector<32x1xf32>
    %323 = arith.addf %319, %322 : vector<32x1xf32>
    %324 = math.rsqrt %323 : vector<32x1xf32>
    %325 = vector.broadcast %324 : vector<32x1xf32> to vector<32x64xf32>
    %326 = arith.mulf %321, %325 : vector<32x64xf32>
    %327 = vector.extract_strided_slice %4 {offsets = [14, 0], sizes = [1, 64], strides = [1, 1]} : vector<32x64xf32> to vector<1x64xf32>
    %328 = vector.broadcast %327 : vector<1x64xf32> to vector<32x64xf32>
    %329 = arith.mulf %326, %328 : vector<32x64xf32>
    %330 = vector.extract_strided_slice %4 {offsets = [15, 0], sizes = [1, 64], strides = [1, 1]} : vector<32x64xf32> to vector<1x64xf32>
    %331 = vector.broadcast %330 : vector<1x64xf32> to vector<32x64xf32>
    %332 = arith.addf %329, %331 : vector<32x64xf32>
    %333 = vector.extract_strided_slice %6 {offsets = [1, 0], sizes = [1, 256], strides = [1, 1]} : vector<8x256xf32> to vector<1x256xf32>
    %334 = arith.truncf %332 : vector<32x64xf32> to vector<32x64xbf16>
    %c0_82 = arith.constant 0 : index
    %c0_83 = arith.constant 0 : index
    %c0_84 = arith.constant 0 : index
    %335 = vector.load %arg18[%c0_82, %c0_83, %c0_84] : memref<1x64x256xbf16, #tpu.memory_space<vmem>>, vector<1x64x256xbf16>
    %336 = vector.shape_cast %335 : vector<1x64x256xbf16> to vector<64x256xbf16>
    %cst_85 = arith.constant dense<0.000000e+00> : vector<32x256xf32>
    %337 = tpu.matmul %334, %336, %cst_85 {dimension_numbers = #tpu.dot_dimension_numbers<[1], [0], [0], [1], [0, 0, 1, 1], [], []>} : vector<32x64xbf16>, vector<64x256xbf16>, vector<32x256xf32> -> vector<32x256xf32>
    %338 = vector.broadcast %333 : vector<1x256xf32> to vector<32x256xf32>
    %339 = arith.addf %337, %338 : vector<32x256xf32>
    %340 = arith.negf %339 : vector<32x256xf32>
    %341 = math.exp %340 : vector<32x256xf32>
    %cst_86 = arith.constant 1.000000e+00 : f32
    %342 = vector.broadcast %cst_86 : f32 to vector<32x256xf32>
    %343 = arith.addf %342, %341 : vector<32x256xf32>
    %344 = arith.divf %342, %343 : vector<32x256xf32>
    %345 = arith.mulf %339, %344 : vector<32x256xf32>
    %346 = vector.extract_strided_slice %4 {offsets = [16, 0], sizes = [1, 64], strides = [1, 1]} : vector<32x64xf32> to vector<1x64xf32>
    %347 = arith.truncf %345 : vector<32x256xf32> to vector<32x256xbf16>
    %c0_87 = arith.constant 0 : index
    %c0_88 = arith.constant 0 : index
    %c0_89 = arith.constant 0 : index
    %348 = vector.load %arg19[%c0_87, %c0_88, %c0_89] : memref<1x256x64xbf16, #tpu.memory_space<vmem>>, vector<1x256x64xbf16>
    %349 = vector.shape_cast %348 : vector<1x256x64xbf16> to vector<256x64xbf16>
    %cst_90 = arith.constant dense<0.000000e+00> : vector<32x64xf32>
    %350 = tpu.matmul %347, %349, %cst_90 {dimension_numbers = #tpu.dot_dimension_numbers<[1], [0], [0], [1], [0, 0, 1, 1], [], []>} : vector<32x256xbf16>, vector<256x64xbf16>, vector<32x64xf32> -> vector<32x64xf32>
    %351 = vector.broadcast %346 : vector<1x64xf32> to vector<32x64xf32>
    %352 = arith.addf %350, %351 : vector<32x64xf32>
    %cst_91 = arith.constant 5.000000e-01 : f32
    %353 = vector.broadcast %cst_91 : f32 to vector<32x64xf32>
    %354 = arith.mulf %353, %352 : vector<32x64xf32>
    %355 = arith.addf %354, %308 : vector<32x64xf32>
    %cst_92 = arith.constant dense<0.000000e+00> : vector<32xf32>
    %356 = vector.multi_reduction <add>, %355, %cst_92 [1] : vector<32x64xf32> to vector<32xf32>
    %357 = vector.shape_cast %356 : vector<32xf32> to vector<32x1xf32>
    %cst_93 = arith.constant 6.400000e+01 : f32
    %358 = vector.broadcast %cst_93 : f32 to vector<32x1xf32>
    %359 = arith.divf %357, %358 : vector<32x1xf32>
    %360 = vector.broadcast %359 : vector<32x1xf32> to vector<32x64xf32>
    %361 = arith.subf %355, %360 : vector<32x64xf32>
    %362 = arith.mulf %361, %361 : vector<32x64xf32>
    %cst_94 = arith.constant dense<0.000000e+00> : vector<32xf32>
    %363 = vector.multi_reduction <add>, %362, %cst_94 [1] : vector<32x64xf32> to vector<32xf32>
    %364 = vector.shape_cast %363 : vector<32xf32> to vector<32x1xf32>
    %cst_95 = arith.constant 6.400000e+01 : f32
    %365 = vector.broadcast %cst_95 : f32 to vector<32x1xf32>
    %366 = arith.divf %364, %365 : vector<32x1xf32>
    %367 = vector.broadcast %359 : vector<32x1xf32> to vector<32x64xf32>
    %368 = arith.subf %355, %367 : vector<32x64xf32>
    %cst_96 = arith.constant 9.99999974E-6 : f32
    %369 = vector.broadcast %cst_96 : f32 to vector<32x1xf32>
    %370 = arith.addf %366, %369 : vector<32x1xf32>
    %371 = math.rsqrt %370 : vector<32x1xf32>
    %372 = vector.broadcast %371 : vector<32x1xf32> to vector<32x64xf32>
    %373 = arith.mulf %368, %372 : vector<32x64xf32>
    %374 = vector.extract_strided_slice %4 {offsets = [17, 0], sizes = [1, 64], strides = [1, 1]} : vector<32x64xf32> to vector<1x64xf32>
    %375 = vector.broadcast %374 : vector<1x64xf32> to vector<32x64xf32>
    %376 = arith.mulf %373, %375 : vector<32x64xf32>
    %377 = vector.extract_strided_slice %4 {offsets = [18, 0], sizes = [1, 64], strides = [1, 1]} : vector<32x64xf32> to vector<1x64xf32>
    %378 = vector.broadcast %377 : vector<1x64xf32> to vector<32x64xf32>
    %379 = arith.addf %376, %378 : vector<32x64xf32>
    %c0_97 = arith.constant 0 : index
    %c0_98 = arith.constant 0 : index
    %c0_99 = arith.constant 0 : index
    %380 = vector.load %arg20[%c0_97, %c0_98, %c0_99] : memref<1x32x64xf32, #tpu.memory_space<vmem>>, vector<1x32x64xf32>
    %381 = vector.shape_cast %380 : vector<1x32x64xf32> to vector<32x64xf32>
    %382 = vector.shape_cast %379 : vector<32x64xf32> to vector<1x32x64xf32>
    tpu.vector_store %arg20[%c0_97, %c0_98, %c0_99], %382 {strides = array<i32>} : memref<1x32x64xf32, #tpu.memory_space<vmem>>, vector<1x32x64xf32>,
    return
  }
  func.func @transform_0(%arg0: i32, %arg1: i32, %arg2: memref<2xi32, #tpu.memory_space<smem>>, %arg3: memref<2xi32, #tpu.memory_space<smem>>) -> (i32, i32, i32) {
    %c0_i32 = arith.constant 0 : i32
    %c0_i32_0 = arith.constant 0 : i32
    %c0_i32_1 = arith.constant 0 : i32
    return %arg0, %c0_i32, %c0_i32_0 : i32, i32, i32
  }
  func.func @transform_1(%arg0: i32, %arg1: i32, %arg2: memref<2xi32, #tpu.memory_space<smem>>, %arg3: memref<2xi32, #tpu.memory_space<smem>>) -> (i32, i32, i32) {
    %c0_i32 = arith.constant 0 : i32
    %c0_i32_0 = arith.constant 0 : i32
    %c0_i32_1 = arith.constant 0 : i32
    return %arg0, %c0_i32, %c0_i32_0 : i32, i32, i32
  }
  func.func @transform_2(%arg0: i32, %arg1: i32, %arg2: memref<2xi32, #tpu.memory_space<smem>>, %arg3: memref<2xi32, #tpu.memory_space<smem>>) -> (i32, i32, i32) {
    %c0_i32 = arith.constant 0 : i32
    %c0_i32_0 = arith.constant 0 : i32
    %c0_i32_1 = arith.constant 0 : i32
    return %arg0, %c0_i32, %c0_i32_0 : i32, i32, i32
  }
  func.func @transform_3(%arg0: i32, %arg1: i32, %arg2: memref<2xi32, #tpu.memory_space<smem>>, %arg3: memref<2xi32, #tpu.memory_space<smem>>) -> (i32, i32, i32) {
    %c0_i32 = arith.constant 0 : i32
    %c0_i32_0 = arith.constant 0 : i32
    %c0_i32_1 = arith.constant 0 : i32
    %c0_i32_2 = arith.constant 0 : i32
    return %c0_i32, %c0_i32_0, %c0_i32_1 : i32, i32, i32
  }
  func.func @transform_4(%arg0: i32, %arg1: i32, %arg2: memref<2xi32, #tpu.memory_space<smem>>, %arg3: memref<2xi32, #tpu.memory_space<smem>>) -> (i32, i32, i32) {
    %c0_i32 = arith.constant 0 : i32
    %c0_i32_0 = arith.constant 0 : i32
    %c0_i32_1 = arith.constant 0 : i32
    %c0_i32_2 = arith.constant 0 : i32
    return %c0_i32, %c0_i32_0, %c0_i32_1 : i32, i32, i32
  }
  func.func @transform_5(%arg0: i32, %arg1: i32, %arg2: memref<2xi32, #tpu.memory_space<smem>>, %arg3: memref<2xi32, #tpu.memory_space<smem>>) -> (i32, i32, i32) {
    %c0_i32 = arith.constant 0 : i32
    %c0_i32_0 = arith.constant 0 : i32
    %c0_i32_1 = arith.constant 0 : i32
    %c0_i32_2 = arith.constant 0 : i32
    return %c0_i32, %c0_i32_0, %c0_i32_1 : i32, i32, i32
  }
  func.func @transform_6(%arg0: i32, %arg1: i32, %arg2: memref<2xi32, #tpu.memory_space<smem>>, %arg3: memref<2xi32, #tpu.memory_space<smem>>) -> (i32, i32, i32) {
    %c0_i32 = arith.constant 0 : i32
    %c0_i32_0 = arith.constant 0 : i32
    %c0_i32_1 = arith.constant 0 : i32
    return %arg1, %c0_i32, %c0_i32_0 : i32, i32, i32
  }
  func.func @transform_7(%arg0: i32, %arg1: i32, %arg2: memref<2xi32, #tpu.memory_space<smem>>, %arg3: memref<2xi32, #tpu.memory_space<smem>>) -> (i32, i32, i32) {
    %c0_i32 = arith.constant 0 : i32
    %c0_i32_0 = arith.constant 0 : i32
    %c0_i32_1 = arith.constant 0 : i32
    return %arg1, %c0_i32, %c0_i32_0 : i32, i32, i32
  }
  func.func @transform_8(%arg0: i32, %arg1: i32, %arg2: memref<2xi32, #tpu.memory_space<smem>>, %arg3: memref<2xi32, #tpu.memory_space<smem>>) -> (i32, i32, i32) {
    %c0_i32 = arith.constant 0 : i32
    %c0_i32_0 = arith.constant 0 : i32
    %c0_i32_1 = arith.constant 0 : i32
    return %arg1, %c0_i32, %c0_i32_0 : i32, i32, i32
  }
  func.func @transform_9(%arg0: i32, %arg1: i32, %arg2: memref<2xi32, #tpu.memory_space<smem>>, %arg3: memref<2xi32, #tpu.memory_space<smem>>) -> (i32, i32, i32) {
    %c0_i32 = arith.constant 0 : i32
    %c0_i32_0 = arith.constant 0 : i32
    %c0_i32_1 = arith.constant 0 : i32
    return %arg1, %c0_i32, %c0_i32_0 : i32, i32, i32
  }
  func.func @transform_10(%arg0: i32, %arg1: i32, %arg2: memref<2xi32, #tpu.memory_space<smem>>, %arg3: memref<2xi32, #tpu.memory_space<smem>>) -> (i32, i32, i32) {
    %c0_i32 = arith.constant 0 : i32
    %c0_i32_0 = arith.constant 0 : i32
    %c0_i32_1 = arith.constant 0 : i32
    return %arg1, %c0_i32, %c0_i32_0 : i32, i32, i32
  }
  func.func @transform_11(%arg0: i32, %arg1: i32, %arg2: memref<2xi32, #tpu.memory_space<smem>>, %arg3: memref<2xi32, #tpu.memory_space<smem>>) -> (i32, i32, i32) {
    %c0_i32 = arith.constant 0 : i32
    %c0_i32_0 = arith.constant 0 : i32
    %c0_i32_1 = arith.constant 0 : i32
    return %arg1, %c0_i32, %c0_i32_0 : i32, i32, i32
  }
  func.func @transform_12(%arg0: i32, %arg1: i32, %arg2: memref<2xi32, #tpu.memory_space<smem>>, %arg3: memref<2xi32, #tpu.memory_space<smem>>) -> (i32, i32, i32) {
    %c0_i32 = arith.constant 0 : i32
    %c0_i32_0 = arith.constant 0 : i32
    %c0_i32_1 = arith.constant 0 : i32
    return %arg1, %c0_i32, %c0_i32_0 : i32, i32, i32
  }
  func.func @transform_13(%arg0: i32, %arg1: i32, %arg2: memref<2xi32, #tpu.memory_space<smem>>, %arg3: memref<2xi32, #tpu.memory_space<smem>>) -> (i32, i32, i32) {
    %c0_i32 = arith.constant 0 : i32
    %c0_i32_0 = arith.constant 0 : i32
    %c0_i32_1 = arith.constant 0 : i32
    return %arg1, %c0_i32, %c0_i32_0 : i32, i32, i32
  }
  func.func @transform_14(%arg0: i32, %arg1: i32, %arg2: memref<2xi32, #tpu.memory_space<smem>>, %arg3: memref<2xi32, #tpu.memory_space<smem>>) -> (i32, i32, i32) {
    %c0_i32 = arith.constant 0 : i32
    %c0_i32_0 = arith.constant 0 : i32
    %c0_i32_1 = arith.constant 0 : i32
    return %arg1, %c0_i32, %c0_i32_0 : i32, i32, i32
  }
  func.func @transform_15(%arg0: i32, %arg1: i32, %arg2: memref<2xi32, #tpu.memory_space<smem>>, %arg3: memref<2xi32, #tpu.memory_space<smem>>) -> (i32, i32, i32) {
    %c0_i32 = arith.constant 0 : i32
    %c0_i32_0 = arith.constant 0 : i32
    %c0_i32_1 = arith.constant 0 : i32
    return %arg1, %c0_i32, %c0_i32_0 : i32, i32, i32
  }
  func.func @transform_16(%arg0: i32, %arg1: i32, %arg2: memref<2xi32, #tpu.memory_space<smem>>, %arg3: memref<2xi32, #tpu.memory_space<smem>>) -> (i32, i32, i32) {
    %c0_i32 = arith.constant 0 : i32
    %c0_i32_0 = arith.constant 0 : i32
    %c0_i32_1 = arith.constant 0 : i32
    return %arg0, %c0_i32, %c0_i32_0 : i32, i32, i32
  }
}

</mosaic_0001>

<llo_original>
// kernel: tpu_custom_call.1
$region0: #{tpu_custom_call.1}
  #allocation0 [shape = 'u32[]', space=smem, size = 0x4, offset = 0x4, fixed_abs, tag = 'smem constant byte address 0x4 - core index']
  #allocation1 [shape = 'u32[144,128]{1,0:T(1,128)}', space=vmem, size = 0x12000, scoped, tag = 'internal scratch']
  #allocation2 [shape = 'f32[32,32]{1,0:T(8,128)}', space=vmem, size = 0x4000, scoped, tag = 'scratch operand']
  #allocation3 [shape = 's32[1]{0}', space=sflag, size = 0x4, scoped, tag = 'scoped memory for tpu_custom_call.1']
  #allocation4 [shape = 'u8[512]{0}', space=smem, size = 0x200, scoped, tag = 'prefetched SMEM operand 0']
  #allocation5 [shape = 'u8[512]{0}', space=smem, size = 0x200, scoped, tag = 'prefetched SMEM operand 1']
  %s0 = inlined_call_operand.hbm [shape: s32[2], index: 0, kind: input, shape index: {}]
  %s1 = inlined_call_operand.hbm [shape: s32[2], index: 1, kind: input, shape index: {}]
  %s2 = inlined_call_operand.vmem [shape: f32[2,32,64], index: 2, kind: input, shape index: {}]
  %s3 = inlined_call_operand.vmem [shape: f32[2,1,32], index: 3, kind: input, shape index: {}]
  %s4 = inlined_call_operand.vmem [shape: f32[2,32,1], index: 4, kind: input, shape index: {}]
  %s5 = inlined_call_operand.vmem [shape: s32[1,32,1], index: 5, kind: input, shape index: {}]
  %s6 = inlined_call_operand.vmem [shape: s32[1,1,32], index: 6, kind: input, shape index: {}]
  %s7 = inlined_call_operand.vmem [shape: s32[1,1,32], index: 7, kind: input, shape index: {}]
  %s8 = inlined_call_operand.vmem [shape: f32[2,32,64], index: 8, kind: input, shape index: {}]
  %s9 = inlined_call_operand.vmem [shape: f32[2,8,256], index: 9, kind: input, shape index: {}]
  %s10 = inlined_call_operand.vmem [shape: bf16[2,64,256], index: 10, kind: input, shape index: {}]
  %s11 = inlined_call_operand.vmem [shape: bf16[2,256,64], index: 11, kind: input, shape index: {}]
  %s12 = inlined_call_operand.vmem [shape: bf16[2,64,192], index: 12, kind: input, shape index: {}]
  %s13 = inlined_call_operand.vmem [shape: bf16[2,64,64], index: 13, kind: input, shape index: {}]
  %s14 = inlined_call_operand.vmem [shape: bf16[2,64,128], index: 14, kind: input, shape index: {}]
  %s15 = inlined_call_operand.vmem [shape: bf16[2,64,64], index: 15, kind: input, shape index: {}]
  %s16 = inlined_call_operand.vmem [shape: bf16[2,64,256], index: 16, kind: input, shape index: {}]
  %s17 = inlined_call_operand.vmem [shape: bf16[2,256,64], index: 17, kind: input, shape index: {}]
  %s18 = inlined_call_operand.hbm [shape: f32[2,32,64], index: 18, kind: output, shape index: {}]
  %s19 = sld [smem:[#allocation0]]
  $region101: #{tpu_custom_call.1} parent=0
    _
  %s21 = ssub.s32 1, %s19
  %s22 = scalar_select 0, %s21, %s19
  %24 = dma.hbm_to_smem %s0, 16, [#allocation4], [#allocation3]
  %26 = dma.hbm_to_smem %s1, 16, [#allocation5], [#allocation3]
  %27 = dma.done [#allocation3], 32
  %28 = sfence
  $region1: #{tpu_custom_call.1} parent=0
    #allocation6 [shape = 'u8[32768]{0}', space=vmem, size = 0x8000, scoped, tag = 'output window, operand 0']
    #allocation7 [shape = 's32[2]{0}', space=sflag, size = 0x8, scoped, tag = 'scoped memory for tpu_custom_call.1']
    %29 = vsyncpa [#allocation7], 0
    %s30 = scalar_lea.sflag [#allocation7], 1
    %31 = vsyncpa %s30, 0
    loop: start=0, step=1, limit=6
    $region2: #{tpu_custom_call.1} parent=1 // loop_pre_header
      _
    $region3: #{tpu_custom_call.1} parent=1 // loop_header
      %s33 = sphi 0, %s37
      %p34 = scmp.ge.s32.totalorder %s33, 6
      %s40 = sphi 0, %s52
      %s41 = sphi 0, %s48
      %s42 = sphi 0, %s40
      %s43 = sphi 0, %s41
      %s44 = sphi 0, %s42
      %s45 = sphi 0, %s43
      %s55 = sphi 0, %s57
      %s58 = sphi 0, %s55
      %s59 = sphi 0, %s58
      %s75 = sphi 0, %s59
      %s81 = sphi 0, %s83
      %s84 = sphi 0, %s81
      %s85 = sphi 0, %s84
      %s101 = sphi 0, %s85
      %s107 = sphi 0, %s109
      %s110 = sphi 0, %s107
      %s111 = sphi 0, %s110
      %s127 = sphi 0, %s111
      %s131 = sphi 0, %s131
      %s133 = sphi 0, %s131
      %s134 = sphi 0, %s133
      %s148 = sphi 0, %s134
      %s152 = sphi 0, %s152
      %s154 = sphi 0, %s152
      %s155 = sphi 0, %s154
      %s169 = sphi 0, %s155
      %s173 = sphi 0, %s173
      %s175 = sphi 0, %s173
      %s176 = sphi 0, %s175
      %s190 = sphi 0, %s176
      %s196 = sphi 0, %s198
      %s199 = sphi 0, %s196
      %s200 = sphi 0, %s199
      %s216 = sphi 0, %s200
      %s222 = sphi 0, %s224
      %s225 = sphi 0, %s222
      %s226 = sphi 0, %s225
      %s242 = sphi 0, %s226
      %s248 = sphi 0, %s250
      %s251 = sphi 0, %s248
      %s252 = sphi 0, %s251
      %s268 = sphi 0, %s252
      %s274 = sphi 0, %s276
      %s277 = sphi 0, %s274
      %s278 = sphi 0, %s277
      %s294 = sphi 0, %s278
      %s300 = sphi 0, %s302
      %s303 = sphi 0, %s300
      %s304 = sphi 0, %s303
      %s320 = sphi 0, %s304
      %s326 = sphi 0, %s328
      %s329 = sphi 0, %s326
      %s330 = sphi 0, %s329
      %s346 = sphi 0, %s330
      %s352 = sphi 0, %s354
      %s355 = sphi 0, %s352
      %s356 = sphi 0, %s355
      %s372 = sphi 0, %s356
      %s378 = sphi 0, %s380
      %s381 = sphi 0, %s378
      %s382 = sphi 0, %s381
      %s398 = sphi 0, %s382
      %s404 = sphi 0, %s406
      %s407 = sphi 0, %s404
      %s408 = sphi 0, %s407
      %s424 = sphi 0, %s408
      %s430 = sphi 0, %s432
      %s433 = sphi 0, %s430
      %s434 = sphi 0, %s433
      %s450 = sphi 0, %s434
      %s456 = sphi 0, %s458
      %s459 = sphi 0, %s456
      %s460 = sphi 0, %s459
      %s476 = sphi 0, %s460
    $region4: #{tpu_custom_call.1} parent=1 // loop_header_branch
      %36 = sbr.rel (%p34) target = $region8
    $region5: #{tpu_custom_call.1} parent=1 // loop_body
      %s38 = ssub.s32 %s33, 1
      %s39 = ssub.s32 %s33, 2
      %s46 = sadd.s32 1, %s41
      %p47 = scmp.ge.s32.totalorder %s46, 2
      %s48 = scalar_select %p47, 0, %s46
      %s49 = sadd.s32 1, %s40
      %s50 = scalar_select %p47, %s49, %s40
      %p51 = scmp.ge.s32.totalorder %s50, 2
      %s52 = scalar_select %p51, 0, %s50
      %s53 = ssub.s32 %s40, %s52
      %p54 = scmp.eq.s32.totalorder %s53, 0
      %s56 = sadd.s32 %s55, 1
      %s57 = scalar_select %p54, %s55, %s56
      %p60 = pneg %p54
      %p61 = scmp.eq.s32.totalorder %s33, 3
      %p62 = por %p60, %p61
      %p63 = scmp.ne.s32.totalorder %s55, %s58
      %p64 = scmp.eq.s32.totalorder %s33, 0
      %p65 = por %p63, %p64
      %p66 = scmp.ne.s32.totalorder %s55, %s58
      %p67 = scmp.eq.s32.totalorder %s38, 3
      %p68 = por %p66, %p67
      %p69 = scmp.ne.s32.totalorder %s58, %s59
      %p70 = scmp.eq.s32.totalorder %s38, 0
      %p71 = por %p69, %p70
      %p72 = scmp.ne.s32.totalorder %s58, %s59
      %p73 = scmp.eq.s32.totalorder %s39, 3
      %p74 = por %p72, %p73
      %p76 = scmp.ne.s32.totalorder %s59, %s75
      %p77 = scmp.eq.s32.totalorder %s39, 0
      %p78 = por %p76, %p77
      %s79 = ssub.s32 %s40, %s52
      %p80 = scmp.eq.s32.totalorder %s79, 0
      %s82 = sadd.s32 %s81, 1
      %s83 = scalar_select %p80, %s81, %s82
      %p86 = pneg %p80
      %p87 = scmp.eq.s32.totalorder %s33, 3
      %p88 = por %p86, %p87
      %p89 = scmp.ne.s32.totalorder %s81, %s84
      %p90 = scmp.eq.s32.totalorder %s33, 0
      %p91 = por %p89, %p90
      %p92 = scmp.ne.s32.totalorder %s81, %s84
      %p93 = scmp.eq.s32.totalorder %s38, 3
      %p94 = por %p92, %p93
      %p95 = scmp.ne.s32.totalorder %s84, %s85
      %p96 = scmp.eq.s32.totalorder %s38, 0
      %p97 = por %p95, %p96
      %p98 = scmp.ne.s32.totalorder %s84, %s85
      %p99 = scmp.eq.s32.totalorder %s39, 3
      %p100 = por %p98, %p99
      %p102 = scmp.ne.s32.totalorder %s85, %s101
      %p103 = scmp.eq.s32.totalorder %s39, 0
      %p104 = por %p102, %p103
      %s105 = ssub.s32 %s40, %s52
      %p106 = scmp.eq.s32.totalorder %s105, 0
      %s108 = sadd.s32 %s107, 1
      %s109 = scalar_select %p106, %s107, %s108
      %p112 = pneg %p106
      %p113 = scmp.eq.s32.totalorder %s33, 3
      %p114 = por %p112, %p113
      %p115 = scmp.ne.s32.totalorder %s107, %s110
      %p116 = scmp.eq.s32.totalorder %s33, 0
      %p117 = por %p115, %p116
      %p118 = scmp.ne.s32.totalorder %s107, %s110
      %p119 = scmp.eq.s32.totalorder %s38, 3
      %p120 = por %p118, %p119
      %p121 = scmp.ne.s32.totalorder %s110, %s111
      %p122 = scmp.eq.s32.totalorder %s38, 0
      %p123 = por %p121, %p122
      %p124 = scmp.ne.s32.totalorder %s110, %s111
      %p125 = scmp.eq.s32.totalorder %s39, 3
      %p126 = por %p124, %p125
      %p128 = scmp.ne.s32.totalorder %s111, %s127
      %p129 = scmp.eq.s32.totalorder %s39, 0
      %p130 = por %p128, %p129
      %s132 = sadd.s32 %s131, 1
      %p135 = scmp.eq.s32.totalorder %s33, 3
      %p136 = scmp.ne.s32.totalorder %s131, %s133
      %p137 = scmp.eq.s32.totalorder %s33, 0
      %p138 = por %p136, %p137
      %p139 = scmp.ne.s32.totalorder %s131, %s133
      %p140 = scmp.eq.s32.totalorder %s38, 3
      %p141 = por %p139, %p140
      %p142 = scmp.ne.s32.totalorder %s133, %s134
      %p143 = scmp.eq.s32.totalorder %s38, 0
      %p144 = por %p142, %p143
      %p145 = scmp.ne.s32.totalorder %s133, %s134
      %p146 = scmp.eq.s32.totalorder %s39, 3
      %p147 = por %p145, %p146
      %p149 = scmp.ne.s32.totalorder %s134, %s148
      %p150 = scmp.eq.s32.totalorder %s39, 0
      %p151 = por %p149, %p150
      %s153 = sadd.s32 %s152, 1
      %p156 = scmp.eq.s32.totalorder %s33, 3
      %p157 = scmp.ne.s32.totalorder %s152, %s154
      %p158 = scmp.eq.s32.totalorder %s33, 0
      %p159 = por %p157, %p158
      %p160 = scmp.ne.s32.totalorder %s152, %s154
      %p161 = scmp.eq.s32.totalorder %s38, 3
      %p162 = por %p160, %p161
      %p163 = scmp.ne.s32.totalorder %s154, %s155
      %p164 = scmp.eq.s32.totalorder %s38, 0
      %p165 = por %p163, %p164
      %p166 = scmp.ne.s32.totalorder %s154, %s155
      %p167 = scmp.eq.s32.totalorder %s39, 3
      %p168 = por %p166, %p167
      %p170 = scmp.ne.s32.totalorder %s155, %s169
      %p171 = scmp.eq.s32.totalorder %s39, 0
      %p172 = por %p170, %p171
      %s174 = sadd.s32 %s173, 1
      %p177 = scmp.eq.s32.totalorder %s33, 3
      %p178 = scmp.ne.s32.totalorder %s173, %s175
      %p179 = scmp.eq.s32.totalorder %s33, 0
      %p180 = por %p178, %p179
      %p181 = scmp.ne.s32.totalorder %s173, %s175
      %p182 = scmp.eq.s32.totalorder %s38, 3
      %p183 = por %p181, %p182
      %p184 = scmp.ne.s32.totalorder %s175, %s176
      %p185 = scmp.eq.s32.totalorder %s38, 0
      %p186 = por %p184, %p185
      %p187 = scmp.ne.s32.totalorder %s175, %s176
      %p188 = scmp.eq.s32.totalorder %s39, 3
      %p189 = por %p187, %p188
      %p191 = scmp.ne.s32.totalorder %s176, %s190
      %p192 = scmp.eq.s32.totalorder %s39, 0
      %p193 = por %p191, %p192
      %s194 = ssub.s32 %s41, %s48
      %p195 = scmp.eq.s32.totalorder %s194, 0
      %s197 = sadd.s32 %s196, 1
      %s198 = scalar_select %p195, %s196, %s197
      %p201 = pneg %p195
      %p202 = scmp.eq.s32.totalorder %s33, 3
      %p203 = por %p201, %p202
      %p204 = scmp.ne.s32.totalorder %s196, %s199
      %p205 = scmp.eq.s32.totalorder %s33, 0
      %p206 = por %p204, %p205
      %p207 = scmp.ne.s32.totalorder %s196, %s199
      %p208 = scmp.eq.s32.totalorder %s38, 3
      %p209 = por %p207, %p208
      %p210 = scmp.ne.s32.totalorder %s199, %s200
      %p211 = scmp.eq.s32.totalorder %s38, 0
      %p212 = por %p210, %p211
      %p213 = scmp.ne.s32.totalorder %s199, %s200
      %p214 = scmp.eq.s32.totalorder %s39, 3
      %p215 = por %p213, %p214
      %p217 = scmp.ne.s32.totalorder %s200, %s216
      %p218 = scmp.eq.s32.totalorder %s39, 0
      %p219 = por %p217, %p218
      %s220 = ssub.s32 %s41, %s48
      %p221 = scmp.eq.s32.totalorder %s220, 0
      %s223 = sadd.s32 %s222, 1
      %s224 = scalar_select %p221, %s222, %s223
      %p227 = pneg %p221
      %p228 = scmp.eq.s32.totalorder %s33, 3
      %p229 = por %p227, %p228
      %p230 = scmp.ne.s32.totalorder %s222, %s225
      %p231 = scmp.eq.s32.totalorder %s33, 0
      %p232 = por %p230, %p231
      %p233 = scmp.ne.s32.totalorder %s222, %s225
      %p234 = scmp.eq.s32.totalorder %s38, 3
      %p235 = por %p233, %p234
      %p236 = scmp.ne.s32.totalorder %s225, %s226
      %p237 = scmp.eq.s32.totalorder %s38, 0
      %p238 = por %p236, %p237
      %p239 = scmp.ne.s32.totalorder %s225, %s226
      %p240 = scmp.eq.s32.totalorder %s39, 3
      %p241 = por %p239, %p240
      %p243 = scmp.ne.s32.totalorder %s226, %s242
      %p244 = scmp.eq.s32.totalorder %s39, 0
      %p245 = por %p243, %p244
      %s246 = ssub.s32 %s41, %s48
      %p247 = scmp.eq.s32.totalorder %s246, 0
      %s249 = sadd.s32 %s248, 1
      %s250 = scalar_select %p247, %s248, %s249
      %p253 = pneg %p247
      %p254 = scmp.eq.s32.totalorder %s33, 3
      %p255 = por %p253, %p254
      %p256 = scmp.ne.s32.totalorder %s248, %s251
      %p257 = scmp.eq.s32.totalorder %s33, 0
      %p258 = por %p256, %p257
      %p259 = scmp.ne.s32.totalorder %s248, %s251
      %p260 = scmp.eq.s32.totalorder %s38, 3
      %p261 = por %p259, %p260
      %p262 = scmp.ne.s32.totalorder %s251, %s252
      %p263 = scmp.eq.s32.totalorder %s38, 0
      %p264 = por %p262, %p263
      %p265 = scmp.ne.s32.totalorder %s251, %s252
      %p266 = scmp.eq.s32.totalorder %s39, 3
      %p267 = por %p265, %p266
      %p269 = scmp.ne.s32.totalorder %s252, %s268
      %p270 = scmp.eq.s32.totalorder %s39, 0
      %p271 = por %p269, %p270
      %s272 = ssub.s32 %s41, %s48
      %p273 = scmp.eq.s32.totalorder %s272, 0
      %s275 = sadd.s32 %s274, 1
      %s276 = scalar_select %p273, %s274, %s275
      %p279 = pneg %p273
      %p280 = scmp.eq.s32.totalorder %s33, 3
      %p281 = por %p279, %p280
      %p282 = scmp.ne.s32.totalorder %s274, %s277
      %p283 = scmp.eq.s32.totalorder %s33, 0
      %p284 = por %p282, %p283
      %p285 = scmp.ne.s32.totalorder %s274, %s277
      %p286 = scmp.eq.s32.totalorder %s38, 3
      %p287 = por %p285, %p286
      %p288 = scmp.ne.s32.totalorder %s277, %s278
      %p289 = scmp.eq.s32.totalorder %s38, 0
      %p290 = por %p288, %p289
      %p291 = scmp.ne.s32.totalorder %s277, %s278
      %p292 = scmp.eq.s32.totalorder %s39, 3
      %p293 = por %p291, %p292
      %p295 = scmp.ne.s32.totalorder %s278, %s294
      %p296 = scmp.eq.s32.totalorder %s39, 0
      %p297 = por %p295, %p296
      %s298 = ssub.s32 %s41, %s48
      %p299 = scmp.eq.s32.totalorder %s298, 0
      %s301 = sadd.s32 %s300, 1
      %s302 = scalar_select %p299, %s300, %s301
      %p305 = pneg %p299
      %p306 = scmp.eq.s32.totalorder %s33, 3
      %p307 = por %p305, %p306
      %p308 = scmp.ne.s32.totalorder %s300, %s303
      %p309 = scmp.eq.s32.totalorder %s33, 0
      %p310 = por %p308, %p309
      %p311 = scmp.ne.s32.totalorder %s300, %s303
      %p312 = scmp.eq.s32.totalorder %s38, 3
      %p313 = por %p311, %p312
      %p314 = scmp.ne.s32.totalorder %s303, %s304
      %p315 = scmp.eq.s32.totalorder %s38, 0
      %p316 = por %p314, %p315
      %p317 = scmp.ne.s32.totalorder %s303, %s304
      %p318 = scmp.eq.s32.totalorder %s39, 3
      %p319 = por %p317, %p318
      %p321 = scmp.ne.s32.totalorder %s304, %s320
      %p322 = scmp.eq.s32.totalorder %s39, 0
      %p323 = por %p321, %p322
      %s324 = ssub.s32 %s41, %s48
      %p325 = scmp.eq.s32.totalorder %s324, 0
      %s327 = sadd.s32 %s326, 1
      %s328 = scalar_select %p325, %s326, %s327
      %p331 = pneg %p325
      %p332 = scmp.eq.s32.totalorder %s33, 3
      %p333 = por %p331, %p332
      %p334 = scmp.ne.s32.totalorder %s326, %s329
      %p335 = scmp.eq.s32.totalorder %s33, 0
      %p336 = por %p334, %p335
      %p337 = scmp.ne.s32.totalorder %s326, %s329
      %p338 = scmp.eq.s32.totalorder %s38, 3
      %p339 = por %p337, %p338
      %p340 = scmp.ne.s32.totalorder %s329, %s330
      %p341 = scmp.eq.s32.totalorder %s38, 0
      %p342 = por %p340, %p341
      %p343 = scmp.ne.s32.totalorder %s329, %s330
      %p344 = scmp.eq.s32.totalorder %s39, 3
      %p345 = por %p343, %p344
      %p347 = scmp.ne.s32.totalorder %s330, %s346
      %p348 = scmp.eq.s32.totalorder %s39, 0
      %p349 = por %p347, %p348
      %s350 = ssub.s32 %s41, %s48
      %p351 = scmp.eq.s32.totalorder %s350, 0
      %s353 = sadd.s32 %s352, 1
      %s354 = scalar_select %p351, %s352, %s353
      %p357 = pneg %p351
      %p358 = scmp.eq.s32.totalorder %s33, 3
      %p359 = por %p357, %p358
      %p360 = scmp.ne.s32.totalorder %s352, %s355
      %p361 = scmp.eq.s32.totalorder %s33, 0
      %p362 = por %p360, %p361
      %p363 = scmp.ne.s32.totalorder %s352, %s355
      %p364 = scmp.eq.s32.totalorder %s38, 3
      %p365 = por %p363, %p364
      %p366 = scmp.ne.s32.totalorder %s355, %s356
      %p367 = scmp.eq.s32.totalorder %s38, 0
      %p368 = por %p366, %p367
      %p369 = scmp.ne.s32.totalorder %s355, %s356
      %p370 = scmp.eq.s32.totalorder %s39, 3
      %p371 = por %p369, %p370
      %p373 = scmp.ne.s32.totalorder %s356, %s372
      %p374 = scmp.eq.s32.totalorder %s39, 0
      %p375 = por %p373, %p374
      %s376 = ssub.s32 %s41, %s48
      %p377 = scmp.eq.s32.totalorder %s376, 0
      %s379 = sadd.s32 %s378, 1
      %s380 = scalar_select %p377, %s378, %s379
      %p383 = pneg %p377
      %p384 = scmp.eq.s32.totalorder %s33, 3
      %p385 = por %p383, %p384
      %p386 = scmp.ne.s32.totalorder %s378, %s381
      %p387 = scmp.eq.s32.totalorder %s33, 0
      %p388 = por %p386, %p387
      %p389 = scmp.ne.s32.totalorder %s378, %s381
      %p390 = scmp.eq.s32.totalorder %s38, 3
      %p391 = por %p389, %p390
      %p392 = scmp.ne.s32.totalorder %s381, %s382
      %p393 = scmp.eq.s32.totalorder %s38, 0
      %p394 = por %p392, %p393
      %p395 = scmp.ne.s32.totalorder %s381, %s382
      %p396 = scmp.eq.s32.totalorder %s39, 3
      %p397 = por %p395, %p396
      %p399 = scmp.ne.s32.totalorder %s382, %s398
      %p400 = scmp.eq.s32.totalorder %s39, 0
      %p401 = por %p399, %p400
      %s402 = ssub.s32 %s41, %s48
      %p403 = scmp.eq.s32.totalorder %s402, 0
      %s405 = sadd.s32 %s404, 1
      %s406 = scalar_select %p403, %s404, %s405
      %p409 = pneg %p403
      %p410 = scmp.eq.s32.totalorder %s33, 3
      %p411 = por %p409, %p410
      %p412 = scmp.ne.s32.totalorder %s404, %s407
      %p413 = scmp.eq.s32.totalorder %s33, 0
      %p414 = por %p412, %p413
      %p415 = scmp.ne.s32.totalorder %s404, %s407
      %p416 = scmp.eq.s32.totalorder %s38, 3
      %p417 = por %p415, %p416
      %p418 = scmp.ne.s32.totalorder %s407, %s408
      %p419 = scmp.eq.s32.totalorder %s38, 0
      %p420 = por %p418, %p419
      %p421 = scmp.ne.s32.totalorder %s407, %s408
      %p422 = scmp.eq.s32.totalorder %s39, 3
      %p423 = por %p421, %p422
      %p425 = scmp.ne.s32.totalorder %s408, %s424
      %p426 = scmp.eq.s32.totalorder %s39, 0
      %p427 = por %p425, %p426
      %s428 = ssub.s32 %s41, %s48
      %p429 = scmp.eq.s32.totalorder %s428, 0
      %s431 = sadd.s32 %s430, 1
      %s432 = scalar_select %p429, %s430, %s431
      %p435 = pneg %p429
      %p436 = scmp.eq.s32.totalorder %s33, 3
      %p437 = por %p435, %p436
      %p438 = scmp.ne.s32.totalorder %s430, %s433
      %p439 = scmp.eq.s32.totalorder %s33, 0
      %p440 = por %p438, %p439
      %p441 = scmp.ne.s32.totalorder %s430, %s433
      %p442 = scmp.eq.s32.totalorder %s38, 3
      %p443 = por %p441, %p442
      %p444 = scmp.ne.s32.totalorder %s433, %s434
      %p445 = scmp.eq.s32.totalorder %s38, 0
      %p446 = por %p444, %p445
      %p447 = scmp.ne.s32.totalorder %s433, %s434
      %p448 = scmp.eq.s32.totalorder %s39, 3
      %p449 = por %p447, %p448
      %p451 = scmp.ne.s32.totalorder %s434, %s450
      %p452 = scmp.eq.s32.totalorder %s39, 0
      %p453 = por %p451, %p452
      %s454 = ssub.s32 %s40, %s52
      %p455 = scmp.eq.s32.totalorder %s454, 0
      %s457 = sadd.s32 %s456, 1
      %s458 = scalar_select %p455, %s456, %s457
      %p461 = pneg %p455
      %p462 = scmp.eq.s32.totalorder %s33, 3
      %p463 = por %p461, %p462
      %p464 = scmp.ne.s32.totalorder %s456, %s459
      %p465 = scmp.eq.s32.totalorder %s33, 0
      %p466 = por %p464, %p465
      %p467 = scmp.ne.s32.totalorder %s456, %s459
      %p468 = scmp.eq.s32.totalorder %s38, 3
      %p469 = por %p467, %p468
      %p470 = scmp.ne.s32.totalorder %s459, %s460
      %p471 = scmp.eq.s32.totalorder %s38, 0
      %p472 = por %p470, %p471
      %p473 = scmp.ne.s32.totalorder %s459, %s460
      %p474 = scmp.eq.s32.totalorder %s39, 3
      %p475 = por %p473, %p474
      %p477 = scmp.ne.s32.totalorder %s460, %s476
      %p478 = scmp.eq.s32.totalorder %s39, 0
      %p479 = por %p477, %p478
      %p480 = scmp.le.s32.totalorder 1, %s33
      %p481 = scmp.lt.s32.totalorder %s33, 5
      %p482 = pnand %p480, %p481
      %p483 = pneg %p482
      // Predicated region
      $region9: #{tpu_custom_call.1} parent=5 // pred_check
        _
      $region10: #{tpu_custom_call.1} parent=5 // pred_check_branch
        %485 = sbr.rel (%p482) target = $region12
      $region11: #{tpu_custom_call.1} parent=5 // pred_region
        %s486 = ssub.s32 %s33, 1
        // Predicated region
        $region13: #{tpu_custom_call.1} parent=11 // pred_check
          %p487 = pneg %p144
        $region14: #{tpu_custom_call.1} parent=11 // pred_check_branch
          %489 = sbr.rel (%p487) target = $region16
        $region15: #{tpu_custom_call.1} parent=11 // pred_region
          _
        $region16: #{tpu_custom_call.1} parent=11 // pred_fallthru
          _
        // Predicated region
        $region17: #{tpu_custom_call.1} parent=11 // pred_check
          %p490 = pneg %p165
        $region18: #{tpu_custom_call.1} parent=11 // pred_check_branch
          %492 = sbr.rel (%p490) target = $region20
        $region19: #{tpu_custom_call.1} parent=11 // pred_region
          _
        $region20: #{tpu_custom_call.1} parent=11 // pred_fallthru
          _
        // Predicated region
        $region21: #{tpu_custom_call.1} parent=11 // pred_check
          %p493 = pneg %p186
        $region22: #{tpu_custom_call.1} parent=11 // pred_check_branch
          %495 = sbr.rel (%p493) target = $region24
        $region23: #{tpu_custom_call.1} parent=11 // pred_region
          _
        $region24: #{tpu_custom_call.1} parent=11 // pred_fallthru
          _
      $region12: #{tpu_custom_call.1} parent=5 // pred_fallthru
        _
      %p496 = scmp.lt.s32.totalorder %s33, 4
      // Predicated region
      $region25: #{tpu_custom_call.1} parent=5 // pred_check
        %p497 = pneg %p496
      $region26: #{tpu_custom_call.1} parent=5 // pred_check_branch
        %499 = sbr.rel (%p497) target = $region28
      $region27: #{tpu_custom_call.1} parent=5 // pred_region
        // Predicated region
        $region29: #{tpu_custom_call.1} parent=27 // pred_check
          %p500 = pneg %p65
        $region30: #{tpu_custom_call.1} parent=27 // pred_check_branch
          %502 = sbr.rel (%p500) target = $region32
        $region31: #{tpu_custom_call.1} parent=27 // pred_region
          %p503 = scmp.lt.s32.totalorder %s40, 1
          %s504 = scalar_select %p503, %s40, 1
          %s505 = smul.addr %s504, 4
          %s506 = smul.addr %s505, 8
          %s507 = scalar_lea.vmem %s2, %s506
        $region32: #{tpu_custom_call.1} parent=27 // pred_fallthru
          _
        // Predicated region
        $region33: #{tpu_custom_call.1} parent=27 // pred_check
          %p508 = pneg %p91
        $region34: #{tpu_custom_call.1} parent=27 // pred_check_branch
          %510 = sbr.rel (%p508) target = $region36
        $region35: #{tpu_custom_call.1} parent=27 // pred_region
          %p511 = scmp.lt.s32.totalorder %s40, 1
          %s512 = scalar_select %p511, %s40, 1
          %s513 = scalar_lea.vmem %s3, %s512
        $region36: #{tpu_custom_call.1} parent=27 // pred_fallthru
          _
        // Predicated region
        $region37: #{tpu_custom_call.1} parent=27 // pred_check
          %p514 = pneg %p117
        $region38: #{tpu_custom_call.1} parent=27 // pred_check_branch
          %516 = sbr.rel (%p514) target = $region40
        $region39: #{tpu_custom_call.1} parent=27 // pred_region
          %p517 = scmp.lt.s32.totalorder %s40, 1
          %s518 = scalar_select %p517, %s40, 1
          %s519 = smul.addr %s518, 4
          %s520 = smul.addr %s519, 8
          %s521 = scalar_lea.vmem %s4, %s520
        $region40: #{tpu_custom_call.1} parent=27 // pred_fallthru
          _
        // Predicated region
        $region41: #{tpu_custom_call.1} parent=27 // pred_check
          %p522 = pneg %p206
        $region42: #{tpu_custom_call.1} parent=27 // pred_check_branch
          %524 = sbr.rel (%p522) target = $region44
        $region43: #{tpu_custom_call.1} parent=27 // pred_region
          %p525 = scmp.lt.s32.totalorder %s41, 1
          %s526 = scalar_select %p525, %s41, 1
          %s527 = smul.addr %s526, 4
          %s528 = smul.addr %s527, 8
          %s529 = scalar_lea.vmem %s8, %s528
        $region44: #{tpu_custom_call.1} parent=27 // pred_fallthru
          _
        // Predicated region
        $region45: #{tpu_custom_call.1} parent=27 // pred_check
          %p530 = pneg %p232
        $region46: #{tpu_custom_call.1} parent=27 // pred_check_branch
          %532 = sbr.rel (%p530) target = $region48
        $region47: #{tpu_custom_call.1} parent=27 // pred_region
          %p533 = scmp.lt.s32.totalorder %s41, 1
          %s534 = scalar_select %p533, %s41, 1
          %s535 = smul.addr %s534, 2
          %s536 = smul.addr %s535, 8
          %s537 = scalar_lea.vmem %s9, %s536
        $region48: #{tpu_custom_call.1} parent=27 // pred_fallthru
          _
        // Predicated region
        $region49: #{tpu_custom_call.1} parent=27 // pred_check
          %p538 = pneg %p258
        $region50: #{tpu_custom_call.1} parent=27 // pred_check_branch
          %540 = sbr.rel (%p538) target = $region52
        $region51: #{tpu_custom_call.1} parent=27 // pred_region
          %p541 = scmp.lt.s32.totalorder %s41, 1
          %s542 = scalar_select %p541, %s41, 1
          %s543 = smul.addr %s542, 16
          %s544 = smul.addr %s543, 4
          %s545 = scalar_lea.vmem %s10, %s544
        $region52: #{tpu_custom_call.1} parent=27 // pred_fallthru
          _
        // Predicated region
        $region53: #{tpu_custom_call.1} parent=27 // pred_check
          %p546 = pneg %p284
        $region54: #{tpu_custom_call.1} parent=27 // pred_check_branch
          %548 = sbr.rel (%p546) target = $region56
        $region55: #{tpu_custom_call.1} parent=27 // pred_region
          %p549 = scmp.lt.s32.totalorder %s41, 1
          %s550 = scalar_select %p549, %s41, 1
          %s551 = smul.addr %s550, 32
          %s552 = smul.addr %s551, 4
          %s553 = scalar_lea.vmem %s11, %s552
        $region56: #{tpu_custom_call.1} parent=27 // pred_fallthru
          _
        // Predicated region
        $region57: #{tpu_custom_call.1} parent=27 // pred_check
          %p554 = pneg %p310
        $region58: #{tpu_custom_call.1} parent=27 // pred_check_branch
          %556 = sbr.rel (%p554) target = $region60
        $region59: #{tpu_custom_call.1} parent=27 // pred_region
          %p557 = scmp.lt.s32.totalorder %s41, 1
          %s558 = scalar_select %p557, %s41, 1
          %s559 = smul.addr %s558, 16
          %s560 = smul.addr %s559, 4
          %s561 = scalar_lea.vmem %s12, %s560
        $region60: #{tpu_custom_call.1} parent=27 // pred_fallthru
          _
        // Predicated region
        $region61: #{tpu_custom_call.1} parent=27 // pred_check
          %p562 = pneg %p336
        $region62: #{tpu_custom_call.1} parent=27 // pred_check_branch
          %564 = sbr.rel (%p562) target = $region64
        $region63: #{tpu_custom_call.1} parent=27 // pred_region
          %p565 = scmp.lt.s32.totalorder %s41, 1
          %s566 = scalar_select %p565, %s41, 1
          %s567 = smul.addr %s566, 8
          %s568 = smul.addr %s567, 4
          %s569 = scalar_lea.vmem %s13, %s568
        $region64: #{tpu_custom_call.1} parent=27 // pred_fallthru
          _
        // Predicated region
        $region65: #{tpu_custom_call.1} parent=27 // pred_check
          %p570 = pneg %p362
        $region66: #{tpu_custom_call.1} parent=27 // pred_check_branch
          %572 = sbr.rel (%p570) target = $region68
        $region67: #{tpu_custom_call.1} parent=27 // pred_region
          %p573 = scmp.lt.s32.totalorder %s41, 1
          %s574 = scalar_select %p573, %s41, 1
          %s575 = smul.addr %s574, 8
          %s576 = smul.addr %s575, 4
          %s577 = scalar_lea.vmem %s14, %s576
        $region68: #{tpu_custom_call.1} parent=27 // pred_fallthru
          _
        // Predicated region
        $region69: #{tpu_custom_call.1} parent=27 // pred_check
          %p578 = pneg %p388
        $region70: #{tpu_custom_call.1} parent=27 // pred_check_branch
          %580 = sbr.rel (%p578) target = $region72
        $region71: #{tpu_custom_call.1} parent=27 // pred_region
          %p581 = scmp.lt.s32.totalorder %s41, 1
          %s582 = scalar_select %p581, %s41, 1
          %s583 = smul.addr %s582, 8
          %s584 = smul.addr %s583, 4
          %s585 = scalar_lea.vmem %s15, %s584
        $region72: #{tpu_custom_call.1} parent=27 // pred_fallthru
          _
        // Predicated region
        $region73: #{tpu_custom_call.1} parent=27 // pred_check
          %p586 = pneg %p414
        $region74: #{tpu_custom_call.1} parent=27 // pred_check_branch
          %588 = sbr.rel (%p586) target = $region76
        $region75: #{tpu_custom_call.1} parent=27 // pred_region
          %p589 = scmp.lt.s32.totalorder %s41, 1
          %s590 = scalar_select %p589, %s41, 1
          %s591 = smul.addr %s590, 16
          %s592 = smul.addr %s591, 4
          %s593 = scalar_lea.vmem %s16, %s592
        $region76: #{tpu_custom_call.1} parent=27 // pred_fallthru
          _
        // Predicated region
        $region77: #{tpu_custom_call.1} parent=27 // pred_check
          %p594 = pneg %p440
        $region78: #{tpu_custom_call.1} parent=27 // pred_check_branch
          %596 = sbr.rel (%p594) target = $region80
        $region79: #{tpu_custom_call.1} parent=27 // pred_region
          %p597 = scmp.lt.s32.totalorder %s41, 1
          %s598 = scalar_select %p597, %s41, 1
          %s599 = smul.addr %s598, 32
          %s600 = smul.addr %s599, 4
          %s601 = scalar_lea.vmem %s17, %s600
        $region80: #{tpu_custom_call.1} parent=27 // pred_fallthru
          _
      $region28: #{tpu_custom_call.1} parent=5 // pred_fallthru
        _
      %p602 = scmp.le.s32.totalorder 1, %s33
      %p603 = scmp.lt.s32.totalorder %s33, 5
      %p604 = pnand %p602, %p603
      %p605 = pneg %p604
      // Predicated region
      $region81: #{tpu_custom_call.1} parent=5 // pred_check
        _
      $region82: #{tpu_custom_call.1} parent=5 // pred_check_branch
        %607 = sbr.rel (%p604) target = $region84
      $region83: #{tpu_custom_call.1} parent=5 // pred_region
        %s608 = ssub.s32 %s33, 1
        %p609 = scmp.lt.s32.totalorder %s42, 1
        %s610 = scalar_select %p609, %s42, 1
        %s611 = smul.addr %s610, 4
        %s612 = smul.addr %s611, 8
        %s613 = scalar_lea.vmem %s2, %s612
        %p614 = pneg %p71
        %p615 = pneg %p68
        %p616 = scmp.lt.s32.totalorder %s42, 1
        %s617 = scalar_select %p616, %s42, 1
        %s618 = scalar_lea.vmem %s3, %s617
        %p619 = pneg %p97
        %p620 = pneg %p94
        %p621 = scmp.lt.s32.totalorder %s42, 1
        %s622 = scalar_select %p621, %s42, 1
        %s623 = smul.addr %s622, 4
        %s624 = smul.addr %s623, 8
        %s625 = scalar_lea.vmem %s4, %s624
        %p626 = pneg %p123
        %p627 = pneg %p120
        %p628 = pneg %p144
        %p629 = pneg %p141
        %p630 = pneg %p165
        %p631 = pneg %p162
        %p632 = pneg %p186
        %p633 = pneg %p183
        %p634 = scmp.lt.s32.totalorder %s43, 1
        %s635 = scalar_select %p634, %s43, 1
        %s636 = smul.addr %s635, 4
        %s637 = smul.addr %s636, 8
        %s638 = scalar_lea.vmem %s8, %s637
        %p639 = pneg %p212
        %p640 = pneg %p209
        %p641 = scmp.lt.s32.totalorder %s43, 1
        %s642 = scalar_select %p641, %s43, 1
        %s643 = smul.addr %s642, 2
        %s644 = smul.addr %s643, 8
        %s645 = scalar_lea.vmem %s9, %s644
        %p646 = pneg %p238
        %p647 = pneg %p235
        %p648 = scmp.lt.s32.totalorder %s43, 1
        %s649 = scalar_select %p648, %s43, 1
        %s650 = smul.addr %s649, 16
        %s651 = smul.addr %s650, 4
        %s652 = scalar_lea.vmem %s10, %s651
        %p653 = pneg %p264
        %p654 = pneg %p261
        %p655 = scmp.lt.s32.totalorder %s43, 1
        %s656 = scalar_select %p655, %s43, 1
        %s657 = smul.addr %s656, 32
        %s658 = smul.addr %s657, 4
        %s659 = scalar_lea.vmem %s11, %s658
        %p660 = pneg %p290
        %p661 = pneg %p287
        %p662 = scmp.lt.s32.totalorder %s43, 1
        %s663 = scalar_select %p662, %s43, 1
        %s664 = smul.addr %s663, 16
        %s665 = smul.addr %s664, 4
        %s666 = scalar_lea.vmem %s12, %s665
        %p667 = pneg %p316
        %p668 = pneg %p313
        %p669 = scmp.lt.s32.totalorder %s43, 1
        %s670 = scalar_select %p669, %s43, 1
        %s671 = smul.addr %s670, 8
        %s672 = smul.addr %s671, 4
        %s673 = scalar_lea.vmem %s13, %s672
        %p674 = pneg %p342
        %p675 = pneg %p339
        %p676 = scmp.lt.s32.totalorder %s43, 1
        %s677 = scalar_select %p676, %s43, 1
        %s678 = smul.addr %s677, 8
        %s679 = smul.addr %s678, 4
        %s680 = scalar_lea.vmem %s14, %s679
        %p681 = pneg %p368
        %p682 = pneg %p365
        %p683 = scmp.lt.s32.totalorder %s43, 1
        %s684 = scalar_select %p683, %s43, 1
        %s685 = smul.addr %s684, 8
        %s686 = smul.addr %s685, 4
        %s687 = scalar_lea.vmem %s15, %s686
        %p688 = pneg %p394
        %p689 = pneg %p391
        %p690 = scmp.lt.s32.totalorder %s43, 1
        %s691 = scalar_select %p690, %s43, 1
        %s692 = smul.addr %s691, 16
        %s693 = smul.addr %s692, 4
        %s694 = scalar_lea.vmem %s16, %s693
        %p695 = pneg %p420
        %p696 = pneg %p417
        %p697 = scmp.lt.s32.totalorder %s43, 1
        %s698 = scalar_select %p697, %s43, 1
        %s699 = smul.addr %s698, 32
        %s700 = smul.addr %s699, 4
        %s701 = scalar_lea.vmem %s17, %s700
        %p702 = pneg %p446
        %p703 = pneg %p443
        %p704 = pneg %p472
        %p705 = pneg %p469
        %s706 = sand.u32 %s459, 1
        %s707 = scalar_lea.sflag [#allocation7], %s706
        %s708 = sand.u32 %s459, 1
        %s709 = smul.addr %s708, 32
        %s710 = scalar_lea.vmem [#allocation6], %s709
        %p711 = scmp.lt.s32.totalorder %s42, 1
        %s712 = scalar_select %p711, %s42, 1
        %s713 = smul.addr %s712, 4
        %s714 = smul.addr %s713, 8
        %s715 = scalar_lea.vmem %s2, %s714
        %p716 = scmp.lt.s32.totalorder %s42, 1
        %s717 = scalar_select %p716, %s42, 1
        %s718 = scalar_lea.vmem %s3, %s717
        %p719 = scmp.lt.s32.totalorder %s42, 1
        %s720 = scalar_select %p719, %s42, 1
        %s721 = smul.addr %s720, 4
        %s722 = smul.addr %s721, 8
        %s723 = scalar_lea.vmem %s4, %s722
        %p724 = scmp.lt.s32.totalorder %s43, 1
        %s725 = scalar_select %p724, %s43, 1
        %s726 = smul.addr %s725, 4
        %s727 = smul.addr %s726, 8
        %s728 = scalar_lea.vmem %s8, %s727
        %p729 = scmp.lt.s32.totalorder %s43, 1
        %s730 = scalar_select %p729, %s43, 1
        %s731 = smul.addr %s730, 2
        %s732 = smul.addr %s731, 8
        %s733 = scalar_lea.vmem %s9, %s732
        %p734 = scmp.lt.s32.totalorder %s43, 1
        %s735 = scalar_select %p734, %s43, 1
        %s736 = smul.addr %s735, 16
        %s737 = smul.addr %s736, 4
        %s738 = scalar_lea.vmem %s10, %s737
        %p739 = scmp.lt.s32.totalorder %s43, 1
        %s740 = scalar_select %p739, %s43, 1
        %s741 = smul.addr %s740, 32
        %s742 = smul.addr %s741, 4
        %s743 = scalar_lea.vmem %s11, %s742
        %p744 = scmp.lt.s32.totalorder %s43, 1
        %s745 = scalar_select %p744, %s43, 1
        %s746 = smul.addr %s745, 16
        %s747 = smul.addr %s746, 4
        %s748 = scalar_lea.vmem %s12, %s747
        %p749 = scmp.lt.s32.totalorder %s43, 1
        %s750 = scalar_select %p749, %s43, 1
        %s751 = smul.addr %s750, 8
        %s752 = smul.addr %s751, 4
        %s753 = scalar_lea.vmem %s13, %s752
        %p754 = scmp.lt.s32.totalorder %s43, 1
        %s755 = scalar_select %p754, %s43, 1
        %s756 = smul.addr %s755, 8
        %s757 = smul.addr %s756, 4
        %s758 = scalar_lea.vmem %s14, %s757
        %p759 = scmp.lt.s32.totalorder %s43, 1
        %s760 = scalar_select %p759, %s43, 1
        %s761 = smul.addr %s760, 8
        %s762 = smul.addr %s761, 4
        %s763 = scalar_lea.vmem %s15, %s762
        %p764 = scmp.lt.s32.totalorder %s43, 1
        %s765 = scalar_select %p764, %s43, 1
        %s766 = smul.addr %s765, 16
        %s767 = smul.addr %s766, 4
        %s768 = scalar_lea.vmem %s16, %s767
        %p769 = scmp.lt.s32.totalorder %s43, 1
        %s770 = scalar_select %p769, %s43, 1
        %s771 = smul.addr %s770, 32
        %s772 = smul.addr %s771, 4
        %s773 = scalar_lea.vmem %s17, %s772
        %p775 = scmp.eq.s32.totalorder %s43, 0
        // Predicated region
        $region85: #{tpu_custom_call.1} parent=83 // pred_check
          %p776 = pneg %p775
        $region86: #{tpu_custom_call.1} parent=83 // pred_check_branch
          %778 = sbr.rel (%p776) target = $region88
        $region87: #{tpu_custom_call.1} parent=83 // pred_region
          %v779 = vld [vmem:[%s715] sm:$0xff]
          %v780 = vld [vmem:[%s715 + $0x8] sm:$0xff]
          %v781 = vld [vmem:[%s715 + $0x10] sm:$0xff]
          %v782 = vld [vmem:[%s715 + $0x18] sm:$0xff]
          %vm783 = vcmask 523264
          %784 = vst.msk [vmem:[%s710] sm:$0xff] %vm783, %v779
          %785 = vst.msk [vmem:[%s710 + $0x8] sm:$0xff] %vm783, %v780
          %786 = vst.msk [vmem:[%s710 + $0x10] sm:$0xff] %vm783, %v781
          %787 = vst.msk [vmem:[%s710 + $0x18] sm:$0xff] %vm783, %v782
          %v788 = vld [vmem:[%s5] sm:$0xff]
          %v789 = vld [vmem:[%s5 + $0x8] sm:$0xff]
          %v790 = vld [vmem:[%s5 + $0x10] sm:$0xff]
          %v791 = vld [vmem:[%s5 + $0x18] sm:$0xff]
          %v792 = vld [vmem:[%s6] sm:$0x1]
          %v793 = vld [vmem:[%s7] sm:$0x1]
          %794 = vset.pattern.permute.xlu0 0
          %795 = vperm.xlu0 %794, %v788
          %v796 = vpop.permute.xlu0 %795
          %797 = vset.pattern.permute.xlu0 0
          %798 = vperm.xlu0 %797, %v789
          %v799 = vpop.permute.xlu0 %798
          %800 = vset.pattern.permute.xlu0 0
          %801 = vperm.xlu0 %800, %v790
          %v802 = vpop.permute.xlu0 %801
          %803 = vset.pattern.permute.xlu0 0
          %804 = vperm.xlu0 %803, %v791
          %v805 = vpop.permute.xlu0 %804
          %v806 = vlaneseq
          %v807 = vshrl.u32 %v806, 7
          %v808 = vsub.s32 0, %v807
          %v809 = vrot.slane %v792, %v808
          %vm810 = vcmp.eq.s32.totalorder %v796, %v809
          %vm811 = vcmp.eq.s32.totalorder %v799, %v809
          %vm812 = vcmp.eq.s32.totalorder %v802, %v809
          %vm813 = vcmp.eq.s32.totalorder %v805, %v809
          %vm814 = vcmp.lt.s32.totalorder %v809, %v796
          %vm815 = vcmp.lt.s32.totalorder %v809, %v799
          %vm816 = vcmp.lt.s32.totalorder %v809, %v802
          %vm817 = vcmp.lt.s32.totalorder %v809, %v805
          %v818 = vadd.s32 %v792, 1
          %v819 = vlaneseq
          %v820 = vshrl.u32 %v819, 7
          %v821 = vsub.s32 0, %v820
          %v822 = vrot.slane %v818, %v821
          %vm823 = vcmp.ge.s32.totalorder %v822, %v796
          %vm824 = vcmp.ge.s32.totalorder %v822, %v799
          %vm825 = vcmp.ge.s32.totalorder %v822, %v802
          %vm826 = vcmp.ge.s32.totalorder %v822, %v805
          %vm827 = vmand %vm814, %vm823
          %vm828 = vmand %vm815, %vm824
          %vm829 = vmand %vm816, %vm825
          %vm830 = vmand %vm817, %vm826
          %vm831 = vcmp.gt.s32.totalorder %v793, 0
          %v832 = vsel %vm831, 1, 0
          %v833 = vlaneseq
          %v834 = vshrl.u32 %v833, 7
          %v835 = vsub.s32 0, %v834
          %v836 = vrot.slane %v832, %v835
          %vm837 = vcmp.eq.s32.totalorder %v836, 1
          %vm838 = vmand %vm827, %vm837
          %vm839 = vmand %vm828, %vm837
          %vm840 = vmand %vm829, %vm837
          %vm841 = vmand %vm830, %vm837
          %vm842 = vmor %vm810, %vm838
          %vm843 = vmor %vm811, %vm839
          %vm844 = vmor %vm812, %vm840
          %vm845 = vmor %vm813, %vm841
          %s846 = sld [smem:[#allocation4 + %s42]]
          %p847 = scmp.gt.s32.totalorder %s846, 0
          %s848 = scalar_select %p847, 1, 0
          %v849 = vstv %s848
          %vm850 = vcmp.eq.s32.totalorder %v849, 1
          %vm851 = vmor %vm842, %vm850
          %vm852 = vmor %vm843, %vm850
          %vm853 = vmor %vm844, %vm850
          %vm854 = vmor %vm845, %vm850
          %v855 = vld [vmem:[%s718] sm:$0x1]
          %vm856 = vcmp.gt.f32.partialorder %v855, 0.5
          %v857 = vsel %vm856, 1, 0
          %v858 = vlaneseq
          %v859 = vshrl.u32 %v858, 7
          %v860 = vsub.s32 0, %v859
          %v861 = vrot.slane %v857, %v860
          %vm862 = vcmp.eq.s32.totalorder %v861, 1
          %vm863 = vmand %vm851, %vm862
          %vm864 = vmand %vm852, %vm862
          %vm865 = vmand %vm853, %vm862
          %vm866 = vmand %vm854, %vm862
          %v867 = vsel %vm863, 0.0, -1e+09
          %v868 = vsel %vm864, 0.0, -1e+09
          %v869 = vsel %vm865, 0.0, -1e+09
          %v870 = vsel %vm866, 0.0, -1e+09
          %vm871 = vcmask 261120
          %872 = vst.msk [vmem:[#allocation2] sm:$0xff] %vm871, %v867
          %873 = vst.msk [vmem:[#allocation2 + $0x8] sm:$0xff] %vm871, %v868
          %874 = vst.msk [vmem:[#allocation2 + $0x10] sm:$0xff] %vm871, %v869
          %875 = vst.msk [vmem:[#allocation2 + $0x18] sm:$0xff] %vm871, %v870
        $region88: #{tpu_custom_call.1} parent=83 // pred_fallthru
          _
        %v876 = vld [vmem:[%s728] sm:$0xff]
        %v877 = vld [vmem:[%s728 + $0x8] sm:$0xff]
        %v878 = vld [vmem:[%s728 + $0x10] sm:$0xff]
        %v879 = vld [vmem:[%s728 + $0x18] sm:$0xff]
        %v880 = vld [vmem:[%s733] sm:$0xff]
        %v881 = vld [vmem:[%s733 + $0x8] sm:$0xff]
        %v882 = vld [vmem:[%s723] sm:$0xff]
        %v883 = vld [vmem:[%s723 + $0x8] sm:$0xff]
        %v884 = vld [vmem:[%s723 + $0x10] sm:$0xff]
        %v885 = vld [vmem:[%s723 + $0x18] sm:$0xff]
        %v886 = vld [vmem:[%s710] sm:$0xff]
        %v887 = vld [vmem:[%s710 + $0x8] sm:$0xff]
        %v888 = vld [vmem:[%s710 + $0x10] sm:$0xff]
        %v889 = vld [vmem:[%s710 + $0x18] sm:$0xff]
        %vm890 = vcmask 523264
        %v891 = vsel %vm890, %v886, 0.0
        %892 = vadd.xlane.f32.xlu0 %v891
        %v893 = vpop.xlane.xlu0 %892
        %v894 = vsel %vm890, %v887, 0.0
        %895 = vadd.xlane.f32.xlu0 %v894
        %v896 = vpop.xlane.xlu0 %895
        %v897 = vsel %vm890, %v888, 0.0
        %898 = vadd.xlane.f32.xlu0 %v897
        %v899 = vpop.xlane.xlu0 %898
        %v900 = vsel %vm890, %v889, 0.0
        %901 = vadd.xlane.f32.xlu0 %v900
        %v902 = vpop.xlane.xlu0 %901
        %v903 = vrcp.pop 64.0
        %v904 = vmul.f32 %v893, %v903
        %v905 = vmul.f32 %v896, %v903
        %v906 = vmul.f32 %v899, %v903
        %v907 = vmul.f32 %v902, %v903
        %v908 = vsub.f32 %v886, %v904
        %v909 = vsub.f32 %v887, %v905
        %v910 = vsub.f32 %v888, %v906
        %v911 = vsub.f32 %v889, %v907
        %v912 = vmul.f32 %v908, %v908
        %v913 = vmul.f32 %v909, %v909
        %v914 = vmul.f32 %v910, %v910
        %v915 = vmul.f32 %v911, %v911
        %v916 = vsel %vm890, %v912, 0.0
        %917 = vadd.xlane.f32.xlu0 %v916
        %v918 = vpop.xlane.xlu0 %917
        %v919 = vsel %vm890, %v913, 0.0
        %920 = vadd.xlane.f32.xlu0 %v919
        %v921 = vpop.xlane.xlu0 %920
        %v922 = vsel %vm890, %v914, 0.0
        %923 = vadd.xlane.f32.xlu0 %v922
        %v924 = vpop.xlane.xlu0 %923
        %v925 = vsel %vm890, %v915, 0.0
        %926 = vadd.xlane.f32.xlu0 %v925
        %v927 = vpop.xlane.xlu0 %926
        %v928 = vmul.f32 %v918, %v903
        %v929 = vmul.f32 %v921, %v903
        %v930 = vmul.f32 %v924, %v903
        %v931 = vmul.f32 %v927, %v903
        %v932 = vadd.f32 %v928, 1e-05
        %v933 = vadd.f32 %v929, 1e-05
        %v934 = vadd.f32 %v930, 1e-05
        %v935 = vadd.f32 %v931, 1e-05
        %v936 = vrsqrt.pop %v932
        %v937 = vrsqrt.pop %v933
        %v938 = vrsqrt.pop %v934
        %v939 = vrsqrt.pop %v935
        %v940 = vmul.f32 %v908, %v936
        %v941 = vmul.f32 %v909, %v937
        %v942 = vmul.f32 %v910, %v938
        %v943 = vmul.f32 %v911, %v939
        %v944 = vlaneseq
        %v945 = vshrl.u32 %v944, 7
        %v946 = vsub.s32 0, %v945
        %v947 = vrot.slane %v876, %v946
        %v948 = vmul.f32 %v940, %v947
        %v949 = vmul.f32 %v941, %v947
        %v950 = vmul.f32 %v942, %v947
        %v951 = vmul.f32 %v943, %v947
        %v952 = vlaneseq
        %v953 = vshrl.u32 %v952, 7
        %v954 = vsub.s32 1, %v953
        %v955 = vrot.slane %v876, %v954
        %v956 = vadd.f32 %v948, %v955
        %v957 = vadd.f32 %v949, %v955
        %v958 = vadd.f32 %v950, %v955
        %v959 = vadd.f32 %v951, %v955
        %v960 = vpack.c.bf16 %v957, %v956
        %v961 = vpack.c.bf16 %v959, %v958
        %v962 = vld [vmem:[%s738] sm:$0xff]
        %v963 = vld [vmem:[%s738 + $0x8] sm:$0xff]
        %v964 = vld [vmem:[%s738 + $0x10] sm:$0xff]
        %v965 = vld [vmem:[%s738 + $0x18] sm:$0xff]
        %v966 = vld [vmem:[%s738 + $0x20] sm:$0xff]
        %v967 = vld [vmem:[%s738 + $0x28] sm:$0xff]
        %v968 = vld [vmem:[%s738 + $0x30] sm:$0xff]
        %v969 = vld [vmem:[%s738 + $0x38] sm:$0xff]
        %v970 = vlaneseq
        %v971 = vshrl.u32 %v970, 7
        %v972 = vsub.s32 0, %v971
        %v973 = vrot.slane %v880, %v972
        %v974 = vlaneseq
        %v975 = vshrl.u32 %v974, 7
        %v976 = vsub.s32 0, %v975
        %v977 = vrot.slane %v881, %v976
        %v986 = vunpack.c.l.b16 %v962
        %v987 = vunpack.c.h.b16 %v962
        %v988 = vunpack.c.l.b16 %v963
        %v989 = vunpack.c.h.b16 %v963
        %v990 = vunpack.c.l.b16 %v964
        %v991 = vunpack.c.h.b16 %v964
        %v992 = vunpack.c.l.b16 %v965
        %v993 = vunpack.c.h.b16 %v965
        %v994 = vunpack.c.l.b16 %v966
        %v995 = vunpack.c.h.b16 %v966
        %v996 = vunpack.c.l.b16 %v967
        %v997 = vunpack.c.h.b16 %v967
        %v998 = vunpack.c.l.b16 %v968
        %v999 = vunpack.c.h.b16 %v968
        %v1000 = vunpack.c.l.b16 %v969
        %v1001 = vunpack.c.h.b16 %v969
        %v1002 = vpack.c.b16 %v988, %v986
        %v1003 = vpack.c.b16 %v989, %v987
        %v1004 = vpack.c.b16 %v992, %v990
        %v1005 = vpack.c.b16 %v993, %v991
        %v1006 = vpack.c.b16 %v996, %v994
        %v1007 = vpack.c.b16 %v997, %v995
        %v1008 = vpack.c.b16 %v1000, %v998
        %v1009 = vpack.c.b16 %v1001, %v999
        %v1019 = vsel %vm890, %v960, 0
        %v1022 = vsel %vm890, %v961, 0
        %1024 = vmatprep.subr.bf16.mxu0 0
        %1025 = vmatpush1.bf16.msra.mxu0 0
        %1026 = vmatprep.subr.bf16.mxu0 0
        %1027 = vmatpush1.bf16.msra.mxu0 0
        %1028 = vmatprep.subr.bf16.mxu0 0
        %1029 = vmatpush1.bf16.msra.mxu0 0
        %1030 = vmatprep.subr.bf16.mxu0 0
        %1031 = vmatpush1.bf16.msra.mxu0 0
        %1032 = vmatprep.subr.bf16.mxu0 %v1009
        %1033 = vmatpush1.bf16.msra.mxu0 %v1008
        %1034 = vmatprep.subr.bf16.mxu0 %v1007
        %1035 = vmatpush1.bf16.msra.mxu0 %v1006
        %1036 = vmatprep.subr.bf16.mxu0 %v1005
        %1037 = vmatpush1.bf16.msra.mxu0 %v1004
        %1038 = vmatprep.subr.bf16.mxu0 %v1003
        %1039 = vmatpush1.bf16.msra.mxu0 %v1002
        %1040 = vmatprep.subr.bf16.mxu0 0
        %1041 = vmatpush2.bf16.msra.mxu0 0
        %1042 = vmatprep.subr.bf16.mxu0 0
        %1043 = vmatpush2.bf16.msra.mxu0 0
        %1044 = vmatprep.subr.bf16.mxu0 0
        %1045 = vmatpush2.bf16.msra.mxu0 0
        %1046 = vmatprep.subr.bf16.mxu0 0
        %1047 = vmatpush2.bf16.msra.mxu0 0
        %1048 = vmatprep.subr.bf16.mxu0 0
        %1049 = vmatpush2.bf16.msra.mxu0 0
        %1050 = vmatprep.subr.bf16.mxu0 0
        %1051 = vmatpush2.bf16.msra.mxu0 0
        %1052 = vmatprep.subr.bf16.mxu0 0
        %1053 = vmatpush2.bf16.msra.mxu0 0
        %1054 = vmatprep.subr.bf16.mxu0 0
        %1055 = vmatpush2.bf16.msra.mxu0 0
        %1056 = vmatprep.mubr.bf16.mxu0 0
        %1057 = vmatmul.mubr.bf16.gmra.mxu0 %v1019
        %v1058 = vpop.f32.mrf.mxu0
        %v1059 = vadd.f32 %v973, %v1058
        %v1060 = vpop.f32.mrf.mxu0
        %v1061 = vadd.f32 %v977, %v1060
        %v1062 = vpop.f32.mrf.mxu0
        %v1063 = vadd.f32 %v973, %v1062
        %v1064 = vpop.f32.mrf.mxu0
        %v1065 = vadd.f32 %v977, %v1064
        %1066 = vmatprep.mubr.bf16.mxu0 0
        %1067 = vmatmul.mubr.bf16.gmra.mxu0 %v1022
        %v1068 = vpop.f32.mrf.mxu0
        %v1069 = vadd.f32 %v973, %v1068
        %v1070 = vpop.f32.mrf.mxu0
        %v1071 = vadd.f32 %v977, %v1070
        %v1072 = vpop.f32.mrf.mxu0
        %v1073 = vadd.f32 %v973, %v1072
        %v1074 = vpop.f32.mrf.mxu0
        %v1075 = vadd.f32 %v977, %v1074
        %1076 = vdwg.mxu0
        %v1077 = vxor.u32 %v1059, 2147483648
        %v1078 = vxor.u32 %v1061, 2147483648
        %v1079 = vxor.u32 %v1063, 2147483648
        %v1080 = vxor.u32 %v1065, 2147483648
        %v1081 = vxor.u32 %v1069, 2147483648
        %v1082 = vxor.u32 %v1071, 2147483648
        %v1083 = vxor.u32 %v1073, 2147483648
        %v1084 = vxor.u32 %v1075, 2147483648
        %v1085 = vmul.f32 %v1077, 1.442695
        %v1086 = vpow.pop %v1085
        %v1087 = vmul.f32 %v1078, 1.442695
        %v1088 = vpow.pop %v1087
        %v1089 = vmul.f32 %v1079, 1.442695
        %v1090 = vpow.pop %v1089
        %v1091 = vmul.f32 %v1080, 1.442695
        %v1092 = vpow.pop %v1091
        %v1093 = vmul.f32 %v1081, 1.442695
        %v1094 = vpow.pop %v1093
        %v1095 = vmul.f32 %v1082, 1.442695
        %v1096 = vpow.pop %v1095
        %v1097 = vmul.f32 %v1083, 1.442695
        %v1098 = vpow.pop %v1097
        %v1099 = vmul.f32 %v1084, 1.442695
        %v1100 = vpow.pop %v1099
        %v1101 = vadd.f32 %v1086, 1.0
        %v1102 = vadd.f32 %v1088, 1.0
        %v1103 = vadd.f32 %v1090, 1.0
        %v1104 = vadd.f32 %v1092, 1.0
        %v1105 = vadd.f32 %v1094, 1.0
        %v1106 = vadd.f32 %v1096, 1.0
        %v1107 = vadd.f32 %v1098, 1.0
        %v1108 = vadd.f32 %v1100, 1.0
        %v1109 = vrcp.pop %v1101
        %v1110 = vmul.f32 1.0, %v1109
        %v1111 = vrcp.pop %v1102
        %v1112 = vmul.f32 1.0, %v1111
        %v1113 = vrcp.pop %v1103
        %v1114 = vmul.f32 1.0, %v1113
        %v1115 = vrcp.pop %v1104
        %v1116 = vmul.f32 1.0, %v1115
        %v1117 = vrcp.pop %v1105
        %v1118 = vmul.f32 1.0, %v1117
        %v1119 = vrcp.pop %v1106
        %v1120 = vmul.f32 1.0, %v1119
        %v1121 = vrcp.pop %v1107
        %v1122 = vmul.f32 1.0, %v1121
        %v1123 = vrcp.pop %v1108
        %v1124 = vmul.f32 1.0, %v1123
        %v1125 = vmul.f32 %v1059, %v1110
        %v1126 = vmul.f32 %v1061, %v1112
        %v1127 = vmul.f32 %v1063, %v1114
        %v1128 = vmul.f32 %v1065, %v1116
        %v1129 = vmul.f32 %v1069, %v1118
        %v1130 = vmul.f32 %v1071, %v1120
        %v1131 = vmul.f32 %v1073, %v1122
        %v1132 = vmul.f32 %v1075, %v1124
        %v1133 = vpack.c.bf16 %v1127, %v1125
        %v1134 = vpack.c.bf16 %v1128, %v1126
        %v1135 = vpack.c.bf16 %v1131, %v1129
        %v1136 = vpack.c.bf16 %v1132, %v1130
        %v1137 = vld [vmem:[%s743] sm:$0xf]
        %v1138 = vld [vmem:[%s743 + $0x4] sm:$0xf]
        %v1139 = vld [vmem:[%s743 + $0x8] sm:$0xf]
        %v1140 = vld [vmem:[%s743 + $0xc] sm:$0xf]
        %v1141 = vld [vmem:[%s743 + $0x10] sm:$0xf]
        %v1142 = vld [vmem:[%s743 + $0x14] sm:$0xf]
        %v1143 = vld [vmem:[%s743 + $0x18] sm:$0xf]
        %v1144 = vld [vmem:[%s743 + $0x1c] sm:$0xf]
        %v1145 = vld [vmem:[%s743 + $0x20] sm:$0xf]
        %v1146 = vld [vmem:[%s743 + $0x24] sm:$0xf]
        %v1147 = vld [vmem:[%s743 + $0x28] sm:$0xf]
        %v1148 = vld [vmem:[%s743 + $0x2c] sm:$0xf]
        %v1149 = vld [vmem:[%s743 + $0x30] sm:$0xf]
        %v1150 = vld [vmem:[%s743 + $0x34] sm:$0xf]
        %v1151 = vld [vmem:[%s743 + $0x38] sm:$0xf]
        %v1152 = vld [vmem:[%s743 + $0x3c] sm:$0xf]
        %v1153 = vld [vmem:[%s743 + $0x40] sm:$0xf]
        %v1154 = vld [vmem:[%s743 + $0x44] sm:$0xf]
        %v1155 = vld [vmem:[%s743 + $0x48] sm:$0xf]
        %v1156 = vld [vmem:[%s743 + $0x4c] sm:$0xf]
        %v1157 = vld [vmem:[%s743 + $0x50] sm:$0xf]
        %v1158 = vld [vmem:[%s743 + $0x54] sm:$0xf]
        %v1159 = vld [vmem:[%s743 + $0x58] sm:$0xf]
        %v1160 = vld [vmem:[%s743 + $0x5c] sm:$0xf]
        %v1161 = vld [vmem:[%s743 + $0x60] sm:$0xf]
        %v1162 = vld [vmem:[%s743 + $0x64] sm:$0xf]
        %v1163 = vld [vmem:[%s743 + $0x68] sm:$0xf]
        %v1164 = vld [vmem:[%s743 + $0x6c] sm:$0xf]
        %v1165 = vld [vmem:[%s743 + $0x70] sm:$0xf]
        %v1166 = vld [vmem:[%s743 + $0x74] sm:$0xf]
        %v1167 = vld [vmem:[%s743 + $0x78] sm:$0xf]
        %v1168 = vld [vmem:[%s743 + $0x7c] sm:$0xf]
        %v1169 = vlaneseq
        %v1170 = vshrl.u32 %v1169, 7
        %v1171 = vsub.s32 2, %v1170
        %v1172 = vrot.slane %v876, %v1171
        %v1205 = vunpack.c.l.b16 %v1137
        %v1206 = vunpack.c.l.b16 %v1138
        %v1207 = vunpack.c.l.b16 %v1139
        %v1208 = vunpack.c.l.b16 %v1140
        %v1209 = vunpack.c.l.b16 %v1141
        %v1210 = vunpack.c.l.b16 %v1142
        %v1211 = vunpack.c.l.b16 %v1143
        %v1212 = vunpack.c.l.b16 %v1144
        %v1213 = vunpack.c.l.b16 %v1145
        %v1214 = vunpack.c.l.b16 %v1146
        %v1215 = vunpack.c.l.b16 %v1147
        %v1216 = vunpack.c.l.b16 %v1148
        %v1217 = vunpack.c.l.b16 %v1149
        %v1218 = vunpack.c.l.b16 %v1150
        %v1219 = vunpack.c.l.b16 %v1151
        %v1220 = vunpack.c.l.b16 %v1152
        %v1221 = vunpack.c.l.b16 %v1153
        %v1222 = vunpack.c.l.b16 %v1154
        %v1223 = vunpack.c.l.b16 %v1155
        %v1224 = vunpack.c.l.b16 %v1156
        %v1225 = vunpack.c.l.b16 %v1157
        %v1226 = vunpack.c.l.b16 %v1158
        %v1227 = vunpack.c.l.b16 %v1159
        %v1228 = vunpack.c.l.b16 %v1160
        %v1229 = vunpack.c.l.b16 %v1161
        %v1230 = vunpack.c.l.b16 %v1162
        %v1231 = vunpack.c.l.b16 %v1163
        %v1232 = vunpack.c.l.b16 %v1164
        %v1233 = vunpack.c.l.b16 %v1165
        %v1234 = vunpack.c.l.b16 %v1166
        %v1235 = vunpack.c.l.b16 %v1167
        %v1236 = vunpack.c.l.b16 %v1168
        %v1237 = vpack.c.b16 %v1206, %v1205
        %v1238 = vpack.c.b16 %v1208, %v1207
        %v1239 = vpack.c.b16 %v1210, %v1209
        %v1240 = vpack.c.b16 %v1212, %v1211
        %v1241 = vpack.c.b16 %v1214, %v1213
        %v1242 = vpack.c.b16 %v1216, %v1215
        %v1243 = vpack.c.b16 %v1218, %v1217
        %v1244 = vpack.c.b16 %v1220, %v1219
        %v1245 = vpack.c.b16 %v1222, %v1221
        %v1246 = vpack.c.b16 %v1224, %v1223
        %v1247 = vpack.c.b16 %v1226, %v1225
        %v1248 = vpack.c.b16 %v1228, %v1227
        %v1249 = vpack.c.b16 %v1230, %v1229
        %v1250 = vpack.c.b16 %v1232, %v1231
        %v1251 = vpack.c.b16 %v1234, %v1233
        %v1252 = vpack.c.b16 %v1236, %v1235
        %1269 = vmatprep.subr.bf16.mxu0 0
        %1270 = vmatpush1.bf16.msra.mxu0 %v1244
        %1271 = vmatprep.subr.bf16.mxu0 0
        %1272 = vmatpush1.bf16.msra.mxu0 %v1243
        %1273 = vmatprep.subr.bf16.mxu0 0
        %1274 = vmatpush1.bf16.msra.mxu0 %v1242
        %1275 = vmatprep.subr.bf16.mxu0 0
        %1276 = vmatpush1.bf16.msra.mxu0 %v1241
        %1277 = vmatprep.subr.bf16.mxu0 0
        %1278 = vmatpush1.bf16.msra.mxu0 %v1240
        %1279 = vmatprep.subr.bf16.mxu0 0
        %1280 = vmatpush1.bf16.msra.mxu0 %v1239
        %1281 = vmatprep.subr.bf16.mxu0 0
        %1282 = vmatpush1.bf16.msra.mxu0 %v1238
        %1283 = vmatprep.subr.bf16.mxu0 0
        %1284 = vmatpush1.bf16.msra.mxu0 %v1237
        %1285 = vmatprep.subr.bf16.mxu0 0
        %1286 = vmatpush2.bf16.msra.mxu0 %v1252
        %1287 = vmatprep.subr.bf16.mxu0 0
        %1288 = vmatpush2.bf16.msra.mxu0 %v1251
        %1289 = vmatprep.subr.bf16.mxu0 0
        %1290 = vmatpush2.bf16.msra.mxu0 %v1250
        %1291 = vmatprep.subr.bf16.mxu0 0
        %1292 = vmatpush2.bf16.msra.mxu0 %v1249
        %1293 = vmatprep.subr.bf16.mxu0 0
        %1294 = vmatpush2.bf16.msra.mxu0 %v1248
        %1295 = vmatprep.subr.bf16.mxu0 0
        %1296 = vmatpush2.bf16.msra.mxu0 %v1247
        %1297 = vmatprep.subr.bf16.mxu0 0
        %1298 = vmatpush2.bf16.msra.mxu0 %v1246
        %1299 = vmatprep.subr.bf16.mxu0 0
        %1300 = vmatpush2.bf16.msra.mxu0 %v1245
        %1301 = vmatprep.mubr.bf16.mxu0 %v1134
        %1302 = vmatmul.mubr.bf16.gmra.mxu0 %v1133
        %v1303 = vpop.f32.mrf.mxu0
        %v1304 = vadd.f32 %v1172, %v1303
        %v1305 = vpop.f32.mrf.mxu0
        %v1306 = vpop.f32.mrf.mxu0
        %v1307 = vadd.f32 %v1172, %v1306
        %v1308 = vpop.f32.mrf.mxu0
        %1309 = vmatprep.mubr.bf16.mxu0 %v1136
        %1310 = vmatmul.mubr.bf16.gmra.mxu0 %v1135
        %v1311 = vpop.f32.mrf.mxu0
        %v1312 = vadd.f32 %v1172, %v1311
        %v1313 = vpop.f32.mrf.mxu0
        %v1314 = vpop.f32.mrf.mxu0
        %v1315 = vadd.f32 %v1172, %v1314
        %v1316 = vpop.f32.mrf.mxu0
        %1317 = vdwg.mxu0
        %v1318 = vmul.f32 %v1304, 0.5
        %v1319 = vmul.f32 %v1307, 0.5
        %v1320 = vmul.f32 %v1312, 0.5
        %v1321 = vmul.f32 %v1315, 0.5
        %v1322 = vadd.f32 %v1318, %v886
        %v1323 = vadd.f32 %v1319, %v887
        %v1324 = vadd.f32 %v1320, %v888
        %v1325 = vadd.f32 %v1321, %v889
        %v1326 = vsel %vm890, %v1322, 0.0
        %1327 = vadd.xlane.f32.xlu0 %v1326
        %v1328 = vpop.xlane.xlu0 %1327
        %v1329 = vsel %vm890, %v1323, 0.0
        %1330 = vadd.xlane.f32.xlu0 %v1329
        %v1331 = vpop.xlane.xlu0 %1330
        %v1332 = vsel %vm890, %v1324, 0.0
        %1333 = vadd.xlane.f32.xlu0 %v1332
        %v1334 = vpop.xlane.xlu0 %1333
        %v1335 = vsel %vm890, %v1325, 0.0
        %1336 = vadd.xlane.f32.xlu0 %v1335
        %v1337 = vpop.xlane.xlu0 %1336
        %v1338 = vmul.f32 %v1328, %v903
        %v1339 = vmul.f32 %v1331, %v903
        %v1340 = vmul.f32 %v1334, %v903
        %v1341 = vmul.f32 %v1337, %v903
        %v1342 = vsub.f32 %v1322, %v1338
        %v1343 = vsub.f32 %v1323, %v1339
        %v1344 = vsub.f32 %v1324, %v1340
        %v1345 = vsub.f32 %v1325, %v1341
        %v1346 = vmul.f32 %v1342, %v1342
        %v1347 = vmul.f32 %v1343, %v1343
        %v1348 = vmul.f32 %v1344, %v1344
        %v1349 = vmul.f32 %v1345, %v1345
        %v1350 = vsel %vm890, %v1346, 0.0
        %1351 = vadd.xlane.f32.xlu0 %v1350
        %v1352 = vpop.xlane.xlu0 %1351
        %v1353 = vsel %vm890, %v1347, 0.0
        %1354 = vadd.xlane.f32.xlu0 %v1353
        %v1355 = vpop.xlane.xlu0 %1354
        %v1356 = vsel %vm890, %v1348, 0.0
        %1357 = vadd.xlane.f32.xlu0 %v1356
        %v1358 = vpop.xlane.xlu0 %1357
        %v1359 = vsel %vm890, %v1349, 0.0
        %1360 = vadd.xlane.f32.xlu0 %v1359
        %v1361 = vpop.xlane.xlu0 %1360
        %v1362 = vmul.f32 %v1352, %v903
        %v1363 = vmul.f32 %v1355, %v903
        %v1364 = vmul.f32 %v1358, %v903
        %v1365 = vmul.f32 %v1361, %v903
        %v1366 = vadd.f32 %v1362, 1e-05
        %v1367 = vadd.f32 %v1363, 1e-05
        %v1368 = vadd.f32 %v1364, 1e-05
        %v1369 = vadd.f32 %v1365, 1e-05
        %v1370 = vrsqrt.pop %v1366
        %v1371 = vrsqrt.pop %v1367
        %v1372 = vrsqrt.pop %v1368
        %v1373 = vrsqrt.pop %v1369
        %v1374 = vmul.f32 %v1342, %v1370
        %v1375 = vmul.f32 %v1343, %v1371
        %v1376 = vmul.f32 %v1344, %v1372
        %v1377 = vmul.f32 %v1345, %v1373
        %v1378 = vlaneseq
        %v1379 = vshrl.u32 %v1378, 7
        %v1380 = vsub.s32 3, %v1379
        %v1381 = vrot.slane %v876, %v1380
        %v1382 = vmul.f32 %v1374, %v1381
        %v1383 = vmul.f32 %v1375, %v1381
        %v1384 = vmul.f32 %v1376, %v1381
        %v1385 = vmul.f32 %v1377, %v1381
        %v1386 = vlaneseq
        %v1387 = vshrl.u32 %v1386, 7
        %v1388 = vsub.s32 4, %v1387
        %v1389 = vrot.slane %v876, %v1388
        %v1390 = vadd.f32 %v1382, %v1389
        %v1391 = vadd.f32 %v1383, %v1389
        %v1392 = vadd.f32 %v1384, %v1389
        %v1393 = vadd.f32 %v1385, %v1389
        %v1394 = vpack.c.bf16 %v1391, %v1390
        %v1395 = vpack.c.bf16 %v1393, %v1392
        %v1396 = vld [vmem:[%s748] sm:$0xff]
        %v1397 = vld [vmem:[%s748 + $0x8] sm:$0xff]
        %v1398 = vld [vmem:[%s748 + $0x10] sm:$0xff]
        %v1399 = vld [vmem:[%s748 + $0x18] sm:$0xff]
        %v1400 = vld [vmem:[%s748 + $0x20] sm:$0xff]
        %v1401 = vld [vmem:[%s748 + $0x28] sm:$0xff]
        %v1402 = vld [vmem:[%s748 + $0x30] sm:$0xff]
        %v1403 = vld [vmem:[%s748 + $0x38] sm:$0xff]
        %v1404 = vlaneseq
        %v1405 = vshrl.u32 %v1404, 7
        %v1406 = vsub.s32 2, %v1405
        %v1407 = vrot.slane %v880, %v1406
        %v1408 = vlaneseq
        %v1409 = vshrl.u32 %v1408, 7
        %v1410 = vsub.s32 2, %v1409
        %v1411 = vrot.slane %v881, %v1410
        %v1420 = vunpack.c.l.b16 %v1396
        %v1421 = vunpack.c.h.b16 %v1396
        %v1422 = vunpack.c.l.b16 %v1397
        %v1423 = vunpack.c.h.b16 %v1397
        %v1424 = vunpack.c.l.b16 %v1398
        %v1425 = vunpack.c.h.b16 %v1398
        %v1426 = vunpack.c.l.b16 %v1399
        %v1427 = vunpack.c.h.b16 %v1399
        %v1428 = vunpack.c.l.b16 %v1400
        %v1429 = vunpack.c.h.b16 %v1400
        %v1430 = vunpack.c.l.b16 %v1401
        %v1431 = vunpack.c.h.b16 %v1401
        %v1432 = vunpack.c.l.b16 %v1402
        %v1433 = vunpack.c.h.b16 %v1402
        %v1434 = vunpack.c.l.b16 %v1403
        %v1435 = vunpack.c.h.b16 %v1403
        %v1436 = vpack.c.b16 %v1422, %v1420
        %v1437 = vpack.c.b16 %v1423, %v1421
        %v1438 = vpack.c.b16 %v1426, %v1424
        %v1439 = vpack.c.b16 %v1427, %v1425
        %v1440 = vpack.c.b16 %v1430, %v1428
        %v1441 = vpack.c.b16 %v1431, %v1429
        %v1442 = vpack.c.b16 %v1434, %v1432
        %v1443 = vpack.c.b16 %v1435, %v1433
        %v1453 = vsel %vm890, %v1394, 0
        %v1456 = vsel %vm890, %v1395, 0
        %1458 = vmatprep.subr.bf16.mxu0 0
        %1459 = vmatpush1.bf16.msra.mxu0 0
        %1460 = vmatprep.subr.bf16.mxu0 0
        %1461 = vmatpush1.bf16.msra.mxu0 0
        %1462 = vmatprep.subr.bf16.mxu0 0
        %1463 = vmatpush1.bf16.msra.mxu0 0
        %1464 = vmatprep.subr.bf16.mxu0 0
        %1465 = vmatpush1.bf16.msra.mxu0 0
        %1466 = vmatprep.subr.bf16.mxu0 %v1443
        %1467 = vmatpush1.bf16.msra.mxu0 %v1442
        %1468 = vmatprep.subr.bf16.mxu0 %v1441
        %1469 = vmatpush1.bf16.msra.mxu0 %v1440
        %1470 = vmatprep.subr.bf16.mxu0 %v1439
        %1471 = vmatpush1.bf16.msra.mxu0 %v1438
        %1472 = vmatprep.subr.bf16.mxu0 %v1437
        %1473 = vmatpush1.bf16.msra.mxu0 %v1436
        %1474 = vmatprep.subr.bf16.mxu0 0
        %1475 = vmatpush2.bf16.msra.mxu0 0
        %1476 = vmatprep.subr.bf16.mxu0 0
        %1477 = vmatpush2.bf16.msra.mxu0 0
        %1478 = vmatprep.subr.bf16.mxu0 0
        %1479 = vmatpush2.bf16.msra.mxu0 0
        %1480 = vmatprep.subr.bf16.mxu0 0
        %1481 = vmatpush2.bf16.msra.mxu0 0
        %1482 = vmatprep.subr.bf16.mxu0 0
        %1483 = vmatpush2.bf16.msra.mxu0 0
        %1484 = vmatprep.subr.bf16.mxu0 0
        %1485 = vmatpush2.bf16.msra.mxu0 0
        %1486 = vmatprep.subr.bf16.mxu0 0
        %1487 = vmatpush2.bf16.msra.mxu0 0
        %1488 = vmatprep.subr.bf16.mxu0 0
        %1489 = vmatpush2.bf16.msra.mxu0 0
        %1490 = vmatprep.mubr.bf16.mxu0 0
        %1491 = vmatmul.mubr.bf16.gmra.mxu0 %v1453
        %v1492 = vpop.f32.mrf.mxu0
        %v1493 = vadd.f32 %v1407, %v1492
        %v1494 = vpop.f32.mrf.mxu0
        %v1495 = vadd.f32 %v1411, %v1494
        %v1496 = vpop.f32.mrf.mxu0
        %v1497 = vadd.f32 %v1407, %v1496
        %v1498 = vpop.f32.mrf.mxu0
        %v1499 = vadd.f32 %v1411, %v1498
        %1500 = vmatprep.mubr.bf16.mxu0 0
        %1501 = vmatmul.mubr.bf16.gmra.mxu0 %v1456
        %v1502 = vpop.f32.mrf.mxu0
        %v1503 = vadd.f32 %v1407, %v1502
        %v1504 = vpop.f32.mrf.mxu0
        %v1505 = vadd.f32 %v1411, %v1504
        %v1506 = vpop.f32.mrf.mxu0
        %v1507 = vadd.f32 %v1407, %v1506
        %v1508 = vpop.f32.mrf.mxu0
        %v1509 = vadd.f32 %v1411, %v1508
        %1510 = vdwg.mxu0
        %v1511 = vld [vmem:[#allocation2] sm:$0xff]
        %v1512 = vld [vmem:[#allocation2 + $0x8] sm:$0xff]
        %v1513 = vld [vmem:[#allocation2 + $0x10] sm:$0xff]
        %v1514 = vld [vmem:[#allocation2 + $0x18] sm:$0xff]
        %v1515 = vld [vmem:[%s753] sm:$0xf]
        %v1516 = vld [vmem:[%s753 + $0x4] sm:$0xf]
        %v1517 = vld [vmem:[%s753 + $0x8] sm:$0xf]
        %v1518 = vld [vmem:[%s753 + $0xc] sm:$0xf]
        %v1519 = vld [vmem:[%s753 + $0x10] sm:$0xf]
        %v1520 = vld [vmem:[%s753 + $0x14] sm:$0xf]
        %v1521 = vld [vmem:[%s753 + $0x18] sm:$0xf]
        %v1522 = vld [vmem:[%s753 + $0x1c] sm:$0xf]
        %v1523 = vpack.c.bf16 %v1497, %v1493
        %v1524 = vpack.c.bf16 %v1507, %v1503
        %v1525 = vpack.c.bf16 %v1499, %v1495
        %v1526 = vpack.c.bf16 %v1509, %v1505
        %1529 = vrot.lane.b32.xlu0 %v1523, 64
        %v1530 = vpop.permute.xlu0 %1529
        %1531 = vrot.lane.b32.xlu0 %v1524, 64
        %v1532 = vpop.permute.xlu0 %1531
        %vm1533 = vcmask 130048
        %v1535 = vsel %vm1533, %v1523, 0
        %v1538 = vsel %vm1533, %v1524, 0
        %v1541 = vsel %vm1533, %v1530, 0
        %v1544 = vsel %vm1533, %v1532, 0
        %1546 = vmatprep.subr.bf16.mxu0 0
        %1547 = vmatpush1.bf16.xpose.msra.mxu0 0
        %1548 = vmatprep.subr.bf16.mxu0 0
        %1549 = vmatpush1.bf16.xpose.msra.mxu0 0
        %1550 = vmatprep.subr.bf16.mxu0 0
        %1551 = vmatpush1.bf16.xpose.msra.mxu0 0
        %1552 = vmatprep.subr.bf16.mxu0 0
        %1553 = vmatpush1.bf16.xpose.msra.mxu0 0
        %1554 = vmatprep.subr.bf16.mxu0 0
        %1555 = vmatpush1.bf16.xpose.msra.mxu0 0
        %1556 = vmatprep.subr.bf16.mxu0 0
        %1557 = vmatpush1.bf16.xpose.msra.mxu0 0
        %1558 = vmatprep.subr.bf16.mxu0 0
        %1559 = vmatpush1.bf16.xpose.msra.mxu0 %v1544
        %1560 = vmatprep.subr.bf16.mxu0 0
        %1561 = vmatpush1.bf16.xpose.msra.mxu0 %v1541
        %1562 = vmatprep.subr.bf16.mxu0 0
        %1563 = vmatpush2.bf16.xpose.msra.mxu0 0
        %1564 = vmatprep.subr.bf16.mxu0 0
        %1565 = vmatpush2.bf16.xpose.msra.mxu0 0
        %1566 = vmatprep.subr.bf16.mxu0 0
        %1567 = vmatpush2.bf16.xpose.msra.mxu0 0
        %1568 = vmatprep.subr.bf16.mxu0 0
        %1569 = vmatpush2.bf16.xpose.msra.mxu0 0
        %1570 = vmatprep.subr.bf16.mxu0 0
        %1571 = vmatpush2.bf16.xpose.msra.mxu0 0
        %1572 = vmatprep.subr.bf16.mxu0 0
        %1573 = vmatpush2.bf16.xpose.msra.mxu0 0
        %1574 = vmatprep.subr.bf16.mxu0 0
        %1575 = vmatpush2.bf16.xpose.msra.mxu0 0
        %1576 = vmatprep.subr.bf16.mxu0 0
        %1577 = vmatpush2.bf16.xpose.msra.mxu0 0
        %1578 = vmatprep.mubr.bf16.mxu0 0
        %1579 = vmatmul.mubr.bf16.gmra.mxu0 %v1535
        %v1580 = vpop.f32.mrf.mxu0
        %v1581 = vadd.f32 %v1511, %v1580
        %v1582 = vpop.f32.mrf.mxu0
        %v1583 = vpop.f32.mrf.mxu0
        %v1584 = vadd.f32 %v1512, %v1583
        %v1585 = vpop.f32.mrf.mxu0
        %1586 = vmatprep.mubr.bf16.mxu0 0
        %1587 = vmatmul.mubr.bf16.gmra.mxu0 %v1538
        %v1588 = vpop.f32.mrf.mxu0
        %v1589 = vadd.f32 %v1513, %v1588
        %v1590 = vpop.f32.mrf.mxu0
        %v1591 = vpop.f32.mrf.mxu0
        %v1592 = vadd.f32 %v1514, %v1591
        %v1593 = vpop.f32.mrf.mxu0
        %1594 = vdwg.mxu0
        %vm1595 = vcmask 261120
        %v1596 = vsel %vm1595, %v1581, -inf
        %1597 = vmax.xlane.f32.xlu0 %v1596
        %v1598 = vpop.xlane.xlu0 %1597
        %v1599 = vsel %vm1595, %v1584, -inf
        %1600 = vmax.xlane.f32.xlu0 %v1599
        %v1601 = vpop.xlane.xlu0 %1600
        %v1602 = vsel %vm1595, %v1589, -inf
        %1603 = vmax.xlane.f32.xlu0 %v1602
        %v1604 = vpop.xlane.xlu0 %1603
        %v1605 = vsel %vm1595, %v1592, -inf
        %1606 = vmax.xlane.f32.xlu0 %v1605
        %v1607 = vpop.xlane.xlu0 %1606
        %v1608 = vsub.f32 %v1581, %v1598
        %v1609 = vsub.f32 %v1584, %v1601
        %v1610 = vsub.f32 %v1589, %v1604
        %v1611 = vsub.f32 %v1592, %v1607
        %v1612 = vmul.f32 %v1608, 1.442695
        %v1613 = vpow.pop %v1612
        %v1614 = vmul.f32 %v1609, 1.442695
        %v1615 = vpow.pop %v1614
        %v1616 = vmul.f32 %v1610, 1.442695
        %v1617 = vpow.pop %v1616
        %v1618 = vmul.f32 %v1611, 1.442695
        %v1619 = vpow.pop %v1618
        %v1620 = vsel %vm1595, %v1613, 0.0
        %1621 = vadd.xlane.f32.xlu0 %v1620
        %v1622 = vpop.xlane.xlu0 %1621
        %v1623 = vsel %vm1595, %v1615, 0.0
        %1624 = vadd.xlane.f32.xlu0 %v1623
        %v1625 = vpop.xlane.xlu0 %1624
        %v1626 = vsel %vm1595, %v1617, 0.0
        %1627 = vadd.xlane.f32.xlu0 %v1626
        %v1628 = vpop.xlane.xlu0 %1627
        %v1629 = vsel %vm1595, %v1619, 0.0
        %1630 = vadd.xlane.f32.xlu0 %v1629
        %v1631 = vpop.xlane.xlu0 %1630
        %v1632 = vrcp.pop %v1622
        %v1633 = vrcp.pop %v1625
        %v1634 = vrcp.pop %v1628
        %v1635 = vrcp.pop %v1631
        %v1636 = vmul.f32 %v1613, %v1632
        %v1637 = vmul.f32 %v1615, %v1633
        %v1638 = vmul.f32 %v1617, %v1634
        %v1639 = vmul.f32 %v1619, %v1635
        %v1640 = vpack.c.bf16 %v1637, %v1636
        %v1641 = vpack.c.bf16 %v1639, %v1638
        %v1643 = vsel %vm1595, %v1640, 0
        %v1646 = vsel %vm1595, %v1641, 0
        %1648 = vmatprep.subr.bf16.mxu0 0
        %1649 = vmatpush1.bf16.msra.mxu0 0
        %1650 = vmatprep.subr.bf16.mxu0 0
        %1651 = vmatpush1.bf16.msra.mxu0 0
        %1652 = vmatprep.subr.bf16.mxu0 0
        %1653 = vmatpush1.bf16.msra.mxu0 0
        %1654 = vmatprep.subr.bf16.mxu0 0
        %1655 = vmatpush1.bf16.msra.mxu0 0
        %1656 = vmatprep.subr.bf16.mxu0 0
        %1657 = vmatpush1.bf16.msra.mxu0 0
        %1658 = vmatprep.subr.bf16.mxu0 0
        %1659 = vmatpush1.bf16.msra.mxu0 0
        %1660 = vmatprep.subr.bf16.mxu0 0
        %1661 = vmatpush1.bf16.msra.mxu0 %v1526
        %1662 = vmatprep.subr.bf16.mxu0 0
        %1663 = vmatpush1.bf16.msra.mxu0 %v1525
        %1664 = vmatprep.subr.bf16.mxu0 0
        %1665 = vmatpush2.bf16.msra.mxu0 0
        %1666 = vmatprep.subr.bf16.mxu0 0
        %1667 = vmatpush2.bf16.msra.mxu0 0
        %1668 = vmatprep.subr.bf16.mxu0 0
        %1669 = vmatpush2.bf16.msra.mxu0 0
        %1670 = vmatprep.subr.bf16.mxu0 0
        %1671 = vmatpush2.bf16.msra.mxu0 0
        %1672 = vmatprep.subr.bf16.mxu0 0
        %1673 = vmatpush2.bf16.msra.mxu0 0
        %1674 = vmatprep.subr.bf16.mxu0 0
        %1675 = vmatpush2.bf16.msra.mxu0 0
        %1676 = vmatprep.subr.bf16.mxu0 0
        %1677 = vmatpush2.bf16.msra.mxu0 0
        %1678 = vmatprep.subr.bf16.mxu0 0
        %1679 = vmatpush2.bf16.msra.mxu0 0
        %1680 = vmatprep.mubr.bf16.mxu0 0
        %1681 = vmatmul.mubr.bf16.gmra.mxu0 %v1643
        %v1682 = vpop.f32.mrf.mxu0
        %v1683 = vadd.f32 0.0, %v1682
        %v1684 = vpop.f32.mrf.mxu0
        %v1685 = vpop.f32.mrf.mxu0
        %v1686 = vadd.f32 0.0, %v1685
        %v1687 = vpop.f32.mrf.mxu0
        %1688 = vmatprep.mubr.bf16.mxu0 0
        %1689 = vmatmul.mubr.bf16.gmra.mxu0 %v1646
        %v1690 = vpop.f32.mrf.mxu0
        %v1691 = vadd.f32 0.0, %v1690
        %v1692 = vpop.f32.mrf.mxu0
        %v1693 = vpop.f32.mrf.mxu0
        %v1694 = vadd.f32 0.0, %v1693
        %v1695 = vpop.f32.mrf.mxu0
        %1696 = vdwg.mxu0
        %v1697 = vpack.c.bf16 %v1686, %v1683
        %v1698 = vpack.c.bf16 %v1694, %v1691
        %1699 = vrot.lane.b32.xlu0 %v1523, 112
        %v1700 = vpop.permute.xlu0 %1699
        %1701 = vrot.lane.b32.xlu0 %v1524, 112
        %v1702 = vpop.permute.xlu0 %1701
        %1703 = vrot.lane.b32.xlu0 %v1523, 48
        %v1704 = vpop.permute.xlu0 %1703
        %1705 = vrot.lane.b32.xlu0 %v1524, 48
        %v1706 = vpop.permute.xlu0 %1705
        %v1708 = vsel %vm1533, %v1700, 0
        %v1711 = vsel %vm1533, %v1702, 0
        %v1714 = vsel %vm1533, %v1704, 0
        %v1717 = vsel %vm1533, %v1706, 0
        %1719 = vmatprep.subr.bf16.mxu0 0
        %1720 = vmatpush1.bf16.xpose.msra.mxu0 0
        %1721 = vmatprep.subr.bf16.mxu0 0
        %1722 = vmatpush1.bf16.xpose.msra.mxu0 0
        %1723 = vmatprep.subr.bf16.mxu0 0
        %1724 = vmatpush1.bf16.xpose.msra.mxu0 0
        %1725 = vmatprep.subr.bf16.mxu0 0
        %1726 = vmatpush1.bf16.xpose.msra.mxu0 0
        %1727 = vmatprep.subr.bf16.mxu0 0
        %1728 = vmatpush1.bf16.xpose.msra.mxu0 0
        %1729 = vmatprep.subr.bf16.mxu0 0
        %1730 = vmatpush1.bf16.xpose.msra.mxu0 0
        %1731 = vmatprep.subr.bf16.mxu0 0
        %1732 = vmatpush1.bf16.xpose.msra.mxu0 %v1717
        %1733 = vmatprep.subr.bf16.mxu0 0
        %1734 = vmatpush1.bf16.xpose.msra.mxu0 %v1714
        %1735 = vmatprep.subr.bf16.mxu0 0
        %1736 = vmatpush2.bf16.xpose.msra.mxu0 0
        %1737 = vmatprep.subr.bf16.mxu0 0
        %1738 = vmatpush2.bf16.xpose.msra.mxu0 0
        %1739 = vmatprep.subr.bf16.mxu0 0
        %1740 = vmatpush2.bf16.xpose.msra.mxu0 0
        %1741 = vmatprep.subr.bf16.mxu0 0
        %1742 = vmatpush2.bf16.xpose.msra.mxu0 0
        %1743 = vmatprep.subr.bf16.mxu0 0
        %1744 = vmatpush2.bf16.xpose.msra.mxu0 0
        %1745 = vmatprep.subr.bf16.mxu0 0
        %1746 = vmatpush2.bf16.xpose.msra.mxu0 0
        %1747 = vmatprep.subr.bf16.mxu0 0
        %1748 = vmatpush2.bf16.xpose.msra.mxu0 0
        %1749 = vmatprep.subr.bf16.mxu0 0
        %1750 = vmatpush2.bf16.xpose.msra.mxu0 0
        %1751 = vmatprep.mubr.bf16.mxu0 0
        %1752 = vmatmul.mubr.bf16.gmra.mxu0 %v1708
        %v1753 = vpop.f32.mrf.mxu0
        %v1754 = vadd.f32 %v1511, %v1753
        %v1755 = vpop.f32.mrf.mxu0
        %v1756 = vpop.f32.mrf.mxu0
        %v1757 = vadd.f32 %v1512, %v1756
        %v1758 = vpop.f32.mrf.mxu0
        %1759 = vmatprep.mubr.bf16.mxu0 0
        %1760 = vmatmul.mubr.bf16.gmra.mxu0 %v1711
        %v1761 = vpop.f32.mrf.mxu0
        %v1762 = vadd.f32 %v1513, %v1761
        %v1763 = vpop.f32.mrf.mxu0
        %v1764 = vpop.f32.mrf.mxu0
        %v1765 = vadd.f32 %v1514, %v1764
        %v1766 = vpop.f32.mrf.mxu0
        %1767 = vdwg.mxu0
        %v1768 = vsel %vm1595, %v1754, -inf
        %1769 = vmax.xlane.f32.xlu0 %v1768
        %v1770 = vpop.xlane.xlu0 %1769
        %v1771 = vsel %vm1595, %v1757, -inf
        %1772 = vmax.xlane.f32.xlu0 %v1771
        %v1773 = vpop.xlane.xlu0 %1772
        %v1774 = vsel %vm1595, %v1762, -inf
        %1775 = vmax.xlane.f32.xlu0 %v1774
        %v1776 = vpop.xlane.xlu0 %1775
        %v1777 = vsel %vm1595, %v1765, -inf
        %1778 = vmax.xlane.f32.xlu0 %v1777
        %v1779 = vpop.xlane.xlu0 %1778
        %v1780 = vsub.f32 %v1754, %v1770
        %v1781 = vsub.f32 %v1757, %v1773
        %v1782 = vsub.f32 %v1762, %v1776
        %v1783 = vsub.f32 %v1765, %v1779
        %v1784 = vmul.f32 %v1780, 1.442695
        %v1785 = vpow.pop %v1784
        %v1786 = vmul.f32 %v1781, 1.442695
        %v1787 = vpow.pop %v1786
        %v1788 = vmul.f32 %v1782, 1.442695
        %v1789 = vpow.pop %v1788
        %v1790 = vmul.f32 %v1783, 1.442695
        %v1791 = vpow.pop %v1790
        %v1792 = vsel %vm1595, %v1785, 0.0
        %1793 = vadd.xlane.f32.xlu0 %v1792
        %v1794 = vpop.xlane.xlu0 %1793
        %v1795 = vsel %vm1595, %v1787, 0.0
        %1796 = vadd.xlane.f32.xlu0 %v1795
        %v1797 = vpop.xlane.xlu0 %1796
        %v1798 = vsel %vm1595, %v1789, 0.0
        %1799 = vadd.xlane.f32.xlu0 %v1798
        %v1800 = vpop.xlane.xlu0 %1799
        %v1801 = vsel %vm1595, %v1791, 0.0
        %1802 = vadd.xlane.f32.xlu0 %v1801
        %v1803 = vpop.xlane.xlu0 %1802
        %v1804 = vrcp.pop %v1794
        %v1805 = vrcp.pop %v1797
        %v1806 = vrcp.pop %v1800
        %v1807 = vrcp.pop %v1803
        %v1808 = vmul.f32 %v1785, %v1804
        %v1809 = vmul.f32 %v1787, %v1805
        %v1810 = vmul.f32 %v1789, %v1806
        %v1811 = vmul.f32 %v1791, %v1807
        %v1812 = vpack.c.bf16 %v1809, %v1808
        %v1813 = vpack.c.bf16 %v1811, %v1810
        %1816 = vrot.lane.b32.xlu0 %v1525, 112
        %v1817 = vpop.permute.xlu0 %1816
        %1818 = vrot.lane.b32.xlu0 %v1526, 112
        %v1819 = vpop.permute.xlu0 %1818
        %v1823 = vsel %vm1595, %v1812, 0
        %v1826 = vsel %vm1595, %v1813, 0
        %1828 = vmatprep.subr.bf16.mxu0 0
        %1829 = vmatpush1.bf16.msra.mxu0 0
        %1830 = vmatprep.subr.bf16.mxu0 0
        %1831 = vmatpush1.bf16.msra.mxu0 0
        %1832 = vmatprep.subr.bf16.mxu0 0
        %1833 = vmatpush1.bf16.msra.mxu0 0
        %1834 = vmatprep.subr.bf16.mxu0 0
        %1835 = vmatpush1.bf16.msra.mxu0 0
        %1836 = vmatprep.subr.bf16.mxu0 0
        %1837 = vmatpush1.bf16.msra.mxu0 0
        %1838 = vmatprep.subr.bf16.mxu0 0
        %1839 = vmatpush1.bf16.msra.mxu0 0
        %1840 = vmatprep.subr.bf16.mxu0 0
        %1841 = vmatpush1.bf16.msra.mxu0 %v1819
        %1842 = vmatprep.subr.bf16.mxu0 0
        %1843 = vmatpush1.bf16.msra.mxu0 %v1817
        %1844 = vmatprep.subr.bf16.mxu0 0
        %1845 = vmatpush2.bf16.msra.mxu0 0
        %1846 = vmatprep.subr.bf16.mxu0 0
        %1847 = vmatpush2.bf16.msra.mxu0 0
        %1848 = vmatprep.subr.bf16.mxu0 0
        %1849 = vmatpush2.bf16.msra.mxu0 0
        %1850 = vmatprep.subr.bf16.mxu0 0
        %1851 = vmatpush2.bf16.msra.mxu0 0
        %1852 = vmatprep.subr.bf16.mxu0 0
        %1853 = vmatpush2.bf16.msra.mxu0 0
        %1854 = vmatprep.subr.bf16.mxu0 0
        %1855 = vmatpush2.bf16.msra.mxu0 0
        %1856 = vmatprep.subr.bf16.mxu0 0
        %1857 = vmatpush2.bf16.msra.mxu0 0
        %1858 = vmatprep.subr.bf16.mxu0 0
        %1859 = vmatpush2.bf16.msra.mxu0 0
        %1860 = vmatprep.mubr.bf16.mxu0 0
        %1861 = vmatmul.mubr.bf16.gmra.mxu0 %v1823
        %v1862 = vpop.f32.mrf.mxu0
        %v1863 = vadd.f32 0.0, %v1862
        %v1864 = vpop.f32.mrf.mxu0
        %v1865 = vpop.f32.mrf.mxu0
        %v1866 = vadd.f32 0.0, %v1865
        %v1867 = vpop.f32.mrf.mxu0
        %1868 = vmatprep.mubr.bf16.mxu0 0
        %1869 = vmatmul.mubr.bf16.gmra.mxu0 %v1826
        %v1870 = vpop.f32.mrf.mxu0
        %v1871 = vadd.f32 0.0, %v1870
        %v1872 = vpop.f32.mrf.mxu0
        %v1873 = vpop.f32.mrf.mxu0
        %v1874 = vadd.f32 0.0, %v1873
        %v1875 = vpop.f32.mrf.mxu0
        %1876 = vdwg.mxu0
        %v1877 = vpack.c.bf16 %v1866, %v1863
        %v1878 = vpack.c.bf16 %v1874, %v1871
        %v1881 = vunpack.c.l.b16 %v1517
        %v1882 = vunpack.c.l.b16 %v1518
        %v1883 = vpack.c.b16 %v1882, %v1881
        %v1886 = vsel %vm1533, %v1877, 0
        %v1889 = vsel %vm1533, %v1878, 0
        %1891 = vmatprep.subr.bf16.mxu0 0
        %1892 = vmatpush1.bf16.msra.mxu0 0
        %1893 = vmatprep.subr.bf16.mxu0 0
        %1894 = vmatpush1.bf16.msra.mxu0 0
        %1895 = vmatprep.subr.bf16.mxu0 0
        %1896 = vmatpush1.bf16.msra.mxu0 0
        %1897 = vmatprep.subr.bf16.mxu0 0
        %1898 = vmatpush1.bf16.msra.mxu0 0
        %1899 = vmatprep.subr.bf16.mxu0 0
        %1900 = vmatpush1.bf16.msra.mxu0 0
        %1901 = vmatprep.subr.bf16.mxu0 0
        %1902 = vmatpush1.bf16.msra.mxu0 0
        %1903 = vmatprep.subr.bf16.mxu0 0
        %1904 = vmatpush1.bf16.msra.mxu0 0
        %1905 = vmatprep.subr.bf16.mxu0 0
        %1906 = vmatpush1.bf16.msra.mxu0 %v1883
        %1907 = vmatprep.subr.bf16.mxu0 0
        %1908 = vmatpush2.bf16.msra.mxu0 0
        %1909 = vmatprep.subr.bf16.mxu0 0
        %1910 = vmatpush2.bf16.msra.mxu0 0
        %1911 = vmatprep.subr.bf16.mxu0 0
        %1912 = vmatpush2.bf16.msra.mxu0 0
        %1913 = vmatprep.subr.bf16.mxu0 0
        %1914 = vmatpush2.bf16.msra.mxu0 0
        %1915 = vmatprep.subr.bf16.mxu0 0
        %1916 = vmatpush2.bf16.msra.mxu0 0
        %1917 = vmatprep.subr.bf16.mxu0 0
        %1918 = vmatpush2.bf16.msra.mxu0 0
        %1919 = vmatprep.subr.bf16.mxu0 0
        %1920 = vmatpush2.bf16.msra.mxu0 0
        %1921 = vmatprep.subr.bf16.mxu0 0
        %1922 = vmatpush2.bf16.msra.mxu0 0
        %1923 = vmatprep.mubr.bf16.mxu0 0
        %1924 = vmatmul.mubr.bf16.gmra.mxu0 %v1886
        %v1925 = vpop.f32.mrf.mxu0
        %v1926 = vadd.f32 0.0, %v1925
        %v1927 = vpop.f32.mrf.mxu0
        %v1928 = vpop.f32.mrf.mxu0
        %v1929 = vadd.f32 0.0, %v1928
        %v1930 = vpop.f32.mrf.mxu0
        %1931 = vmatprep.mubr.bf16.mxu0 0
        %1932 = vmatmul.mubr.bf16.gmra.mxu0 %v1889
        %v1933 = vpop.f32.mrf.mxu0
        %v1934 = vadd.f32 0.0, %v1933
        %v1935 = vpop.f32.mrf.mxu0
        %v1936 = vpop.f32.mrf.mxu0
        %v1937 = vadd.f32 0.0, %v1936
        %v1938 = vpop.f32.mrf.mxu0
        %1939 = vdwg.mxu0
        %v1942 = vunpack.c.l.b16 %v1515
        %v1943 = vunpack.c.l.b16 %v1516
        %v1944 = vpack.c.b16 %v1943, %v1942
        %v1947 = vsel %vm1533, %v1697, 0
        %v1950 = vsel %vm1533, %v1698, 0
        %1952 = vmatprep.subr.bf16.mxu0 0
        %1953 = vmatpush1.bf16.msra.mxu0 0
        %1954 = vmatprep.subr.bf16.mxu0 0
        %1955 = vmatpush1.bf16.msra.mxu0 0
        %1956 = vmatprep.subr.bf16.mxu0 0
        %1957 = vmatpush1.bf16.msra.mxu0 0
        %1958 = vmatprep.subr.bf16.mxu0 0
        %1959 = vmatpush1.bf16.msra.mxu0 0
        %1960 = vmatprep.subr.bf16.mxu0 0
        %1961 = vmatpush1.bf16.msra.mxu0 0
        %1962 = vmatprep.subr.bf16.mxu0 0
        %1963 = vmatpush1.bf16.msra.mxu0 0
        %1964 = vmatprep.subr.bf16.mxu0 0
        %1965 = vmatpush1.bf16.msra.mxu0 0
        %1966 = vmatprep.subr.bf16.mxu0 0
        %1967 = vmatpush1.bf16.msra.mxu0 %v1944
        %1968 = vmatprep.subr.bf16.mxu0 0
        %1969 = vmatpush2.bf16.msra.mxu0 0
        %1970 = vmatprep.subr.bf16.mxu0 0
        %1971 = vmatpush2.bf16.msra.mxu0 0
        %1972 = vmatprep.subr.bf16.mxu0 0
        %1973 = vmatpush2.bf16.msra.mxu0 0
        %1974 = vmatprep.subr.bf16.mxu0 0
        %1975 = vmatpush2.bf16.msra.mxu0 0
        %1976 = vmatprep.subr.bf16.mxu0 0
        %1977 = vmatpush2.bf16.msra.mxu0 0
        %1978 = vmatprep.subr.bf16.mxu0 0
        %1979 = vmatpush2.bf16.msra.mxu0 0
        %1980 = vmatprep.subr.bf16.mxu0 0
        %1981 = vmatpush2.bf16.msra.mxu0 0
        %1982 = vmatprep.subr.bf16.mxu0 0
        %1983 = vmatpush2.bf16.msra.mxu0 0
        %1984 = vmatprep.mubr.bf16.mxu0 0
        %1985 = vmatmul.mubr.bf16.gmra.mxu0 %v1947
        %v1986 = vpop.f32.mrf.mxu0
        %v1987 = vadd.f32 %v1926, %v1986
        %v1988 = vpop.f32.mrf.mxu0
        %v1989 = vpop.f32.mrf.mxu0
        %v1990 = vadd.f32 %v1929, %v1989
        %v1991 = vpop.f32.mrf.mxu0
        %1992 = vmatprep.mubr.bf16.mxu0 0
        %1993 = vmatmul.mubr.bf16.gmra.mxu0 %v1950
        %v1994 = vpop.f32.mrf.mxu0
        %v1995 = vadd.f32 %v1934, %v1994
        %v1996 = vpop.f32.mrf.mxu0
        %v1997 = vpop.f32.mrf.mxu0
        %v1998 = vadd.f32 %v1937, %v1997
        %v1999 = vpop.f32.mrf.mxu0
        %2000 = vdwg.mxu0
        %2001 = vrot.lane.b32.xlu0 %v1523, 96
        %v2002 = vpop.permute.xlu0 %2001
        %2003 = vrot.lane.b32.xlu0 %v1524, 96
        %v2004 = vpop.permute.xlu0 %2003
        %2005 = vrot.lane.b32.xlu0 %v1523, 32
        %v2006 = vpop.permute.xlu0 %2005
        %2007 = vrot.lane.b32.xlu0 %v1524, 32
        %v2008 = vpop.permute.xlu0 %2007
        %v2010 = vsel %vm1533, %v2002, 0
        %v2013 = vsel %vm1533, %v2004, 0
        %v2016 = vsel %vm1533, %v2006, 0
        %v2019 = vsel %vm1533, %v2008, 0
        %2021 = vmatprep.subr.bf16.mxu0 0
        %2022 = vmatpush1.bf16.xpose.msra.mxu0 0
        %2023 = vmatprep.subr.bf16.mxu0 0
        %2024 = vmatpush1.bf16.xpose.msra.mxu0 0
        %2025 = vmatprep.subr.bf16.mxu0 0
        %2026 = vmatpush1.bf16.xpose.msra.mxu0 0
        %2027 = vmatprep.subr.bf16.mxu0 0
        %2028 = vmatpush1.bf16.xpose.msra.mxu0 0
        %2029 = vmatprep.subr.bf16.mxu0 0
        %2030 = vmatpush1.bf16.xpose.msra.mxu0 0
        %2031 = vmatprep.subr.bf16.mxu0 0
        %2032 = vmatpush1.bf16.xpose.msra.mxu0 0
        %2033 = vmatprep.subr.bf16.mxu0 0
        %2034 = vmatpush1.bf16.xpose.msra.mxu0 %v2019
        %2035 = vmatprep.subr.bf16.mxu0 0
        %2036 = vmatpush1.bf16.xpose.msra.mxu0 %v2016
        %2037 = vmatprep.subr.bf16.mxu0 0
        %2038 = vmatpush2.bf16.xpose.msra.mxu0 0
        %2039 = vmatprep.subr.bf16.mxu0 0
        %2040 = vmatpush2.bf16.xpose.msra.mxu0 0
        %2041 = vmatprep.subr.bf16.mxu0 0
        %2042 = vmatpush2.bf16.xpose.msra.mxu0 0
        %2043 = vmatprep.subr.bf16.mxu0 0
        %2044 = vmatpush2.bf16.xpose.msra.mxu0 0
        %2045 = vmatprep.subr.bf16.mxu0 0
        %2046 = vmatpush2.bf16.xpose.msra.mxu0 0
        %2047 = vmatprep.subr.bf16.mxu0 0
        %2048 = vmatpush2.bf16.xpose.msra.mxu0 0
        %2049 = vmatprep.subr.bf16.mxu0 0
        %2050 = vmatpush2.bf16.xpose.msra.mxu0 0
        %2051 = vmatprep.subr.bf16.mxu0 0
        %2052 = vmatpush2.bf16.xpose.msra.mxu0 0
        %2053 = vmatprep.mubr.bf16.mxu0 0
        %2054 = vmatmul.mubr.bf16.gmra.mxu0 %v2010
        %v2055 = vpop.f32.mrf.mxu0
        %v2056 = vadd.f32 %v1511, %v2055
        %v2057 = vpop.f32.mrf.mxu0
        %v2058 = vpop.f32.mrf.mxu0
        %v2059 = vadd.f32 %v1512, %v2058
        %v2060 = vpop.f32.mrf.mxu0
        %2061 = vmatprep.mubr.bf16.mxu0 0
        %2062 = vmatmul.mubr.bf16.gmra.mxu0 %v2013
        %v2063 = vpop.f32.mrf.mxu0
        %v2064 = vadd.f32 %v1513, %v2063
        %v2065 = vpop.f32.mrf.mxu0
        %v2066 = vpop.f32.mrf.mxu0
        %v2067 = vadd.f32 %v1514, %v2066
        %v2068 = vpop.f32.mrf.mxu0
        %2069 = vdwg.mxu0
        %v2070 = vsel %vm1595, %v2056, -inf
        %2071 = vmax.xlane.f32.xlu0 %v2070
        %v2072 = vpop.xlane.xlu0 %2071
        %v2073 = vsel %vm1595, %v2059, -inf
        %2074 = vmax.xlane.f32.xlu0 %v2073
        %v2075 = vpop.xlane.xlu0 %2074
        %v2076 = vsel %vm1595, %v2064, -inf
        %2077 = vmax.xlane.f32.xlu0 %v2076
        %v2078 = vpop.xlane.xlu0 %2077
        %v2079 = vsel %vm1595, %v2067, -inf
        %2080 = vmax.xlane.f32.xlu0 %v2079
        %v2081 = vpop.xlane.xlu0 %2080
        %v2082 = vsub.f32 %v2056, %v2072
        %v2083 = vsub.f32 %v2059, %v2075
        %v2084 = vsub.f32 %v2064, %v2078
        %v2085 = vsub.f32 %v2067, %v2081
        %v2086 = vmul.f32 %v2082, 1.442695
        %v2087 = vpow.pop %v2086
        %v2088 = vmul.f32 %v2083, 1.442695
        %v2089 = vpow.pop %v2088
        %v2090 = vmul.f32 %v2084, 1.442695
        %v2091 = vpow.pop %v2090
        %v2092 = vmul.f32 %v2085, 1.442695
        %v2093 = vpow.pop %v2092
        %v2094 = vsel %vm1595, %v2087, 0.0
        %2095 = vadd.xlane.f32.xlu0 %v2094
        %v2096 = vpop.xlane.xlu0 %2095
        %v2097 = vsel %vm1595, %v2089, 0.0
        %2098 = vadd.xlane.f32.xlu0 %v2097
        %v2099 = vpop.xlane.xlu0 %2098
        %v2100 = vsel %vm1595, %v2091, 0.0
        %2101 = vadd.xlane.f32.xlu0 %v2100
        %v2102 = vpop.xlane.xlu0 %2101
        %v2103 = vsel %vm1595, %v2093, 0.0
        %2104 = vadd.xlane.f32.xlu0 %v2103
        %v2105 = vpop.xlane.xlu0 %2104
        %v2106 = vrcp.pop %v2096
        %v2107 = vrcp.pop %v2099
        %v2108 = vrcp.pop %v2102
        %v2109 = vrcp.pop %v2105
        %v2110 = vmul.f32 %v2087, %v2106
        %v2111 = vmul.f32 %v2089, %v2107
        %v2112 = vmul.f32 %v2091, %v2108
        %v2113 = vmul.f32 %v2093, %v2109
        %v2114 = vpack.c.bf16 %v2111, %v2110
        %v2115 = vpack.c.bf16 %v2113, %v2112
        %2116 = vrot.lane.b32.xlu0 %v1525, 96
        %v2117 = vpop.permute.xlu0 %2116
        %2118 = vrot.lane.b32.xlu0 %v1526, 96
        %v2119 = vpop.permute.xlu0 %2118
        %v2123 = vsel %vm1595, %v2114, 0
        %v2126 = vsel %vm1595, %v2115, 0
        %2128 = vmatprep.subr.bf16.mxu0 0
        %2129 = vmatpush1.bf16.msra.mxu0 0
        %2130 = vmatprep.subr.bf16.mxu0 0
        %2131 = vmatpush1.bf16.msra.mxu0 0
        %2132 = vmatprep.subr.bf16.mxu0 0
        %2133 = vmatpush1.bf16.msra.mxu0 0
        %2134 = vmatprep.subr.bf16.mxu0 0
        %2135 = vmatpush1.bf16.msra.mxu0 0
        %2136 = vmatprep.subr.bf16.mxu0 0
        %2137 = vmatpush1.bf16.msra.mxu0 0
        %2138 = vmatprep.subr.bf16.mxu0 0
        %2139 = vmatpush1.bf16.msra.mxu0 0
        %2140 = vmatprep.subr.bf16.mxu0 0
        %2141 = vmatpush1.bf16.msra.mxu0 %v2119
        %2142 = vmatprep.subr.bf16.mxu0 0
        %2143 = vmatpush1.bf16.msra.mxu0 %v2117
        %2144 = vmatprep.subr.bf16.mxu0 0
        %2145 = vmatpush2.bf16.msra.mxu0 0
        %2146 = vmatprep.subr.bf16.mxu0 0
        %2147 = vmatpush2.bf16.msra.mxu0 0
        %2148 = vmatprep.subr.bf16.mxu0 0
        %2149 = vmatpush2.bf16.msra.mxu0 0
        %2150 = vmatprep.subr.bf16.mxu0 0
        %2151 = vmatpush2.bf16.msra.mxu0 0
        %2152 = vmatprep.subr.bf16.mxu0 0
        %2153 = vmatpush2.bf16.msra.mxu0 0
        %2154 = vmatprep.subr.bf16.mxu0 0
        %2155 = vmatpush2.bf16.msra.mxu0 0
        %2156 = vmatprep.subr.bf16.mxu0 0
        %2157 = vmatpush2.bf16.msra.mxu0 0
        %2158 = vmatprep.subr.bf16.mxu0 0
        %2159 = vmatpush2.bf16.msra.mxu0 0
        %2160 = vmatprep.mubr.bf16.mxu0 0
        %2161 = vmatmul.mubr.bf16.gmra.mxu0 %v2123
        %v2162 = vpop.f32.mrf.mxu0
        %v2163 = vadd.f32 0.0, %v2162
        %v2164 = vpop.f32.mrf.mxu0
        %v2165 = vpop.f32.mrf.mxu0
        %v2166 = vadd.f32 0.0, %v2165
        %v2167 = vpop.f32.mrf.mxu0
        %2168 = vmatprep.mubr.bf16.mxu0 0
        %2169 = vmatmul.mubr.bf16.gmra.mxu0 %v2126
        %v2170 = vpop.f32.mrf.mxu0
        %v2171 = vadd.f32 0.0, %v2170
        %v2172 = vpop.f32.mrf.mxu0
        %v2173 = vpop.f32.mrf.mxu0
        %v2174 = vadd.f32 0.0, %v2173
        %v2175 = vpop.f32.mrf.mxu0
        %2176 = vdwg.mxu0
        %v2177 = vpack.c.bf16 %v2166, %v2163
        %v2178 = vpack.c.bf16 %v2174, %v2171
        %v2181 = vunpack.c.l.b16 %v1519
        %v2182 = vunpack.c.l.b16 %v1520
        %v2183 = vpack.c.b16 %v2182, %v2181
        %v2186 = vsel %vm1533, %v2177, 0
        %v2189 = vsel %vm1533, %v2178, 0
        %2191 = vmatprep.subr.bf16.mxu0 0
        %2192 = vmatpush1.bf16.msra.mxu0 0
        %2193 = vmatprep.subr.bf16.mxu0 0
        %2194 = vmatpush1.bf16.msra.mxu0 0
        %2195 = vmatprep.subr.bf16.mxu0 0
        %2196 = vmatpush1.bf16.msra.mxu0 0
        %2197 = vmatprep.subr.bf16.mxu0 0
        %2198 = vmatpush1.bf16.msra.mxu0 0
        %2199 = vmatprep.subr.bf16.mxu0 0
        %2200 = vmatpush1.bf16.msra.mxu0 0
        %2201 = vmatprep.subr.bf16.mxu0 0
        %2202 = vmatpush1.bf16.msra.mxu0 0
        %2203 = vmatprep.subr.bf16.mxu0 0
        %2204 = vmatpush1.bf16.msra.mxu0 0
        %2205 = vmatprep.subr.bf16.mxu0 0
        %2206 = vmatpush1.bf16.msra.mxu0 %v2183
        %2207 = vmatprep.subr.bf16.mxu0 0
        %2208 = vmatpush2.bf16.msra.mxu0 0
        %2209 = vmatprep.subr.bf16.mxu0 0
        %2210 = vmatpush2.bf16.msra.mxu0 0
        %2211 = vmatprep.subr.bf16.mxu0 0
        %2212 = vmatpush2.bf16.msra.mxu0 0
        %2213 = vmatprep.subr.bf16.mxu0 0
        %2214 = vmatpush2.bf16.msra.mxu0 0
        %2215 = vmatprep.subr.bf16.mxu0 0
        %2216 = vmatpush2.bf16.msra.mxu0 0
        %2217 = vmatprep.subr.bf16.mxu0 0
        %2218 = vmatpush2.bf16.msra.mxu0 0
        %2219 = vmatprep.subr.bf16.mxu0 0
        %2220 = vmatpush2.bf16.msra.mxu0 0
        %2221 = vmatprep.subr.bf16.mxu0 0
        %2222 = vmatpush2.bf16.msra.mxu0 0
        %2223 = vmatprep.mubr.bf16.mxu0 0
        %2224 = vmatmul.mubr.bf16.gmra.mxu0 %v2186
        %v2225 = vpop.f32.mrf.mxu0
        %v2226 = vadd.f32 0.0, %v2225
        %v2227 = vpop.f32.mrf.mxu0
        %v2228 = vpop.f32.mrf.mxu0
        %v2229 = vadd.f32 0.0, %v2228
        %v2230 = vpop.f32.mrf.mxu0
        %2231 = vmatprep.mubr.bf16.mxu0 0
        %2232 = vmatmul.mubr.bf16.gmra.mxu0 %v2189
        %v2233 = vpop.f32.mrf.mxu0
        %v2234 = vadd.f32 0.0, %v2233
        %v2235 = vpop.f32.mrf.mxu0
        %v2236 = vpop.f32.mrf.mxu0
        %v2237 = vadd.f32 0.0, %v2236
        %v2238 = vpop.f32.mrf.mxu0
        %2239 = vdwg.mxu0
        %v2240 = vadd.f32 %v1987, %v2226
        %v2241 = vadd.f32 %v1990, %v2229
        %v2242 = vadd.f32 %v1995, %v2234
        %v2243 = vadd.f32 %v1998, %v2237
        %2244 = vrot.lane.b32.xlu0 %v1523, 80
        %v2245 = vpop.permute.xlu0 %2244
        %2246 = vrot.lane.b32.xlu0 %v1524, 80
        %v2247 = vpop.permute.xlu0 %2246
        %2248 = vrot.lane.b32.xlu0 %v1523, 16
        %v2249 = vpop.permute.xlu0 %2248
        %2250 = vrot.lane.b32.xlu0 %v1524, 16
        %v2251 = vpop.permute.xlu0 %2250
        %v2253 = vsel %vm1533, %v2245, 0
        %v2256 = vsel %vm1533, %v2247, 0
        %v2259 = vsel %vm1533, %v2249, 0
        %v2262 = vsel %vm1533, %v2251, 0
        %2264 = vmatprep.subr.bf16.mxu0 0
        %2265 = vmatpush1.bf16.xpose.msra.mxu0 0
        %2266 = vmatprep.subr.bf16.mxu0 0
        %2267 = vmatpush1.bf16.xpose.msra.mxu0 0
        %2268 = vmatprep.subr.bf16.mxu0 0
        %2269 = vmatpush1.bf16.xpose.msra.mxu0 0
        %2270 = vmatprep.subr.bf16.mxu0 0
        %2271 = vmatpush1.bf16.xpose.msra.mxu0 0
        %2272 = vmatprep.subr.bf16.mxu0 0
        %2273 = vmatpush1.bf16.xpose.msra.mxu0 0
        %2274 = vmatprep.subr.bf16.mxu0 0
        %2275 = vmatpush1.bf16.xpose.msra.mxu0 0
        %2276 = vmatprep.subr.bf16.mxu0 0
        %2277 = vmatpush1.bf16.xpose.msra.mxu0 %v2262
        %2278 = vmatprep.subr.bf16.mxu0 0
        %2279 = vmatpush1.bf16.xpose.msra.mxu0 %v2259
        %2280 = vmatprep.subr.bf16.mxu0 0
        %2281 = vmatpush2.bf16.xpose.msra.mxu0 0
        %2282 = vmatprep.subr.bf16.mxu0 0
        %2283 = vmatpush2.bf16.xpose.msra.mxu0 0
        %2284 = vmatprep.subr.bf16.mxu0 0
        %2285 = vmatpush2.bf16.xpose.msra.mxu0 0
        %2286 = vmatprep.subr.bf16.mxu0 0
        %2287 = vmatpush2.bf16.xpose.msra.mxu0 0
        %2288 = vmatprep.subr.bf16.mxu0 0
        %2289 = vmatpush2.bf16.xpose.msra.mxu0 0
        %2290 = vmatprep.subr.bf16.mxu0 0
        %2291 = vmatpush2.bf16.xpose.msra.mxu0 0
        %2292 = vmatprep.subr.bf16.mxu0 0
        %2293 = vmatpush2.bf16.xpose.msra.mxu0 0
        %2294 = vmatprep.subr.bf16.mxu0 0
        %2295 = vmatpush2.bf16.xpose.msra.mxu0 0
        %2296 = vmatprep.mubr.bf16.mxu0 0
        %2297 = vmatmul.mubr.bf16.gmra.mxu0 %v2253
        %v2298 = vpop.f32.mrf.mxu0
        %v2299 = vadd.f32 %v1511, %v2298
        %v2300 = vpop.f32.mrf.mxu0
        %v2301 = vpop.f32.mrf.mxu0
        %v2302 = vadd.f32 %v1512, %v2301
        %v2303 = vpop.f32.mrf.mxu0
        %2304 = vmatprep.mubr.bf16.mxu0 0
        %2305 = vmatmul.mubr.bf16.gmra.mxu0 %v2256
        %v2306 = vpop.f32.mrf.mxu0
        %v2307 = vadd.f32 %v1513, %v2306
        %v2308 = vpop.f32.mrf.mxu0
        %v2309 = vpop.f32.mrf.mxu0
        %v2310 = vadd.f32 %v1514, %v2309
        %v2311 = vpop.f32.mrf.mxu0
        %2312 = vdwg.mxu0
        %v2313 = vsel %vm1595, %v2299, -inf
        %2314 = vmax.xlane.f32.xlu0 %v2313
        %v2315 = vpop.xlane.xlu0 %2314
        %v2316 = vsel %vm1595, %v2302, -inf
        %2317 = vmax.xlane.f32.xlu0 %v2316
        %v2318 = vpop.xlane.xlu0 %2317
        %v2319 = vsel %vm1595, %v2307, -inf
        %2320 = vmax.xlane.f32.xlu0 %v2319
        %v2321 = vpop.xlane.xlu0 %2320
        %v2322 = vsel %vm1595, %v2310, -inf
        %2323 = vmax.xlane.f32.xlu0 %v2322
        %v2324 = vpop.xlane.xlu0 %2323
        %v2325 = vsub.f32 %v2299, %v2315
        %v2326 = vsub.f32 %v2302, %v2318
        %v2327 = vsub.f32 %v2307, %v2321
        %v2328 = vsub.f32 %v2310, %v2324
        %v2329 = vmul.f32 %v2325, 1.442695
        %v2330 = vpow.pop %v2329
        %v2331 = vmul.f32 %v2326, 1.442695
        %v2332 = vpow.pop %v2331
        %v2333 = vmul.f32 %v2327, 1.442695
        %v2334 = vpow.pop %v2333
        %v2335 = vmul.f32 %v2328, 1.442695
        %v2336 = vpow.pop %v2335
        %v2337 = vsel %vm1595, %v2330, 0.0
        %2338 = vadd.xlane.f32.xlu0 %v2337
        %v2339 = vpop.xlane.xlu0 %2338
        %v2340 = vsel %vm1595, %v2332, 0.0
        %2341 = vadd.xlane.f32.xlu0 %v2340
        %v2342 = vpop.xlane.xlu0 %2341
        %v2343 = vsel %vm1595, %v2334, 0.0
        %2344 = vadd.xlane.f32.xlu0 %v2343
        %v2345 = vpop.xlane.xlu0 %2344
        %v2346 = vsel %vm1595, %v2336, 0.0
        %2347 = vadd.xlane.f32.xlu0 %v2346
        %v2348 = vpop.xlane.xlu0 %2347
        %v2349 = vrcp.pop %v2339
        %v2350 = vrcp.pop %v2342
        %v2351 = vrcp.pop %v2345
        %v2352 = vrcp.pop %v2348
        %v2353 = vmul.f32 %v2330, %v2349
        %v2354 = vmul.f32 %v2332, %v2350
        %v2355 = vmul.f32 %v2334, %v2351
        %v2356 = vmul.f32 %v2336, %v2352
        %v2357 = vpack.c.bf16 %v2354, %v2353
        %v2358 = vpack.c.bf16 %v2356, %v2355
        %2359 = vrot.lane.b32.xlu0 %v1525, 80
        %v2360 = vpop.permute.xlu0 %2359
        %2361 = vrot.lane.b32.xlu0 %v1526, 80
        %v2362 = vpop.permute.xlu0 %2361
        %v2366 = vsel %vm1595, %v2357, 0
        %v2369 = vsel %vm1595, %v2358, 0
        %2371 = vmatprep.subr.bf16.mxu0 0
        %2372 = vmatpush1.bf16.msra.mxu0 0
        %2373 = vmatprep.subr.bf16.mxu0 0
        %2374 = vmatpush1.bf16.msra.mxu0 0
        %2375 = vmatprep.subr.bf16.mxu0 0
        %2376 = vmatpush1.bf16.msra.mxu0 0
        %2377 = vmatprep.subr.bf16.mxu0 0
        %2378 = vmatpush1.bf16.msra.mxu0 0
        %2379 = vmatprep.subr.bf16.mxu0 0
        %2380 = vmatpush1.bf16.msra.mxu0 0
        %2381 = vmatprep.subr.bf16.mxu0 0
        %2382 = vmatpush1.bf16.msra.mxu0 0
        %2383 = vmatprep.subr.bf16.mxu0 0
        %2384 = vmatpush1.bf16.msra.mxu0 %v2362
        %2385 = vmatprep.subr.bf16.mxu0 0
        %2386 = vmatpush1.bf16.msra.mxu0 %v2360
        %2387 = vmatprep.subr.bf16.mxu0 0
        %2388 = vmatpush2.bf16.msra.mxu0 0
        %2389 = vmatprep.subr.bf16.mxu0 0
        %2390 = vmatpush2.bf16.msra.mxu0 0
        %2391 = vmatprep.subr.bf16.mxu0 0
        %2392 = vmatpush2.bf16.msra.mxu0 0
        %2393 = vmatprep.subr.bf16.mxu0 0
        %2394 = vmatpush2.bf16.msra.mxu0 0
        %2395 = vmatprep.subr.bf16.mxu0 0
        %2396 = vmatpush2.bf16.msra.mxu0 0
        %2397 = vmatprep.subr.bf16.mxu0 0
        %2398 = vmatpush2.bf16.msra.mxu0 0
        %2399 = vmatprep.subr.bf16.mxu0 0
        %2400 = vmatpush2.bf16.msra.mxu0 0
        %2401 = vmatprep.subr.bf16.mxu0 0
        %2402 = vmatpush2.bf16.msra.mxu0 0
        %2403 = vmatprep.mubr.bf16.mxu0 0
        %2404 = vmatmul.mubr.bf16.gmra.mxu0 %v2366
        %v2405 = vpop.f32.mrf.mxu0
        %v2406 = vadd.f32 0.0, %v2405
        %v2407 = vpop.f32.mrf.mxu0
        %v2408 = vpop.f32.mrf.mxu0
        %v2409 = vadd.f32 0.0, %v2408
        %v2410 = vpop.f32.mrf.mxu0
        %2411 = vmatprep.mubr.bf16.mxu0 0
        %2412 = vmatmul.mubr.bf16.gmra.mxu0 %v2369
        %v2413 = vpop.f32.mrf.mxu0
        %v2414 = vadd.f32 0.0, %v2413
        %v2415 = vpop.f32.mrf.mxu0
        %v2416 = vpop.f32.mrf.mxu0
        %v2417 = vadd.f32 0.0, %v2416
        %v2418 = vpop.f32.mrf.mxu0
        %2419 = vdwg.mxu0
        %v2420 = vpack.c.bf16 %v2409, %v2406
        %v2421 = vpack.c.bf16 %v2417, %v2414
        %v2424 = vunpack.c.l.b16 %v1521
        %v2425 = vunpack.c.l.b16 %v1522
        %v2426 = vpack.c.b16 %v2425, %v2424
        %v2429 = vsel %vm1533, %v2420, 0
        %v2432 = vsel %vm1533, %v2421, 0
        %2434 = vmatprep.subr.bf16.mxu0 0
        %2435 = vmatpush1.bf16.msra.mxu0 0
        %2436 = vmatprep.subr.bf16.mxu0 0
        %2437 = vmatpush1.bf16.msra.mxu0 0
        %2438 = vmatprep.subr.bf16.mxu0 0
        %2439 = vmatpush1.bf16.msra.mxu0 0
        %2440 = vmatprep.subr.bf16.mxu0 0
        %2441 = vmatpush1.bf16.msra.mxu0 0
        %2442 = vmatprep.subr.bf16.mxu0 0
        %2443 = vmatpush1.bf16.msra.mxu0 0
        %2444 = vmatprep.subr.bf16.mxu0 0
        %2445 = vmatpush1.bf16.msra.mxu0 0
        %2446 = vmatprep.subr.bf16.mxu0 0
        %2447 = vmatpush1.bf16.msra.mxu0 0
        %2448 = vmatprep.subr.bf16.mxu0 0
        %2449 = vmatpush1.bf16.msra.mxu0 %v2426
        %2450 = vmatprep.subr.bf16.mxu0 0
        %2451 = vmatpush2.bf16.msra.mxu0 0
        %2452 = vmatprep.subr.bf16.mxu0 0
        %2453 = vmatpush2.bf16.msra.mxu0 0
        %2454 = vmatprep.subr.bf16.mxu0 0
        %2455 = vmatpush2.bf16.msra.mxu0 0
        %2456 = vmatprep.subr.bf16.mxu0 0
        %2457 = vmatpush2.bf16.msra.mxu0 0
        %2458 = vmatprep.subr.bf16.mxu0 0
        %2459 = vmatpush2.bf16.msra.mxu0 0
        %2460 = vmatprep.subr.bf16.mxu0 0
        %2461 = vmatpush2.bf16.msra.mxu0 0
        %2462 = vmatprep.subr.bf16.mxu0 0
        %2463 = vmatpush2.bf16.msra.mxu0 0
        %2464 = vmatprep.subr.bf16.mxu0 0
        %2465 = vmatpush2.bf16.msra.mxu0 0
        %2466 = vmatprep.mubr.bf16.mxu0 0
        %2467 = vmatmul.mubr.bf16.gmra.mxu0 %v2429
        %v2468 = vpop.f32.mrf.mxu0
        %v2469 = vadd.f32 0.0, %v2468
        %v2470 = vpop.f32.mrf.mxu0
        %v2471 = vpop.f32.mrf.mxu0
        %v2472 = vadd.f32 0.0, %v2471
        %v2473 = vpop.f32.mrf.mxu0
        %2474 = vmatprep.mubr.bf16.mxu0 0
        %2475 = vmatmul.mubr.bf16.gmra.mxu0 %v2432
        %v2476 = vpop.f32.mrf.mxu0
        %v2477 = vadd.f32 0.0, %v2476
        %v2478 = vpop.f32.mrf.mxu0
        %v2479 = vpop.f32.mrf.mxu0
        %v2480 = vadd.f32 0.0, %v2479
        %v2481 = vpop.f32.mrf.mxu0
        %2482 = vdwg.mxu0
        %v2483 = vadd.f32 %v2240, %v2469
        %v2484 = vadd.f32 %v2241, %v2472
        %v2485 = vadd.f32 %v2242, %v2477
        %v2486 = vadd.f32 %v2243, %v2480
        %v2487 = vlaneseq
        %v2488 = vshrl.u32 %v2487, 7
        %v2489 = vsub.s32 5, %v2488
        %v2490 = vrot.slane %v876, %v2489
        %v2491 = vadd.f32 %v2483, %v2490
        %v2492 = vadd.f32 %v2484, %v2490
        %v2493 = vadd.f32 %v2485, %v2490
        %v2494 = vadd.f32 %v2486, %v2490
        %v2495 = vadd.f32 %v2491, %v1322
        %v2496 = vadd.f32 %v2492, %v1323
        %v2497 = vadd.f32 %v2493, %v1324
        %v2498 = vadd.f32 %v2494, %v1325
        %2500 = vset.pattern.permute.xlu0 0
        %2501 = vperm.xlu0 %2500, %v882
        %v2502 = vpop.permute.xlu0 %2501
        %2505 = vset.pattern.permute.xlu0 0
        %2506 = vperm.xlu0 %2505, %v883
        %v2507 = vpop.permute.xlu0 %2506
        %2510 = vset.pattern.permute.xlu0 0
        %2511 = vperm.xlu0 %2510, %v884
        %v2512 = vpop.permute.xlu0 %2511
        %2515 = vset.pattern.permute.xlu0 0
        %2516 = vperm.xlu0 %2515, %v885
        %v2517 = vpop.permute.xlu0 %2516
        %v2519 = vmul.f32 %v2495, %v2502
        %v2520 = vmul.f32 %v2496, %v2507
        %v2521 = vmul.f32 %v2497, %v2512
        %v2522 = vmul.f32 %v2498, %v2517
        %v2523 = vsel %vm890, %v2519, 0.0
        %2524 = vadd.xlane.f32.xlu0 %v2523
        %v2525 = vpop.xlane.xlu0 %2524
        %v2526 = vsel %vm890, %v2520, 0.0
        %2527 = vadd.xlane.f32.xlu0 %v2526
        %v2528 = vpop.xlane.xlu0 %2527
        %v2529 = vsel %vm890, %v2521, 0.0
        %2530 = vadd.xlane.f32.xlu0 %v2529
        %v2531 = vpop.xlane.xlu0 %2530
        %v2532 = vsel %vm890, %v2522, 0.0
        %2533 = vadd.xlane.f32.xlu0 %v2532
        %v2534 = vpop.xlane.xlu0 %2533
        %v2535 = vmul.f32 %v2525, %v903
        %v2536 = vmul.f32 %v2528, %v903
        %v2537 = vmul.f32 %v2531, %v903
        %v2538 = vmul.f32 %v2534, %v903
        %v2539 = vsub.f32 %v2519, %v2535
        %v2540 = vsub.f32 %v2520, %v2536
        %v2541 = vsub.f32 %v2521, %v2537
        %v2542 = vsub.f32 %v2522, %v2538
        %v2543 = vmul.f32 %v2539, %v2539
        %v2544 = vmul.f32 %v2540, %v2540
        %v2545 = vmul.f32 %v2541, %v2541
        %v2546 = vmul.f32 %v2542, %v2542
        %v2547 = vsel %vm890, %v2543, 0.0
        %2548 = vadd.xlane.f32.xlu0 %v2547
        %v2549 = vpop.xlane.xlu0 %2548
        %v2550 = vsel %vm890, %v2544, 0.0
        %2551 = vadd.xlane.f32.xlu0 %v2550
        %v2552 = vpop.xlane.xlu0 %2551
        %v2553 = vsel %vm890, %v2545, 0.0
        %2554 = vadd.xlane.f32.xlu0 %v2553
        %v2555 = vpop.xlane.xlu0 %2554
        %v2556 = vsel %vm890, %v2546, 0.0
        %2557 = vadd.xlane.f32.xlu0 %v2556
        %v2558 = vpop.xlane.xlu0 %2557
        %v2559 = vmul.f32 %v2549, %v903
        %v2560 = vmul.f32 %v2552, %v903
        %v2561 = vmul.f32 %v2555, %v903
        %v2562 = vmul.f32 %v2558, %v903
        %v2563 = vadd.f32 %v2559, 1e-05
        %v2564 = vadd.f32 %v2560, 1e-05
        %v2565 = vadd.f32 %v2561, 1e-05
        %v2566 = vadd.f32 %v2562, 1e-05
        %v2567 = vrsqrt.pop %v2563
        %v2568 = vrsqrt.pop %v2564
        %v2569 = vrsqrt.pop %v2565
        %v2570 = vrsqrt.pop %v2566
        %v2571 = vmul.f32 %v2539, %v2567
        %v2572 = vmul.f32 %v2540, %v2568
        %v2573 = vmul.f32 %v2541, %v2569
        %v2574 = vmul.f32 %v2542, %v2570
        %v2575 = vlaneseq
        %v2576 = vshrl.u32 %v2575, 7
        %v2577 = vsub.s32 6, %v2576
        %v2578 = vrot.slane %v876, %v2577
        %v2579 = vmul.f32 %v2571, %v2578
        %v2580 = vmul.f32 %v2572, %v2578
        %v2581 = vmul.f32 %v2573, %v2578
        %v2582 = vmul.f32 %v2574, %v2578
        %v2583 = vlaneseq
        %v2584 = vshrl.u32 %v2583, 7
        %v2585 = vsub.s32 7, %v2584
        %v2586 = vrot.slane %v876, %v2585
        %v2587 = vadd.f32 %v2579, %v2586
        %v2588 = vadd.f32 %v2580, %v2586
        %v2589 = vadd.f32 %v2581, %v2586
        %v2590 = vadd.f32 %v2582, %v2586
        %v2591 = vpack.c.bf16 %v2588, %v2587
        %v2592 = vpack.c.bf16 %v2590, %v2589
        %v2593 = vld [vmem:[%s758] sm:$0xf]
        %v2594 = vld [vmem:[%s758 + $0x4] sm:$0xf]
        %v2595 = vld [vmem:[%s758 + $0x8] sm:$0xf]
        %v2596 = vld [vmem:[%s758 + $0xc] sm:$0xf]
        %v2597 = vld [vmem:[%s758 + $0x10] sm:$0xf]
        %v2598 = vld [vmem:[%s758 + $0x14] sm:$0xf]
        %v2599 = vld [vmem:[%s758 + $0x18] sm:$0xf]
        %v2600 = vld [vmem:[%s758 + $0x1c] sm:$0xf]
        %v2601 = vlaneseq
        %v2602 = vshrl.u32 %v2601, 7
        %v2603 = vsub.s32 3, %v2602
        %v2604 = vrot.slane %v880, %v2603
        %v2613 = vunpack.c.l.b16 %v2593
        %v2614 = vunpack.c.l.b16 %v2594
        %v2615 = vunpack.c.l.b16 %v2595
        %v2616 = vunpack.c.l.b16 %v2596
        %v2617 = vunpack.c.l.b16 %v2597
        %v2618 = vunpack.c.l.b16 %v2598
        %v2619 = vunpack.c.l.b16 %v2599
        %v2620 = vunpack.c.l.b16 %v2600
        %v2621 = vpack.c.b16 %v2614, %v2613
        %v2622 = vpack.c.b16 %v2616, %v2615
        %v2623 = vpack.c.b16 %v2618, %v2617
        %v2624 = vpack.c.b16 %v2620, %v2619
        %v2630 = vsel %vm890, %v2591, 0
        %v2633 = vsel %vm890, %v2592, 0
        %2635 = vmatprep.subr.bf16.mxu0 0
        %2636 = vmatpush1.bf16.msra.mxu0 0
        %2637 = vmatprep.subr.bf16.mxu0 0
        %2638 = vmatpush1.bf16.msra.mxu0 0
        %2639 = vmatprep.subr.bf16.mxu0 0
        %2640 = vmatpush1.bf16.msra.mxu0 0
        %2641 = vmatprep.subr.bf16.mxu0 0
        %2642 = vmatpush1.bf16.msra.mxu0 0
        %2643 = vmatprep.subr.bf16.mxu0 0
        %2644 = vmatpush1.bf16.msra.mxu0 %v2624
        %2645 = vmatprep.subr.bf16.mxu0 0
        %2646 = vmatpush1.bf16.msra.mxu0 %v2623
        %2647 = vmatprep.subr.bf16.mxu0 0
        %2648 = vmatpush1.bf16.msra.mxu0 %v2622
        %2649 = vmatprep.subr.bf16.mxu0 0
        %2650 = vmatpush1.bf16.msra.mxu0 %v2621
        %2651 = vmatprep.subr.bf16.mxu0 0
        %2652 = vmatpush2.bf16.msra.mxu0 0
        %2653 = vmatprep.subr.bf16.mxu0 0
        %2654 = vmatpush2.bf16.msra.mxu0 0
        %2655 = vmatprep.subr.bf16.mxu0 0
        %2656 = vmatpush2.bf16.msra.mxu0 0
        %2657 = vmatprep.subr.bf16.mxu0 0
        %2658 = vmatpush2.bf16.msra.mxu0 0
        %2659 = vmatprep.subr.bf16.mxu0 0
        %2660 = vmatpush2.bf16.msra.mxu0 0
        %2661 = vmatprep.subr.bf16.mxu0 0
        %2662 = vmatpush2.bf16.msra.mxu0 0
        %2663 = vmatprep.subr.bf16.mxu0 0
        %2664 = vmatpush2.bf16.msra.mxu0 0
        %2665 = vmatprep.subr.bf16.mxu0 0
        %2666 = vmatpush2.bf16.msra.mxu0 0
        %2667 = vmatprep.mubr.bf16.mxu0 0
        %2668 = vmatmul.mubr.bf16.gmra.mxu0 %v2630
        %v2669 = vpop.f32.mrf.mxu0
        %v2670 = vadd.f32 %v2604, %v2669
        %v2671 = vpop.f32.mrf.mxu0
        %v2672 = vpop.f32.mrf.mxu0
        %v2673 = vadd.f32 %v2604, %v2672
        %v2674 = vpop.f32.mrf.mxu0
        %2675 = vmatprep.mubr.bf16.mxu0 0
        %2676 = vmatmul.mubr.bf16.gmra.mxu0 %v2633
        %v2677 = vpop.f32.mrf.mxu0
        %v2678 = vadd.f32 %v2604, %v2677
        %v2679 = vpop.f32.mrf.mxu0
        %v2680 = vpop.f32.mrf.mxu0
        %v2681 = vadd.f32 %v2604, %v2680
        %v2682 = vpop.f32.mrf.mxu0
        %2683 = vdwg.mxu0
        %v2684 = vxor.u32 %v2670, 2147483648
        %v2685 = vxor.u32 %v2673, 2147483648
        %v2686 = vxor.u32 %v2678, 2147483648
        %v2687 = vxor.u32 %v2681, 2147483648
        %v2688 = vmul.f32 %v2684, 1.442695
        %v2689 = vpow.pop %v2688
        %v2690 = vmul.f32 %v2685, 1.442695
        %v2691 = vpow.pop %v2690
        %v2692 = vmul.f32 %v2686, 1.442695
        %v2693 = vpow.pop %v2692
        %v2694 = vmul.f32 %v2687, 1.442695
        %v2695 = vpow.pop %v2694
        %v2696 = vadd.f32 %v2689, 1.0
        %v2697 = vadd.f32 %v2691, 1.0
        %v2698 = vadd.f32 %v2693, 1.0
        %v2699 = vadd.f32 %v2695, 1.0
        %v2700 = vrcp.pop %v2696
        %v2701 = vmul.f32 1.0, %v2700
        %v2702 = vrcp.pop %v2697
        %v2703 = vmul.f32 1.0, %v2702
        %v2704 = vrcp.pop %v2698
        %v2705 = vmul.f32 1.0, %v2704
        %v2706 = vrcp.pop %v2699
        %v2707 = vmul.f32 1.0, %v2706
        %2712 = vrot.lane.b32.xlu0 %v2701, 64
        %v2713 = vpop.permute.xlu0 %2712
        %2714 = vrot.lane.b32.xlu0 %v2703, 64
        %v2715 = vpop.permute.xlu0 %2714
        %2716 = vrot.lane.b32.xlu0 %v2705, 64
        %v2717 = vpop.permute.xlu0 %2716
        %2718 = vrot.lane.b32.xlu0 %v2707, 64
        %v2719 = vpop.permute.xlu0 %2718
        %v2724 = vmul.f32 %v2670, %v2713
        %v2725 = vmul.f32 %v2673, %v2715
        %v2726 = vmul.f32 %v2678, %v2717
        %v2727 = vmul.f32 %v2681, %v2719
        %v2728 = vlaneseq
        %v2729 = vshrl.u32 %v2728, 7
        %v2730 = vadd.s32 %v2729, 8
        %v2731 = vadd.s32 %v2729, 16
        %v2732 = vadd.s32 %v2729, 24
        %s2733 = sld [smem:[#allocation5 + %s42]]
        %v2734 = vstv %s2733
        %vm2735 = vcmp.lt.s32.totalorder %v2729, %v2734
        %vm2736 = vcmp.lt.s32.totalorder %v2730, %v2734
        %vm2737 = vcmp.lt.s32.totalorder %v2731, %v2734
        %vm2738 = vcmp.lt.s32.totalorder %v2732, %v2734
        %v2739 = vsel %vm2735, 1, 0
        %v2740 = vsel %vm2736, 1, 0
        %v2741 = vsel %vm2737, 1, 0
        %v2742 = vsel %vm2738, 1, 0
        %v2743 = vcvt.s32.f32 %v2739
        %v2744 = vcvt.s32.f32 %v2740
        %v2745 = vcvt.s32.f32 %v2741
        %v2746 = vcvt.s32.f32 %v2742
        %v2747 = vmul.f32 %v2724, %v2743
        %v2748 = vmul.f32 %v2725, %v2744
        %v2749 = vmul.f32 %v2726, %v2745
        %v2750 = vmul.f32 %v2727, %v2746
        %v2751 = vlaneseq
        %v2752 = vshrl.u32 %v2751, 7
        %v2753 = vsub.s32 3, %v2752
        %v2754 = vrot.slane %v879, %v2753
        %v2755 = vmul.f32 %v2747, %v2754
        %v2756 = vmul.f32 %v2748, %v2754
        %v2757 = vmul.f32 %v2749, %v2754
        %v2758 = vmul.f32 %v2750, %v2754
        %v2759 = vrot.slane %v2747, 5
        %v2760 = vrot.slane %v2748, 5
        %v2761 = vrot.slane %v2749, 5
        %v2762 = vrot.slane %v2750, 5
        %vm2763 = vcmp.lt.s32.totalorder %v2729, 3
        %v2764 = vsel %vm2763, %v2761, %v2762
        %v2765 = vsel %vm2763, %v2760, %v2761
        %v2766 = vsel %vm2763, %v2759, %v2760
        %v2767 = vsel %vm2763, %v2762, %v2759
        %v2768 = vlaneseq
        %v2769 = vshrl.u32 %v2768, 7
        %v2770 = vsub.s32 0, %v2769
        %v2771 = vrot.slane %v879, %v2770
        %v2772 = vmul.f32 %v2767, %v2771
        %v2773 = vmul.f32 %v2766, %v2771
        %v2774 = vmul.f32 %v2765, %v2771
        %v2775 = vmul.f32 %v2764, %v2771
        %v2776 = vadd.f32 %v2755, %v2772
        %v2777 = vadd.f32 %v2756, %v2773
        %v2778 = vadd.f32 %v2757, %v2774
        %v2779 = vadd.f32 %v2758, %v2775
        %v2780 = vrot.slane %v2747, 6
        %v2781 = vrot.slane %v2748, 6
        %v2782 = vrot.slane %v2749, 6
        %v2783 = vrot.slane %v2750, 6
        %vm2784 = vcmp.lt.s32.totalorder %v2729, 2
        %v2785 = vsel %vm2784, %v2782, %v2783
        %v2786 = vsel %vm2784, %v2781, %v2782
        %v2787 = vsel %vm2784, %v2780, %v2781
        %v2788 = vsel %vm2784, %v2783, %v2780
        %v2789 = vlaneseq
        %v2790 = vshrl.u32 %v2789, 7
        %v2791 = vsub.s32 1, %v2790
        %v2792 = vrot.slane %v879, %v2791
        %v2793 = vmul.f32 %v2788, %v2792
        %v2794 = vmul.f32 %v2787, %v2792
        %v2795 = vmul.f32 %v2786, %v2792
        %v2796 = vmul.f32 %v2785, %v2792
        %v2797 = vadd.f32 %v2776, %v2793
        %v2798 = vadd.f32 %v2777, %v2794
        %v2799 = vadd.f32 %v2778, %v2795
        %v2800 = vadd.f32 %v2779, %v2796
        %v2801 = vrot.slane %v2747, 7
        %v2802 = vrot.slane %v2748, 7
        %v2803 = vrot.slane %v2749, 7
        %v2804 = vrot.slane %v2750, 7
        %vm2805 = vcmp.lt.s32.totalorder %v2729, 1
        %v2806 = vsel %vm2805, %v2803, %v2804
        %v2807 = vsel %vm2805, %v2802, %v2803
        %v2808 = vsel %vm2805, %v2801, %v2802
        %v2809 = vsel %vm2805, %v2804, %v2801
        %v2810 = vlaneseq
        %v2811 = vshrl.u32 %v2810, 7
        %v2812 = vsub.s32 2, %v2811
        %v2813 = vrot.slane %v879, %v2812
        %v2814 = vmul.f32 %v2809, %v2813
        %v2815 = vmul.f32 %v2808, %v2813
        %v2816 = vmul.f32 %v2807, %v2813
        %v2817 = vmul.f32 %v2806, %v2813
        %v2818 = vadd.f32 %v2797, %v2814
        %v2819 = vadd.f32 %v2798, %v2815
        %v2820 = vadd.f32 %v2799, %v2816
        %v2821 = vadd.f32 %v2800, %v2817
        %v2822 = vrot.slane %v2747, 1
        %v2823 = vrot.slane %v2748, 1
        %v2824 = vrot.slane %v2749, 1
        %v2825 = vrot.slane %v2750, 1
        %vm2826 = vcmp.lt.s32.totalorder %v2729, 7
        %v2827 = vsel %vm2826, %v2824, %v2825
        %v2828 = vsel %vm2826, %v2823, %v2824
        %v2829 = vsel %vm2826, %v2822, %v2823
        %v2830 = vsel %vm2826, %v2825, %v2822
        %v2831 = vlaneseq
        %v2832 = vshrl.u32 %v2831, 7
        %v2833 = vsub.s32 4, %v2832
        %v2834 = vrot.slane %v879, %v2833
        %v2835 = vmul.f32 %v2829, %v2834
        %v2836 = vmul.f32 %v2828, %v2834
        %v2837 = vmul.f32 %v2827, %v2834
        %v2838 = vmul.f32 %v2830, %v2834
        %v2839 = vadd.f32 %v2818, %v2835
        %v2840 = vadd.f32 %v2819, %v2836
        %v2841 = vadd.f32 %v2820, %v2837
        %v2842 = vadd.f32 %v2821, %v2838
        %v2843 = vrot.slane %v2747, 2
        %v2844 = vrot.slane %v2748, 2
        %v2845 = vrot.slane %v2749, 2
        %v2846 = vrot.slane %v2750, 2
        %vm2847 = vcmp.lt.s32.totalorder %v2729, 6
        %v2848 = vsel %vm2847, %v2845, %v2846
        %v2849 = vsel %vm2847, %v2844, %v2845
        %v2850 = vsel %vm2847, %v2843, %v2844
        %v2851 = vsel %vm2847, %v2846, %v2843
        %v2852 = vlaneseq
        %v2853 = vshrl.u32 %v2852, 7
        %v2854 = vsub.s32 5, %v2853
        %v2855 = vrot.slane %v879, %v2854
        %v2856 = vmul.f32 %v2850, %v2855
        %v2857 = vmul.f32 %v2849, %v2855
        %v2858 = vmul.f32 %v2848, %v2855
        %v2859 = vmul.f32 %v2851, %v2855
        %v2860 = vadd.f32 %v2839, %v2856
        %v2861 = vadd.f32 %v2840, %v2857
        %v2862 = vadd.f32 %v2841, %v2858
        %v2863 = vadd.f32 %v2842, %v2859
        %v2864 = vrot.slane %v2747, 3
        %v2865 = vrot.slane %v2748, 3
        %v2866 = vrot.slane %v2749, 3
        %v2867 = vrot.slane %v2750, 3
        %vm2868 = vcmp.lt.s32.totalorder %v2729, 5
        %v2869 = vsel %vm2868, %v2866, %v2867
        %v2870 = vsel %vm2868, %v2865, %v2866
        %v2871 = vsel %vm2868, %v2864, %v2865
        %v2872 = vsel %vm2868, %v2867, %v2864
        %v2873 = vlaneseq
        %v2874 = vshrl.u32 %v2873, 7
        %v2875 = vsub.s32 6, %v2874
        %v2876 = vrot.slane %v879, %v2875
        %v2877 = vmul.f32 %v2871, %v2876
        %v2878 = vmul.f32 %v2870, %v2876
        %v2879 = vmul.f32 %v2869, %v2876
        %v2880 = vmul.f32 %v2872, %v2876
        %v2881 = vadd.f32 %v2860, %v2877
        %v2882 = vadd.f32 %v2861, %v2878
        %v2883 = vadd.f32 %v2862, %v2879
        %v2884 = vadd.f32 %v2863, %v2880
        %v2885 = vlaneseq
        %v2886 = vshrl.u32 %v2885, 7
        %v2887 = vsub.s32 0, %v2886
        %v2888 = vrot.slane %v877, %v2887
        %v2889 = vadd.f32 %v2881, %v2888
        %v2890 = vadd.f32 %v2882, %v2888
        %v2891 = vadd.f32 %v2883, %v2888
        %v2892 = vadd.f32 %v2884, %v2888
        %v2893 = vlaneseq
        %v2894 = vshrl.u32 %v2893, 7
        %v2895 = vsub.s32 3, %v2894
        %v2896 = vrot.slane %v877, %v2895
        %v2897 = vsub.f32 %v2889, %v2896
        %v2898 = vsub.f32 %v2890, %v2896
        %v2899 = vsub.f32 %v2891, %v2896
        %v2900 = vsub.f32 %v2892, %v2896
        %v2901 = vadd.f32 %v877, 1e-05
        %v2902 = vrsqrt.pop %v2901
        %v2903 = vlaneseq
        %v2904 = vshrl.u32 %v2903, 7
        %v2905 = vsub.s32 4, %v2904
        %v2906 = vrot.slane %v2902, %v2905
        %v2907 = vmul.f32 %v2897, %v2906
        %v2908 = vmul.f32 %v2898, %v2906
        %v2909 = vmul.f32 %v2899, %v2906
        %v2910 = vmul.f32 %v2900, %v2906
        %v2911 = vlaneseq
        %v2912 = vshrl.u32 %v2911, 7
        %v2913 = vsub.s32 1, %v2912
        %v2914 = vrot.slane %v877, %v2913
        %v2915 = vmul.f32 %v2907, %v2914
        %v2916 = vmul.f32 %v2908, %v2914
        %v2917 = vmul.f32 %v2909, %v2914
        %v2918 = vmul.f32 %v2910, %v2914
        %v2919 = vlaneseq
        %v2920 = vshrl.u32 %v2919, 7
        %v2921 = vsub.s32 2, %v2920
        %v2922 = vrot.slane %v877, %v2921
        %v2923 = vadd.f32 %v2915, %v2922
        %v2924 = vadd.f32 %v2916, %v2922
        %v2925 = vadd.f32 %v2917, %v2922
        %v2926 = vadd.f32 %v2918, %v2922
        %v2927 = vxor.u32 %v2923, 2147483648
        %v2928 = vxor.u32 %v2924, 2147483648
        %v2929 = vxor.u32 %v2925, 2147483648
        %v2930 = vxor.u32 %v2926, 2147483648
        %v2931 = vmul.f32 %v2927, 1.442695
        %v2932 = vpow.pop %v2931
        %v2933 = vmul.f32 %v2928, 1.442695
        %v2934 = vpow.pop %v2933
        %v2935 = vmul.f32 %v2929, 1.442695
        %v2936 = vpow.pop %v2935
        %v2937 = vmul.f32 %v2930, 1.442695
        %v2938 = vpow.pop %v2937
        %v2939 = vadd.f32 %v2932, 1.0
        %v2940 = vadd.f32 %v2934, 1.0
        %v2941 = vadd.f32 %v2936, 1.0
        %v2942 = vadd.f32 %v2938, 1.0
        %v2943 = vrcp.pop %v2939
        %v2944 = vmul.f32 1.0, %v2943
        %v2945 = vrcp.pop %v2940
        %v2946 = vmul.f32 1.0, %v2945
        %v2947 = vrcp.pop %v2941
        %v2948 = vmul.f32 1.0, %v2947
        %v2949 = vrcp.pop %v2942
        %v2950 = vmul.f32 1.0, %v2949
        %v2951 = vmul.f32 %v2923, %v2944
        %v2952 = vmul.f32 %v2924, %v2946
        %v2953 = vmul.f32 %v2925, %v2948
        %v2954 = vmul.f32 %v2926, %v2950
        %v2955 = vpack.c.bf16 %v2952, %v2951
        %v2956 = vpack.c.bf16 %v2954, %v2953
        %v2957 = vld [vmem:[%s763] sm:$0xf]
        %v2958 = vld [vmem:[%s763 + $0x4] sm:$0xf]
        %v2959 = vld [vmem:[%s763 + $0x8] sm:$0xf]
        %v2960 = vld [vmem:[%s763 + $0xc] sm:$0xf]
        %v2961 = vld [vmem:[%s763 + $0x10] sm:$0xf]
        %v2962 = vld [vmem:[%s763 + $0x14] sm:$0xf]
        %v2963 = vld [vmem:[%s763 + $0x18] sm:$0xf]
        %v2964 = vld [vmem:[%s763 + $0x1c] sm:$0xf]
        %v2965 = vlaneseq
        %v2966 = vshrl.u32 %v2965, 7
        %v2967 = vsub.s32 5, %v2966
        %v2968 = vrot.slane %v877, %v2967
        %v2977 = vunpack.c.l.b16 %v2957
        %v2978 = vunpack.c.l.b16 %v2958
        %v2979 = vunpack.c.l.b16 %v2959
        %v2980 = vunpack.c.l.b16 %v2960
        %v2981 = vunpack.c.l.b16 %v2961
        %v2982 = vunpack.c.l.b16 %v2962
        %v2983 = vunpack.c.l.b16 %v2963
        %v2984 = vunpack.c.l.b16 %v2964
        %v2985 = vpack.c.b16 %v2978, %v2977
        %v2986 = vpack.c.b16 %v2980, %v2979
        %v2987 = vpack.c.b16 %v2982, %v2981
        %v2988 = vpack.c.b16 %v2984, %v2983
        %v2994 = vsel %vm890, %v2955, 0
        %v2997 = vsel %vm890, %v2956, 0
        %2999 = vmatprep.subr.bf16.mxu0 0
        %3000 = vmatpush1.bf16.msra.mxu0 0
        %3001 = vmatprep.subr.bf16.mxu0 0
        %3002 = vmatpush1.bf16.msra.mxu0 0
        %3003 = vmatprep.subr.bf16.mxu0 0
        %3004 = vmatpush1.bf16.msra.mxu0 0
        %3005 = vmatprep.subr.bf16.mxu0 0
        %3006 = vmatpush1.bf16.msra.mxu0 0
        %3007 = vmatprep.subr.bf16.mxu0 0
        %3008 = vmatpush1.bf16.msra.mxu0 %v2988
        %3009 = vmatprep.subr.bf16.mxu0 0
        %3010 = vmatpush1.bf16.msra.mxu0 %v2987
        %3011 = vmatprep.subr.bf16.mxu0 0
        %3012 = vmatpush1.bf16.msra.mxu0 %v2986
        %3013 = vmatprep.subr.bf16.mxu0 0
        %3014 = vmatpush1.bf16.msra.mxu0 %v2985
        %3015 = vmatprep.subr.bf16.mxu0 0
        %3016 = vmatpush2.bf16.msra.mxu0 0
        %3017 = vmatprep.subr.bf16.mxu0 0
        %3018 = vmatpush2.bf16.msra.mxu0 0
        %3019 = vmatprep.subr.bf16.mxu0 0
        %3020 = vmatpush2.bf16.msra.mxu0 0
        %3021 = vmatprep.subr.bf16.mxu0 0
        %3022 = vmatpush2.bf16.msra.mxu0 0
        %3023 = vmatprep.subr.bf16.mxu0 0
        %3024 = vmatpush2.bf16.msra.mxu0 0
        %3025 = vmatprep.subr.bf16.mxu0 0
        %3026 = vmatpush2.bf16.msra.mxu0 0
        %3027 = vmatprep.subr.bf16.mxu0 0
        %3028 = vmatpush2.bf16.msra.mxu0 0
        %3029 = vmatprep.subr.bf16.mxu0 0
        %3030 = vmatpush2.bf16.msra.mxu0 0
        %3031 = vmatprep.mubr.bf16.mxu0 0
        %3032 = vmatmul.mubr.bf16.gmra.mxu0 %v2994
        %v3033 = vpop.f32.mrf.mxu0
        %v3034 = vadd.f32 %v2968, %v3033
        %v3035 = vpop.f32.mrf.mxu0
        %v3036 = vpop.f32.mrf.mxu0
        %v3037 = vadd.f32 %v2968, %v3036
        %v3038 = vpop.f32.mrf.mxu0
        %3039 = vmatprep.mubr.bf16.mxu0 0
        %3040 = vmatmul.mubr.bf16.gmra.mxu0 %v2997
        %v3041 = vpop.f32.mrf.mxu0
        %v3042 = vadd.f32 %v2968, %v3041
        %v3043 = vpop.f32.mrf.mxu0
        %v3044 = vpop.f32.mrf.mxu0
        %v3045 = vadd.f32 %v2968, %v3044
        %v3046 = vpop.f32.mrf.mxu0
        %3047 = vdwg.mxu0
        %v3048 = vadd.f32 %v3034, %v2519
        %v3049 = vadd.f32 %v3037, %v2520
        %v3050 = vadd.f32 %v3042, %v2521
        %v3051 = vadd.f32 %v3045, %v2522
        %v3052 = vsel %vm890, %v3048, 0.0
        %3053 = vadd.xlane.f32.xlu0 %v3052
        %v3054 = vpop.xlane.xlu0 %3053
        %v3055 = vsel %vm890, %v3049, 0.0
        %3056 = vadd.xlane.f32.xlu0 %v3055
        %v3057 = vpop.xlane.xlu0 %3056
        %v3058 = vsel %vm890, %v3050, 0.0
        %3059 = vadd.xlane.f32.xlu0 %v3058
        %v3060 = vpop.xlane.xlu0 %3059
        %v3061 = vsel %vm890, %v3051, 0.0
        %3062 = vadd.xlane.f32.xlu0 %v3061
        %v3063 = vpop.xlane.xlu0 %3062
        %v3064 = vmul.f32 %v3054, %v903
        %v3065 = vmul.f32 %v3057, %v903
        %v3066 = vmul.f32 %v3060, %v903
        %v3067 = vmul.f32 %v3063, %v903
        %v3068 = vsub.f32 %v3048, %v3064
        %v3069 = vsub.f32 %v3049, %v3065
        %v3070 = vsub.f32 %v3050, %v3066
        %v3071 = vsub.f32 %v3051, %v3067
        %v3072 = vmul.f32 %v3068, %v3068
        %v3073 = vmul.f32 %v3069, %v3069
        %v3074 = vmul.f32 %v3070, %v3070
        %v3075 = vmul.f32 %v3071, %v3071
        %v3076 = vsel %vm890, %v3072, 0.0
        %3077 = vadd.xlane.f32.xlu0 %v3076
        %v3078 = vpop.xlane.xlu0 %3077
        %v3079 = vsel %vm890, %v3073, 0.0
        %3080 = vadd.xlane.f32.xlu0 %v3079
        %v3081 = vpop.xlane.xlu0 %3080
        %v3082 = vsel %vm890, %v3074, 0.0
        %3083 = vadd.xlane.f32.xlu0 %v3082
        %v3084 = vpop.xlane.xlu0 %3083
        %v3085 = vsel %vm890, %v3075, 0.0
        %3086 = vadd.xlane.f32.xlu0 %v3085
        %v3087 = vpop.xlane.xlu0 %3086
        %v3088 = vmul.f32 %v3078, %v903
        %v3089 = vmul.f32 %v3081, %v903
        %v3090 = vmul.f32 %v3084, %v903
        %v3091 = vmul.f32 %v3087, %v903
        %v3092 = vadd.f32 %v3088, 1e-05
        %v3093 = vadd.f32 %v3089, 1e-05
        %v3094 = vadd.f32 %v3090, 1e-05
        %v3095 = vadd.f32 %v3091, 1e-05
        %v3096 = vrsqrt.pop %v3092
        %v3097 = vrsqrt.pop %v3093
        %v3098 = vrsqrt.pop %v3094
        %v3099 = vrsqrt.pop %v3095
        %v3100 = vmul.f32 %v3068, %v3096
        %v3101 = vmul.f32 %v3069, %v3097
        %v3102 = vmul.f32 %v3070, %v3098
        %v3103 = vmul.f32 %v3071, %v3099
        %v3104 = vlaneseq
        %v3105 = vshrl.u32 %v3104, 7
        %v3106 = vsub.s32 6, %v3105
        %v3107 = vrot.slane %v877, %v3106
        %v3108 = vmul.f32 %v3100, %v3107
        %v3109 = vmul.f32 %v3101, %v3107
        %v3110 = vmul.f32 %v3102, %v3107
        %v3111 = vmul.f32 %v3103, %v3107
        %v3112 = vlaneseq
        %v3113 = vshrl.u32 %v3112, 7
        %v3114 = vsub.s32 7, %v3113
        %v3115 = vrot.slane %v877, %v3114
        %v3116 = vadd.f32 %v3108, %v3115
        %v3117 = vadd.f32 %v3109, %v3115
        %v3118 = vadd.f32 %v3110, %v3115
        %v3119 = vadd.f32 %v3111, %v3115
        %v3120 = vpack.c.bf16 %v3117, %v3116
        %v3121 = vpack.c.bf16 %v3119, %v3118
        %v3122 = vld [vmem:[%s768] sm:$0xff]
        %v3123 = vld [vmem:[%s768 + $0x8] sm:$0xff]
        %v3124 = vld [vmem:[%s768 + $0x10] sm:$0xff]
        %v3125 = vld [vmem:[%s768 + $0x18] sm:$0xff]
        %v3126 = vld [vmem:[%s768 + $0x20] sm:$0xff]
        %v3127 = vld [vmem:[%s768 + $0x28] sm:$0xff]
        %v3128 = vld [vmem:[%s768 + $0x30] sm:$0xff]
        %v3129 = vld [vmem:[%s768 + $0x38] sm:$0xff]
        %v3130 = vlaneseq
        %v3131 = vshrl.u32 %v3130, 7
        %v3132 = vsub.s32 1, %v3131
        %v3133 = vrot.slane %v880, %v3132
        %v3134 = vlaneseq
        %v3135 = vshrl.u32 %v3134, 7
        %v3136 = vsub.s32 1, %v3135
        %v3137 = vrot.slane %v881, %v3136
        %v3146 = vunpack.c.l.b16 %v3122
        %v3147 = vunpack.c.h.b16 %v3122
        %v3148 = vunpack.c.l.b16 %v3123
        %v3149 = vunpack.c.h.b16 %v3123
        %v3150 = vunpack.c.l.b16 %v3124
        %v3151 = vunpack.c.h.b16 %v3124
        %v3152 = vunpack.c.l.b16 %v3125
        %v3153 = vunpack.c.h.b16 %v3125
        %v3154 = vunpack.c.l.b16 %v3126
        %v3155 = vunpack.c.h.b16 %v3126
        %v3156 = vunpack.c.l.b16 %v3127
        %v3157 = vunpack.c.h.b16 %v3127
        %v3158 = vunpack.c.l.b16 %v3128
        %v3159 = vunpack.c.h.b16 %v3128
        %v3160 = vunpack.c.l.b16 %v3129
        %v3161 = vunpack.c.h.b16 %v3129
        %v3162 = vpack.c.b16 %v3148, %v3146
        %v3163 = vpack.c.b16 %v3149, %v3147
        %v3164 = vpack.c.b16 %v3152, %v3150
        %v3165 = vpack.c.b16 %v3153, %v3151
        %v3166 = vpack.c.b16 %v3156, %v3154
        %v3167 = vpack.c.b16 %v3157, %v3155
        %v3168 = vpack.c.b16 %v3160, %v3158
        %v3169 = vpack.c.b16 %v3161, %v3159
        %v3179 = vsel %vm890, %v3120, 0
        %v3182 = vsel %vm890, %v3121, 0
        %3184 = vmatprep.subr.bf16.mxu0 0
        %3185 = vmatpush1.bf16.msra.mxu0 0
        %3186 = vmatprep.subr.bf16.mxu0 0
        %3187 = vmatpush1.bf16.msra.mxu0 0
        %3188 = vmatprep.subr.bf16.mxu0 0
        %3189 = vmatpush1.bf16.msra.mxu0 0
        %3190 = vmatprep.subr.bf16.mxu0 0
        %3191 = vmatpush1.bf16.msra.mxu0 0
        %3192 = vmatprep.subr.bf16.mxu0 %v3169
        %3193 = vmatpush1.bf16.msra.mxu0 %v3168
        %3194 = vmatprep.subr.bf16.mxu0 %v3167
        %3195 = vmatpush1.bf16.msra.mxu0 %v3166
        %3196 = vmatprep.subr.bf16.mxu0 %v3165
        %3197 = vmatpush1.bf16.msra.mxu0 %v3164
        %3198 = vmatprep.subr.bf16.mxu0 %v3163
        %3199 = vmatpush1.bf16.msra.mxu0 %v3162
        %3200 = vmatprep.subr.bf16.mxu0 0
        %3201 = vmatpush2.bf16.msra.mxu0 0
        %3202 = vmatprep.subr.bf16.mxu0 0
        %3203 = vmatpush2.bf16.msra.mxu0 0
        %3204 = vmatprep.subr.bf16.mxu0 0
        %3205 = vmatpush2.bf16.msra.mxu0 0
        %3206 = vmatprep.subr.bf16.mxu0 0
        %3207 = vmatpush2.bf16.msra.mxu0 0
        %3208 = vmatprep.subr.bf16.mxu0 0
        %3209 = vmatpush2.bf16.msra.mxu0 0
        %3210 = vmatprep.subr.bf16.mxu0 0
        %3211 = vmatpush2.bf16.msra.mxu0 0
        %3212 = vmatprep.subr.bf16.mxu0 0
        %3213 = vmatpush2.bf16.msra.mxu0 0
        %3214 = vmatprep.subr.bf16.mxu0 0
        %3215 = vmatpush2.bf16.msra.mxu0 0
        %3216 = vmatprep.mubr.bf16.mxu0 0
        %3217 = vmatmul.mubr.bf16.gmra.mxu0 %v3179
        %v3218 = vpop.f32.mrf.mxu0
        %v3219 = vadd.f32 %v3133, %v3218
        %v3220 = vpop.f32.mrf.mxu0
        %v3221 = vadd.f32 %v3137, %v3220
        %v3222 = vpop.f32.mrf.mxu0
        %v3223 = vadd.f32 %v3133, %v3222
        %v3224 = vpop.f32.mrf.mxu0
        %v3225 = vadd.f32 %v3137, %v3224
        %3226 = vmatprep.mubr.bf16.mxu0 0
        %3227 = vmatmul.mubr.bf16.gmra.mxu0 %v3182
        %v3228 = vpop.f32.mrf.mxu0
        %v3229 = vadd.f32 %v3133, %v3228
        %v3230 = vpop.f32.mrf.mxu0
        %v3231 = vadd.f32 %v3137, %v3230
        %v3232 = vpop.f32.mrf.mxu0
        %v3233 = vadd.f32 %v3133, %v3232
        %v3234 = vpop.f32.mrf.mxu0
        %v3235 = vadd.f32 %v3137, %v3234
        %3236 = vdwg.mxu0
        %v3237 = vxor.u32 %v3219, 2147483648
        %v3238 = vxor.u32 %v3221, 2147483648
        %v3239 = vxor.u32 %v3223, 2147483648
        %v3240 = vxor.u32 %v3225, 2147483648
        %v3241 = vxor.u32 %v3229, 2147483648
        %v3242 = vxor.u32 %v3231, 2147483648
        %v3243 = vxor.u32 %v3233, 2147483648
        %v3244 = vxor.u32 %v3235, 2147483648
        %v3245 = vmul.f32 %v3237, 1.442695
        %v3246 = vpow.pop %v3245
        %v3247 = vmul.f32 %v3238, 1.442695
        %v3248 = vpow.pop %v3247
        %v3249 = vmul.f32 %v3239, 1.442695
        %v3250 = vpow.pop %v3249
        %v3251 = vmul.f32 %v3240, 1.442695
        %v3252 = vpow.pop %v3251
        %v3253 = vmul.f32 %v3241, 1.442695
        %v3254 = vpow.pop %v3253
        %v3255 = vmul.f32 %v3242, 1.442695
        %v3256 = vpow.pop %v3255
        %v3257 = vmul.f32 %v3243, 1.442695
        %v3258 = vpow.pop %v3257
        %v3259 = vmul.f32 %v3244, 1.442695
        %v3260 = vpow.pop %v3259
        %v3261 = vadd.f32 %v3246, 1.0
        %v3262 = vadd.f32 %v3248, 1.0
        %v3263 = vadd.f32 %v3250, 1.0
        %v3264 = vadd.f32 %v3252, 1.0
        %v3265 = vadd.f32 %v3254, 1.0
        %v3266 = vadd.f32 %v3256, 1.0
        %v3267 = vadd.f32 %v3258, 1.0
        %v3268 = vadd.f32 %v3260, 1.0
        %v3269 = vrcp.pop %v3261
        %v3270 = vmul.f32 1.0, %v3269
        %v3271 = vrcp.pop %v3262
        %v3272 = vmul.f32 1.0, %v3271
        %v3273 = vrcp.pop %v3263
        %v3274 = vmul.f32 1.0, %v3273
        %v3275 = vrcp.pop %v3264
        %v3276 = vmul.f32 1.0, %v3275
        %v3277 = vrcp.pop %v3265
        %v3278 = vmul.f32 1.0, %v3277
        %v3279 = vrcp.pop %v3266
        %v3280 = vmul.f32 1.0, %v3279
        %v3281 = vrcp.pop %v3267
        %v3282 = vmul.f32 1.0, %v3281
        %v3283 = vrcp.pop %v3268
        %v3284 = vmul.f32 1.0, %v3283
        %v3285 = vmul.f32 %v3219, %v3270
        %v3286 = vmul.f32 %v3221, %v3272
        %v3287 = vmul.f32 %v3223, %v3274
        %v3288 = vmul.f32 %v3225, %v3276
        %v3289 = vmul.f32 %v3229, %v3278
        %v3290 = vmul.f32 %v3231, %v3280
        %v3291 = vmul.f32 %v3233, %v3282
        %v3292 = vmul.f32 %v3235, %v3284
        %v3293 = vpack.c.bf16 %v3287, %v3285
        %v3294 = vpack.c.bf16 %v3288, %v3286
        %v3295 = vpack.c.bf16 %v3291, %v3289
        %v3296 = vpack.c.bf16 %v3292, %v3290
        %v3297 = vld [vmem:[%s773] sm:$0xf]
        %v3298 = vld [vmem:[%s773 + $0x4] sm:$0xf]
        %v3299 = vld [vmem:[%s773 + $0x8] sm:$0xf]
        %v3300 = vld [vmem:[%s773 + $0xc] sm:$0xf]
        %v3301 = vld [vmem:[%s773 + $0x10] sm:$0xf]
        %v3302 = vld [vmem:[%s773 + $0x14] sm:$0xf]
        %v3303 = vld [vmem:[%s773 + $0x18] sm:$0xf]
        %v3304 = vld [vmem:[%s773 + $0x1c] sm:$0xf]
        %v3305 = vld [vmem:[%s773 + $0x20] sm:$0xf]
        %v3306 = vld [vmem:[%s773 + $0x24] sm:$0xf]
        %v3307 = vld [vmem:[%s773 + $0x28] sm:$0xf]
        %v3308 = vld [vmem:[%s773 + $0x2c] sm:$0xf]
        %v3309 = vld [vmem:[%s773 + $0x30] sm:$0xf]
        %v3310 = vld [vmem:[%s773 + $0x34] sm:$0xf]
        %v3311 = vld [vmem:[%s773 + $0x38] sm:$0xf]
        %v3312 = vld [vmem:[%s773 + $0x3c] sm:$0xf]
        %v3313 = vld [vmem:[%s773 + $0x40] sm:$0xf]
        %v3314 = vld [vmem:[%s773 + $0x44] sm:$0xf]
        %v3315 = vld [vmem:[%s773 + $0x48] sm:$0xf]
        %v3316 = vld [vmem:[%s773 + $0x4c] sm:$0xf]
        %v3317 = vld [vmem:[%s773 + $0x50] sm:$0xf]
        %v3318 = vld [vmem:[%s773 + $0x54] sm:$0xf]
        %v3319 = vld [vmem:[%s773 + $0x58] sm:$0xf]
        %v3320 = vld [vmem:[%s773 + $0x5c] sm:$0xf]
        %v3321 = vld [vmem:[%s773 + $0x60] sm:$0xf]
        %v3322 = vld [vmem:[%s773 + $0x64] sm:$0xf]
        %v3323 = vld [vmem:[%s773 + $0x68] sm:$0xf]
        %v3324 = vld [vmem:[%s773 + $0x6c] sm:$0xf]
        %v3325 = vld [vmem:[%s773 + $0x70] sm:$0xf]
        %v3326 = vld [vmem:[%s773 + $0x74] sm:$0xf]
        %v3327 = vld [vmem:[%s773 + $0x78] sm:$0xf]
        %v3328 = vld [vmem:[%s773 + $0x7c] sm:$0xf]
        %v3329 = vlaneseq
        %v3330 = vshrl.u32 %v3329, 7
        %v3331 = vsub.s32 0, %v3330
        %v3332 = vrot.slane %v878, %v3331
        %v3365 = vunpack.c.l.b16 %v3297
        %v3366 = vunpack.c.l.b16 %v3298
        %v3367 = vunpack.c.l.b16 %v3299
        %v3368 = vunpack.c.l.b16 %v3300
        %v3369 = vunpack.c.l.b16 %v3301
        %v3370 = vunpack.c.l.b16 %v3302
        %v3371 = vunpack.c.l.b16 %v3303
        %v3372 = vunpack.c.l.b16 %v3304
        %v3373 = vunpack.c.l.b16 %v3305
        %v3374 = vunpack.c.l.b16 %v3306
        %v3375 = vunpack.c.l.b16 %v3307
        %v3376 = vunpack.c.l.b16 %v3308
        %v3377 = vunpack.c.l.b16 %v3309
        %v3378 = vunpack.c.l.b16 %v3310
        %v3379 = vunpack.c.l.b16 %v3311
        %v3380 = vunpack.c.l.b16 %v3312
        %v3381 = vunpack.c.l.b16 %v3313
        %v3382 = vunpack.c.l.b16 %v3314
        %v3383 = vunpack.c.l.b16 %v3315
        %v3384 = vunpack.c.l.b16 %v3316
        %v3385 = vunpack.c.l.b16 %v3317
        %v3386 = vunpack.c.l.b16 %v3318
        %v3387 = vunpack.c.l.b16 %v3319
        %v3388 = vunpack.c.l.b16 %v3320
        %v3389 = vunpack.c.l.b16 %v3321
        %v3390 = vunpack.c.l.b16 %v3322
        %v3391 = vunpack.c.l.b16 %v3323
        %v3392 = vunpack.c.l.b16 %v3324
        %v3393 = vunpack.c.l.b16 %v3325
        %v3394 = vunpack.c.l.b16 %v3326
        %v3395 = vunpack.c.l.b16 %v3327
        %v3396 = vunpack.c.l.b16 %v3328
        %v3397 = vpack.c.b16 %v3366, %v3365
        %v3398 = vpack.c.b16 %v3368, %v3367
        %v3399 = vpack.c.b16 %v3370, %v3369
        %v3400 = vpack.c.b16 %v3372, %v3371
        %v3401 = vpack.c.b16 %v3374, %v3373
        %v3402 = vpack.c.b16 %v3376, %v3375
        %v3403 = vpack.c.b16 %v3378, %v3377
        %v3404 = vpack.c.b16 %v3380, %v3379
        %v3405 = vpack.c.b16 %v3382, %v3381
        %v3406 = vpack.c.b16 %v3384, %v3383
        %v3407 = vpack.c.b16 %v3386, %v3385
        %v3408 = vpack.c.b16 %v3388, %v3387
        %v3409 = vpack.c.b16 %v3390, %v3389
        %v3410 = vpack.c.b16 %v3392, %v3391
        %v3411 = vpack.c.b16 %v3394, %v3393
        %v3412 = vpack.c.b16 %v3396, %v3395
        %3429 = vmatprep.subr.bf16.mxu0 0
        %3430 = vmatpush1.bf16.msra.mxu0 %v3404
        %3431 = vmatprep.subr.bf16.mxu0 0
        %3432 = vmatpush1.bf16.msra.mxu0 %v3403
        %3433 = vmatprep.subr.bf16.mxu0 0
        %3434 = vmatpush1.bf16.msra.mxu0 %v3402
        %3435 = vmatprep.subr.bf16.mxu0 0
        %3436 = vmatpush1.bf16.msra.mxu0 %v3401
        %3437 = vmatprep.subr.bf16.mxu0 0
        %3438 = vmatpush1.bf16.msra.mxu0 %v3400
        %3439 = vmatprep.subr.bf16.mxu0 0
        %3440 = vmatpush1.bf16.msra.mxu0 %v3399
        %3441 = vmatprep.subr.bf16.mxu0 0
        %3442 = vmatpush1.bf16.msra.mxu0 %v3398
        %3443 = vmatprep.subr.bf16.mxu0 0
        %3444 = vmatpush1.bf16.msra.mxu0 %v3397
        %3445 = vmatprep.subr.bf16.mxu0 0
        %3446 = vmatpush2.bf16.msra.mxu0 %v3412
        %3447 = vmatprep.subr.bf16.mxu0 0
        %3448 = vmatpush2.bf16.msra.mxu0 %v3411
        %3449 = vmatprep.subr.bf16.mxu0 0
        %3450 = vmatpush2.bf16.msra.mxu0 %v3410
        %3451 = vmatprep.subr.bf16.mxu0 0
        %3452 = vmatpush2.bf16.msra.mxu0 %v3409
        %3453 = vmatprep.subr.bf16.mxu0 0
        %3454 = vmatpush2.bf16.msra.mxu0 %v3408
        %3455 = vmatprep.subr.bf16.mxu0 0
        %3456 = vmatpush2.bf16.msra.mxu0 %v3407
        %3457 = vmatprep.subr.bf16.mxu0 0
        %3458 = vmatpush2.bf16.msra.mxu0 %v3406
        %3459 = vmatprep.subr.bf16.mxu0 0
        %3460 = vmatpush2.bf16.msra.mxu0 %v3405
        %3461 = vmatprep.mubr.bf16.mxu0 %v3294
        %3462 = vmatmul.mubr.bf16.gmra.mxu0 %v3293
        %v3463 = vpop.f32.mrf.mxu0
        %v3464 = vadd.f32 %v3332, %v3463
        %v3465 = vpop.f32.mrf.mxu0
        %v3466 = vpop.f32.mrf.mxu0
        %v3467 = vadd.f32 %v3332, %v3466
        %v3468 = vpop.f32.mrf.mxu0
        %3469 = vmatprep.mubr.bf16.mxu0 %v3296
        %3470 = vmatmul.mubr.bf16.gmra.mxu0 %v3295
        %v3471 = vpop.f32.mrf.mxu0
        %v3472 = vadd.f32 %v3332, %v3471
        %v3473 = vpop.f32.mrf.mxu0
        %v3474 = vpop.f32.mrf.mxu0
        %v3475 = vadd.f32 %v3332, %v3474
        %v3476 = vpop.f32.mrf.mxu0
        %3477 = vdwg.mxu0
        %v3478 = vmul.f32 %v3464, 0.5
        %v3479 = vmul.f32 %v3467, 0.5
        %v3480 = vmul.f32 %v3472, 0.5
        %v3481 = vmul.f32 %v3475, 0.5
        %v3482 = vadd.f32 %v3478, %v3048
        %v3483 = vadd.f32 %v3479, %v3049
        %v3484 = vadd.f32 %v3480, %v3050
        %v3485 = vadd.f32 %v3481, %v3051
        %v3486 = vsel %vm890, %v3482, 0.0
        %3487 = vadd.xlane.f32.xlu0 %v3486
        %v3488 = vpop.xlane.xlu0 %3487
        %v3489 = vsel %vm890, %v3483, 0.0
        %3490 = vadd.xlane.f32.xlu0 %v3489
        %v3491 = vpop.xlane.xlu0 %3490
        %v3492 = vsel %vm890, %v3484, 0.0
        %3493 = vadd.xlane.f32.xlu0 %v3492
        %v3494 = vpop.xlane.xlu0 %3493
        %v3495 = vsel %vm890, %v3485, 0.0
        %3496 = vadd.xlane.f32.xlu0 %v3495
        %v3497 = vpop.xlane.xlu0 %3496
        %v3498 = vmul.f32 %v3488, %v903
        %v3499 = vmul.f32 %v3491, %v903
        %v3500 = vmul.f32 %v3494, %v903
        %v3501 = vmul.f32 %v3497, %v903
        %v3502 = vsub.f32 %v3482, %v3498
        %v3503 = vsub.f32 %v3483, %v3499
        %v3504 = vsub.f32 %v3484, %v3500
        %v3505 = vsub.f32 %v3485, %v3501
        %v3506 = vmul.f32 %v3502, %v3502
        %v3507 = vmul.f32 %v3503, %v3503
        %v3508 = vmul.f32 %v3504, %v3504
        %v3509 = vmul.f32 %v3505, %v3505
        %v3510 = vsel %vm890, %v3506, 0.0
        %3511 = vadd.xlane.f32.xlu0 %v3510
        %v3512 = vpop.xlane.xlu0 %3511
        %v3513 = vsel %vm890, %v3507, 0.0
        %3514 = vadd.xlane.f32.xlu0 %v3513
        %v3515 = vpop.xlane.xlu0 %3514
        %v3516 = vsel %vm890, %v3508, 0.0
        %3517 = vadd.xlane.f32.xlu0 %v3516
        %v3518 = vpop.xlane.xlu0 %3517
        %v3519 = vsel %vm890, %v3509, 0.0
        %3520 = vadd.xlane.f32.xlu0 %v3519
        %v3521 = vpop.xlane.xlu0 %3520
        %v3522 = vmul.f32 %v3512, %v903
        %v3523 = vmul.f32 %v3515, %v903
        %v3524 = vmul.f32 %v3518, %v903
        %v3525 = vmul.f32 %v3521, %v903
        %v3526 = vadd.f32 %v3522, 1e-05
        %v3527 = vadd.f32 %v3523, 1e-05
        %v3528 = vadd.f32 %v3524, 1e-05
        %v3529 = vadd.f32 %v3525, 1e-05
        %v3530 = vrsqrt.pop %v3526
        %v3531 = vrsqrt.pop %v3527
        %v3532 = vrsqrt.pop %v3528
        %v3533 = vrsqrt.pop %v3529
        %v3534 = vmul.f32 %v3502, %v3530
        %v3535 = vmul.f32 %v3503, %v3531
        %v3536 = vmul.f32 %v3504, %v3532
        %v3537 = vmul.f32 %v3505, %v3533
        %v3538 = vlaneseq
        %v3539 = vshrl.u32 %v3538, 7
        %v3540 = vsub.s32 1, %v3539
        %v3541 = vrot.slane %v878, %v3540
        %v3542 = vmul.f32 %v3534, %v3541
        %v3543 = vmul.f32 %v3535, %v3541
        %v3544 = vmul.f32 %v3536, %v3541
        %v3545 = vmul.f32 %v3537, %v3541
        %v3546 = vlaneseq
        %v3547 = vshrl.u32 %v3546, 7
        %v3548 = vsub.s32 2, %v3547
        %v3549 = vrot.slane %v878, %v3548
        %v3550 = vadd.f32 %v3542, %v3549
        %v3551 = vadd.f32 %v3543, %v3549
        %v3552 = vadd.f32 %v3544, %v3549
        %v3553 = vadd.f32 %v3545, %v3549
        %3554 = vst.msk [vmem:[%s710] sm:$0xff] %vm890, %v3550
        %3555 = vst.msk [vmem:[%s710 + $0x8] sm:$0xff] %vm890, %v3551
        %3556 = vst.msk [vmem:[%s710 + $0x10] sm:$0xff] %vm890, %v3552
        %3557 = vst.msk [vmem:[%s710 + $0x18] sm:$0xff] %vm890, %v3553
        %s3558 = sand.u32 %s459, 1
        %s3559 = scalar_lea.sflag [#allocation7], %s3558
        %s3560 = sand.u32 %s459, 1
        %s3561 = smul.addr %s3560, 32
        %s3562 = scalar_lea.vmem [#allocation6], %s3561
        // Predicated region
        $region89: #{tpu_custom_call.1} parent=83 // pred_check
          %p3563 = pneg %p469
        $region90: #{tpu_custom_call.1} parent=83 // pred_check_branch
          %3565 = sbr.rel (%p3563) target = $region92
        $region91: #{tpu_custom_call.1} parent=83 // pred_region
          %s3567 = ssub.s32 512, 512
          %3568 = vsyncadd %s3559, %s3567
          %s3569 = smul.addr %s42, 4
          %s3570 = smul.addr %s3569, 128
          %s3571 = scalar_lea.hbm %s18, %s3570
          %s3572 = sshll.u32 %s3562, 4
          %s3573 = int_to_ptr.vmem [resolvable:$true] %s3572
          %3578 = dma.vmem_to_hbm [thread:$0]  %s3573, 512, %s3571, %s3559, 128, 128, 8
        $region92: #{tpu_custom_call.1} parent=83 // pred_fallthru
          _
      $region84: #{tpu_custom_call.1} parent=5 // pred_fallthru
        _
      %p3579 = scmp.le.s32.totalorder 2, %s33
      // Predicated region
      $region93: #{tpu_custom_call.1} parent=5 // pred_check
        %p3580 = pneg %p3579
      $region94: #{tpu_custom_call.1} parent=5 // pred_check_branch
        %3582 = sbr.rel (%p3580) target = $region96
      $region95: #{tpu_custom_call.1} parent=5 // pred_region
        %s3583 = ssub.s32 %s33, 2
        // Predicated region
        $region97: #{tpu_custom_call.1} parent=95 // pred_check
          %p3584 = pneg %p475
        $region98: #{tpu_custom_call.1} parent=95 // pred_check_branch
          %3586 = sbr.rel (%p3584) target = $region100
        $region99: #{tpu_custom_call.1} parent=95 // pred_region
          %s3587 = sand.u32 %s460, 1
          %s3588 = scalar_lea.sflag [#allocation7], %s3587
          %s3589 = sand.u32 %s460, 1
          %s3590 = smul.addr %s3589, 32
          %s3591 = scalar_lea.vmem [#allocation6], %s3590
          %3592 = dma.done %s3588, 512
        $region100: #{tpu_custom_call.1} parent=95 // pred_fallthru
          _
      $region96: #{tpu_custom_call.1} parent=5 // pred_fallthru
        _
    $region6: #{tpu_custom_call.1} parent=1 // loop_footer
      %s37 = sadd.s32 1, %s33
    $region7: #{tpu_custom_call.1} parent=1 // loop_footer_branch
      %32 = sbr.rel target = $region3
    $region8: #{tpu_custom_call.1} parent=1 // loop_exit
      _
    %3593 = vsyncpa [#allocation7], 1
    %s3594 = scalar_lea.sflag [#allocation7], 1
    %3595 = vsyncpa %s3594, 1

</llo_original>
